<compile_context>
chip_gen: v7x
topology: tpu7x:2x2x1
jax: 0.10.0
libtpu: 0.0.40
codegen_flags: <defaults>
</compile_context>

<pallas_src>
import numpy as np
import jax
import jax.numpy as jnp
from jax import lax
from jax.experimental import pallas as pl
from jax.experimental.pallas import tpu as pltpu


# ----------------------------------------------------------------------------
# Config (mirrors the DCCRN __init__ arguments; shapes chosen small)
# ----------------------------------------------------------------------------
CONFIG = dict(
    win_size=16, hop_size=8, win_type="hann",
    conv_channels=[4, 8, 16],
    kernel_size=(5, 2), stride=(2, 1), padding=(2, 0), dilation=(1, 1), groups=1,
    use_cbn=False, use_clstm=True,
    rnn_layers=2, rnn_units=16,
    hidden_dim=2,                 # freq bins after the encoder stack: 8 -> 4 -> 2
    masking_mode="E",
)

# MXU inputs in bf16 (f32 accumulation kept via preferred_element_type).
GEMM_DTYPE = jnp.bfloat16

_TM_MAX = 512     # max GEMM row tile (sublane axis)
_LANE = 128       # lane width; output columns are padded to a multiple of this


# ----------------------------------------------------------------------------
# Fused GEMM (+ bias) Pallas kernel
# ----------------------------------------------------------------------------
def _pick_row_tile(m, max_tile=_TM_MAX):
    """Row tile for the GEMM grid.  Small M -> one full block (per-grid-step
    overhead ~0.35us dominates); larger M -> at least two blocks so both v7x
    TensorCores get work, tiles in multiples of 16 (bf16 sublane packing)."""
    if m <= 128:
        return m
    half_rows = -(-m // 2)
    return min(max_tile, ((half_rows + 15) // 16) * 16)


def _matmul_bias_kernel(a_ref, b_ref, bias_ref, o_ref):
    o_ref[...] = (jnp.dot(a_ref[...], b_ref[...],
                          preferred_element_type=jnp.float32)
                  + bias_ref[...])


def pallas_matmul(a, b, bias=None):
    """(M, K) @ (K, N) + bias -> (M, N) float32.

    Rows are tiled (grid over M, 'parallel' so v7x can shard across both TCs),
    the output is lane-dense (N padded to a multiple of 128 inside the call),
    MXU inputs are bf16 with f32 accumulation, and the bias add is fused into
    the GEMM epilogue.
    """
    # TODO(synk): for very large K add a K-reduction grid axis ('arbitrary')
    # with a VMEM f32 accumulator; here K = 2*Cin_half*kh*kw <= 320 so whole-K
    # blocks are well inside VMEM.
    M, K = a.shape
    _, N = b.shape
    Np = max(_LANE, ((N + _LANE - 1) // _LANE) * _LANE)
    a = a.astype(GEMM_DTYPE)
    b = b.astype(GEMM_DTYPE)
    if Np != N:
        b = jnp.pad(b, ((0, 0), (0, Np - N)))     # pad weights only (tiny), never the LHS
    if bias is None:
        bias_p = jnp.zeros((1, Np), jnp.float32)
    else:
        bias_p = jnp.pad(bias.astype(jnp.float32).reshape(1, N),
                         ((0, 0), (0, Np - N)))
    tm = _pick_row_tile(M)
    grid_m = pl.cdiv(M, tm)
    out = pl.pallas_call(
        _matmul_bias_kernel,
        out_shape=jax.ShapeDtypeStruct((M, Np), jnp.float32),
        grid=(grid_m,),
        in_specs=[pl.BlockSpec((tm, K), lambda i: (i, 0)),
                  pl.BlockSpec((K, Np), lambda i: (0, 0)),
                  pl.BlockSpec((1, Np), lambda i: (0, 0))],
        out_specs=pl.BlockSpec((tm, Np), lambda i: (i, 0)),
        compiler_params=pltpu.CompilerParams(
            dimension_semantics=("parallel",),
            vmem_limit_bytes=32 * 1024 * 1024),
    )(a, b, bias_p)
    return out[:, :N] if Np != N else out


# ----------------------------------------------------------------------------
# Fused NavieComplexLSTM recurrence (single pallas_call, in-kernel time loop)
# ----------------------------------------------------------------------------
def pallas_lstm_fused(gates_x, w_hh):
    """gates_x: (T, B2, 4*H2) precomputed x@W_ih + bias; w_hh: (H2, 4*H2).
    PyTorch gate order (i, f, g, o).  Returns h sequence (T, B2, H2).
    Gate activations are two full-lane-width tanh EUP pushes per step
    (sigmoid = 0.5*tanh(0.5x)+0.5) instead of four lane-sliced transcendental
    calls plus divides on the serially latency-bound critical path."""
    T, B2, G = gates_x.shape
    H2 = G // 4

    def kernel(gx_ref, whh_ref, o_ref):
        whh = whh_ref[...]                        # hoisted: loaded once

        def step(t, carry):
            h, c = carry
            gates = gx_ref[t] + jnp.dot(h, whh,
                                        preferred_element_type=jnp.float32)
            th = jnp.tanh(0.5 * gates)            # EUP, full 4*H2-lane vreg
            sg = 0.5 * th + 0.5                   # sigmoid(gates), VPU only
            tg = jnp.tanh(gates)                  # EUP, full 4*H2-lane vreg
            i_g = sg[:, 0:H2]
            f_g = sg[:, H2:2 * H2]
            g_g = tg[:, 2 * H2:3 * H2]
            o_g = sg[:, 3 * H2:4 * H2]
            c_new = f_g * c + i_g * g_g
            h_new = o_g * jnp.tanh(c_new)
            # TODO(synk): pad this per-step store to a 128-lane multiple
            # (unmasked vst) once in-kernel minor-dim concat is validated on
            # the target toolchain; the recurrence is latency-bound so one
            # sub-vreg vst.msk per step is not the binding unit.
            o_ref[t] = h_new
            return h_new, c_new

        h0 = jnp.zeros((B2, H2), jnp.float32)
        c0 = jnp.zeros((B2, H2), jnp.float32)
        lax.fori_loop(0, T, step, (h0, c0),
                      unroll=True if T <= 16 else None)

    # TODO(synk): at long T / large B grid the time axis ('arbitrary') with the
    # (h, c) carry kept in VMEM scratch, to stay inside v7x's 64 MiB VMEM.
    return pl.pallas_call(
        kernel,
        out_shape=jax.ShapeDtypeStruct((T, B2, H2), jnp.float32),
        compiler_params=pltpu.CompilerParams(vmem_limit_bytes=32 * 1024 * 1024),
    )(gates_x.astype(jnp.float32), w_hh.astype(jnp.float32))


# ----------------------------------------------------------------------------
# BatchNorm (training-mode batch statistics, eps=1e-5) + PReLU on the
# lane-dense (C, M) layout: channels on sublanes, rows (B*H*W) on lanes.
# ----------------------------------------------------------------------------
def pallas_bn_prelu_cm(x_cm, gamma, beta, alpha):
    # TODO(synk): matches training-mode BatchNorm2d (per-batch stats); eval-mode
    # running statistics would need stored buffers from a checkpoint.
    # TODO(synk): for very large M add a row grid with two-pass sum/sumsq
    # accumulation so the statistics stay global across row blocks.
    C, M = x_cm.shape

    def kernel(x_ref, g_ref, b_ref, a_ref, o_ref):
        xv = x_ref[...]
        mean = jnp.mean(xv, axis=1, keepdims=True)       # lane-axis reduce (XLU)
        var = jnp.mean((xv - mean) ** 2, axis=1, keepdims=True)
        y = (xv - mean) * jax.lax.rsqrt(var + 1e-5) * g_ref[...] + b_ref[...]
        a = a_ref[0, 0]
        o_ref[...] = jnp.where(y > 0, y, a * y)

    return pl.pallas_call(
        kernel,
        out_shape=jax.ShapeDtypeStruct((C, M), jnp.float32),
    )(x_cm.astype(jnp.float32),
      gamma.reshape(C, 1).astype(jnp.float32),
      beta.reshape(C, 1).astype(jnp.float32),
      alpha.reshape(1, 1).astype(jnp.float32))


def bn_prelu_to_nchw(flat, gamma, beta, alpha, B, Ho, Wo):
    """flat (M, C) GEMM output -> BN+PReLU on (C, M) -> NCHW."""
    C = flat.shape[1]
    cm = pallas_bn_prelu_cm(flat.T, gamma, beta, alpha)          # (C, B*Ho*Wo)
    return cm.reshape(C, B, Ho, Wo).transpose(1, 0, 2, 3)


# ----------------------------------------------------------------------------
# Conv building blocks (im2col via strided slices, single block-complex GEMM)
# ----------------------------------------------------------------------------
def _im2col(x, kh, kw, stride, padding):
    """x: (B, C, H, W) NCHW -> (B*Ho*Wo, C*kh*kw) with (C, kh, kw) column order
    (matches PyTorch weight.reshape(Cout, -1)).  Built from kh*kw strided
    slices (no XLA gather)."""
    # TODO(synk): patches are still materialized in HBM (kh*kw expansion); an
    # in-GEMM gather (K grid axis over taps with scalar-prefetched offsets)
    # would remove this copy at realistic DCCRN sizes.
    B, C, H, W = x.shape
    sh, sw = stride
    ph, pw = padding
    xp = jnp.pad(x, ((0, 0), (0, 0), (ph, ph), (pw, pw)))
    Hp, Wp = H + 2 * ph, W + 2 * pw
    Ho = (Hp - kh) // sh + 1
    Wo = (Wp - kw) // sw + 1
    cols = []
    for dh in range(kh):
        for dw in range(kw):
            cols.append(xp[:, :, dh:dh + (Ho - 1) * sh + 1:sh,
                              dw:dw + (Wo - 1) * sw + 1:sw])        # (B, C, Ho, Wo)
    pat = jnp.stack(cols, axis=2)                                    # (B, C, kh*kw, Ho, Wo)
    pat = pat.transpose(0, 3, 4, 1, 2).reshape(B * Ho * Wo, C * kh * kw)
    return pat, Ho, Wo


def complex_conv2d_fused(x, wr, br, wi, bi, stride, padding):
    """Complex Conv2d as ONE block-complex GEMM:
        (M, 2*Kh) patches @ [[Wr, Wi], [-Wi, Wr]]  ->  (M, [real | imag]).
    The im2col column order is (channel, kh, kw) and the input channels are
    already [real | imag], so the patch matrix needs no re-stacking: GEMM rows
    halve and the reduction dim K doubles vs. the row-stacked formulation, and
    the result lands directly in the channel layout BN/PReLU and the next
    layer consume (no slice/concat epilogue).
    Returns (flat (M, 2*Cout_half), (B, Ho, Wo))."""
    Cout_half, Cin_half, kh, kw = wr.shape
    pat, Ho, Wo = _im2col(x, kh, kw, stride, padding)                # (M, 2*Kh)
    Kh = Cin_half * kh * kw
    Wr = wr.reshape(Cout_half, Kh).T                                 # (Kh, Cout_half)
    Wi = wi.reshape(Cout_half, Kh).T
    Wblk = jnp.concatenate(
        [jnp.concatenate([Wr, Wi], axis=1),                          # rows for real patches
         jnp.concatenate([-Wi, Wr], axis=1)], axis=0)                # rows for imag patches
    bias = jnp.concatenate([br, bi])
    Y = pallas_matmul(pat, Wblk, bias)                               # (M, 2*Cout_half)
    return Y, (x.shape[0], Ho, Wo)


def complex_conv_transpose2d_fused(x, wr, br, wi, bi, stride, padding, output_padding):
    """PyTorch ConvTranspose2d semantics (w: (Cin_half, Cout_half, kh, kw)) as a
    dilated/padded regular conv with the flipped, channel-swapped kernel,
    fused exactly like complex_conv2d_fused."""
    # TODO(synk): sub-pixel decomposition (split output rows by stride parity)
    # would avoid multiplying the inserted zero rows (~2x wasted MXU FLOPs on
    # the decoder with stride (2,1)).
    B, C, H, W = x.shape
    sh, sw = stride
    ph, pw = padding
    oph, opw = output_padding
    kh, kw = wr.shape[2], wr.shape[3]
    Hd = (H - 1) * sh + 1
    Wd = (W - 1) * sw + 1
    xd = jnp.zeros((B, C, Hd, Wd), x.dtype).at[:, :, ::sh, ::sw].set(x)
    xp = jnp.pad(xd, ((0, 0), (0, 0),
                      (kh - 1 - ph, kh - 1 - ph + oph),
                      (kw - 1 - pw, kw - 1 - pw + opw)))
    wrf = jnp.flip(wr, axis=(2, 3)).transpose(1, 0, 2, 3)            # (Cout_half, Cin_half, kh, kw)
    wif = jnp.flip(wi, axis=(2, 3)).transpose(1, 0, 2, 3)
    return complex_conv2d_fused(xp, wrf, br, wif, bi, (1, 1), (0, 0))


def flat_to_nchw(x_flat, B, Ho, Wo):
    C = x_flat.shape[1]
    return x_flat.reshape(B, Ho, Wo, C).transpose(0, 3, 1, 2)


def complex_cat(tensors, axis):
    reals, imags = [], []
    for t in tensors:
        r, i = jnp.split(t, 2, axis=axis)
        reals.append(r)
        imags.append(i)
    return jnp.concatenate(reals + imags, axis=axis)


# ----------------------------------------------------------------------------
# STFT
# ----------------------------------------------------------------------------
def _sqrt_hann_window(win_len):
    n = np.arange(win_len)
    return ((0.5 - 0.5 * np.cos(2.0 * np.pi * n / win_len)) ** 0.5).astype(np.float32)


def conv_stft(x, stft_W, win_len, hop):
    """ConvSTFT('complex'): frame + project.  x: (Bx, L) -> (Bx, fft+2, T)."""
    # TODO(synk): the framed copy could be avoided with a K grid axis over the
    # win_len/hop overlapping taps; negligible at win=16, linear in audio len.
    Bx, _ = x.shape
    pad = win_len - hop
    xp = jnp.pad(x, ((0, 0), (pad, pad)))
    Lp = xp.shape[1]
    T = (Lp - win_len) // hop + 1
    if win_len % hop == 0:
        # gather-free framing: hop-sized chunks + r shifted concatenations
        r = win_len // hop
        n_chunks = -(-Lp // hop)
        xpc = jnp.pad(xp, ((0, 0), (0, n_chunks * hop - Lp)))
        chunks = xpc.reshape(Bx, n_chunks, hop)
        frames = jnp.concatenate([chunks[:, j:j + T] for j in range(r)], axis=-1)
    else:
        # TODO(synk): hop not dividing win_len -> gather-based framing fallback
        idx = jnp.arange(T)[:, None] * hop + jnp.arange(win_len)[None, :]
        frames = xp[:, idx]
    out = pallas_matmul(frames.reshape(Bx * T, win_len), stft_W)     # (Bx*T, fft+2)
    return out.reshape(Bx, T, -1).transpose(0, 2, 1)                 # (Bx, fft+2, T)


# ----------------------------------------------------------------------------
# Fused masking-mode 'E' + iSTFT projection, then overlap-add
# ----------------------------------------------------------------------------
def _overlap_add(frames, win_len, hop):
    """Vectorized shift-add overlap-add + window-power normalization."""
    Bc, T, _ = frames.shape
    out_len = (T - 1) * hop + win_len
    w2 = _sqrt_hann_window(win_len) ** 2
    coff = np.zeros((out_len,), np.float32)
    for t in range(T):
        coff[t * hop:t * hop + win_len] += w2
    if win_len % hop == 0:
        r = win_len // hop
        num_chunks = T + r - 1
        fr = frames.reshape(Bc, T, r, hop)
        acc = jnp.zeros((Bc, num_chunks, hop), jnp.float32)
        for j in range(r):
            acc = acc.at[:, j:j + T].add(fr[:, :, j, :])
        out = acc.reshape(Bc, out_len)
    else:
        # TODO(synk): generic hop -> per-frame overlap-add fallback
        out = jnp.zeros((Bc, out_len), jnp.float32)
        for t in range(T):
            out = out.at[:, t * hop:t * hop + win_len].add(frames[:, t])
    out = out / (jnp.asarray(coff) + 1e-8)[None, :]
    cut = win_len - hop
    return out[:, cut:out_len - cut]


def pallas_mask_istft(mask_real, mask_imag, mic_real, mic_imag, istft_W, win_len, hop):
    """Masking-mode 'E' fused with the ConviSTFT projection GEMM in ONE
    pallas_call: the mask math (EUP rsqrt / approx reciprocal, never a divide)
    is the prologue; the iSTFT dot is the epilogue, so the masked spectrum
    never round-trips HBM between the two.  cos/sin(atan2) use the exact
    identities cos(atan2(y,x)) = x/hypot, sin = y/hypot (the angle itself is
    never materialized).  Returns (out_spec (B, fft+2, T), out_wav (B, L))."""
    # TODO(synk): torch.atan2 has no direct Mosaic lowering; the phase is only
    # consumed through cos/sin so the identities above are exact.
    B, half, T = mask_real.shape
    M = B * T

    def rows(a):
        return a.transpose(0, 2, 1).reshape(M, half).astype(jnp.float32)

    Np = max(_LANE, ((win_len + _LANE - 1) // _LANE) * _LANE)
    w_r = istft_W[:half].astype(jnp.float32)                 # (half, win_len)
    w_i = istft_W[half:].astype(jnp.float32)
    if Np != win_len:
        w_r = jnp.pad(w_r, ((0, 0), (0, Np - win_len)))
        w_i = jnp.pad(w_i, ((0, 0), (0, Np - win_len)))

    tm = _pick_row_tile(M)
    grid_m = pl.cdiv(M, tm)

    def kernel(mr_ref, mi_ref, xr_ref, xi_ref, wr_ref, wi_ref,
               or_ref, oi_ref, fr_ref):
        mr = mr_ref[...]
        mi = mi_ref[...]
        xr = xr_ref[...]
        xi = xi_ref[...]
        mic_pow = xr * xr + xi * xi + 1e-8
        inv_mic = jax.lax.rsqrt(mic_pow)               # EUP, replaces divides
        mic_mags = mic_pow * inv_mic                   # == sqrt(mic_pow)
        cos_mic = xr * inv_mic
        sin_mic = xi * inv_mic
        mask_mags = jnp.sqrt(mr * mr + mi * mi)
        # approx reciprocal is safe: any scale error cancels in the cos/sin
        # re-normalization below.
        inv_m = pl.reciprocal(mask_mags + 1e-8, approx=True)
        rp = mr * inv_m
        ip = mi * inv_m
        inv_h = jax.lax.rsqrt(rp * rp + ip * ip + 1e-24)
        cos_mask = rp * inv_h
        sin_mask = ip * inv_h
        est_mags = jnp.tanh(mask_mags) * mic_mags
        real = est_mags * (cos_mic * cos_mask - sin_mic * sin_mask)
        imag = est_mags * (sin_mic * cos_mask + cos_mic * sin_mask)
        or_ref[...] = real
        oi_ref[...] = imag
        # iSTFT projection epilogue (split weights avoid an in-kernel concat)
        fr_ref[...] = (jnp.dot(real, wr_ref[...], preferred_element_type=jnp.float32)
                       + jnp.dot(imag, wi_ref[...], preferred_element_type=jnp.float32))

    half_spec = pl.BlockSpec((tm, half), lambda i: (i, 0))
    w_spec = pl.BlockSpec((half, Np), lambda i: (0, 0))
    real_f, imag_f, frames = pl.pallas_call(
        kernel,
        out_shape=(jax.ShapeDtypeStruct((M, half), jnp.float32),
                   jax.ShapeDtypeStruct((M, half), jnp.float32),
                   jax.ShapeDtypeStruct((M, Np), jnp.float32)),
        grid=(grid_m,),
        in_specs=[half_spec, half_spec, half_spec, half_spec, w_spec, w_spec],
        out_specs=(half_spec, half_spec,
                   pl.BlockSpec((tm, Np), lambda i: (i, 0))),
        compiler_params=pltpu.CompilerParams(
            dimension_semantics=("parallel",),
            vmem_limit_bytes=32 * 1024 * 1024),
    )(rows(mask_real), rows(mask_imag), rows(mic_real), rows(mic_imag), w_r, w_i)

    out_spec = jnp.concatenate(
        [real_f.reshape(B, T, half).transpose(0, 2, 1),
         imag_f.reshape(B, T, half).transpose(0, 2, 1)], axis=1)
    out_wav = _overlap_add(frames[:, :win_len].reshape(B, T, win_len), win_len, hop)
    return out_spec, out_wav


# ----------------------------------------------------------------------------
# NavieComplexLSTM (fused real/imag recurrence + hoisted input projection)
# ----------------------------------------------------------------------------
def _fuse_complex_lstm_weights(p):
    """Build one LSTM with hidden 2H whose state is [h_real | h_imag]:
    gate columns interleaved as (i_r,i_i,f_r,f_i,g_r,g_i,o_r,o_i) and a
    block-diagonal recurrent matrix, so one recurrence runs both LSTMs."""
    H = p["r_whh"].shape[1]
    gate = lambda w, g: w[g * H:(g + 1) * H]
    r_b = p["r_bih"] + p["r_bhh"]
    i_b = p["i_bih"] + p["i_bhh"]
    zeros_hh = jnp.zeros((H, H), jnp.float32)
    wih_cols, whh_cols, bias_cols = [], [], []
    for g in range(4):
        wih_cols.append(jnp.concatenate([gate(p["r_wih"], g).T,
                                         gate(p["i_wih"], g).T], axis=1))       # (I, 2H)
        blk = jnp.concatenate(
            [jnp.concatenate([gate(p["r_whh"], g).T, zeros_hh], axis=1),
             jnp.concatenate([zeros_hh, gate(p["i_whh"], g).T], axis=1)], axis=0)  # (2H, 2H)
        whh_cols.append(blk)
        bias_cols.append(jnp.concatenate([gate(r_b, g), gate(i_b, g)]))
    W_ih = jnp.concatenate(wih_cols, axis=1)        # (I, 8H)
    W_hh = jnp.concatenate(whh_cols, axis=1)        # (2H, 8H)
    bias = jnp.concatenate(bias_cols)               # (8H,)
    return W_ih, W_hh, bias


def naive_complex_lstm(real, imag, p):
    """NavieComplexLSTM layer: real_lstm / imag_lstm each applied to real & imag
    streams (batched along the batch axis), states zero-initialized."""
    T, Bh, I = real.shape
    H = p["r_whh"].shape[1]
    W_ih, W_hh, bias = _fuse_complex_lstm_weights(p)
    x = jnp.concatenate([real, imag], axis=1)                       # (T, 2B, I)
    B2 = 2 * Bh
    # hoisted input projection: one lane-dense GEMM (N = 8H = 128) for all timesteps
    gates_x = pallas_matmul(x.reshape(T * B2, I), W_ih, bias).reshape(T, B2, 8 * H)
    out = pallas_lstm_fused(gates_x, W_hh)                          # (T, 2B, 2H)
    r2r = out[:, :Bh, :H]
    r2i = out[:, :Bh, H:]
    i2r = out[:, Bh:, :H]
    i2i = out[:, Bh:, H:]
    return r2r - i2i, i2r + r2i


# ----------------------------------------------------------------------------
# Parameter initialization (deterministic, synthetic)
# ----------------------------------------------------------------------------
def init_params(key, cfg):
    win_len = cfg["win_size"]
    N = win_len
    kh, kw = cfg["kernel_size"]
    chans = cfg["conv_channels"]

    fb = np.fft.rfft(np.eye(N))[:win_len]
    kernel = np.concatenate([np.real(fb), np.imag(fb)], 1).T          # (fft+2, win_len)
    window = _sqrt_hann_window(win_len)
    stft_kernel = (kernel * window).astype(np.float32)
    istft_kernel = (np.linalg.pinv(kernel).T * window).astype(np.float32)

    keys = iter(jax.random.split(key, 64))

    def conv_w(shape):
        return 0.05 * jax.random.normal(next(keys), shape, jnp.float32)

    encoder = []
    for ci in range(len(chans) - 1):
        cin, cout = chans[ci] // 2, chans[ci + 1] // 2
        encoder.append(dict(
            wr=conv_w((cout, cin, kh, kw)), br=jnp.zeros((cout,), jnp.float32),
            wi=conv_w((cout, cin, kh, kw)), bi=jnp.zeros((cout,), jnp.float32),
            gamma=jnp.ones((chans[ci + 1],), jnp.float32),
            beta=jnp.zeros((chans[ci + 1],), jnp.float32),
            alpha=jnp.full((1,), 0.25, jnp.float32),
        ))

    hidden = cfg["hidden_dim"] * chans[-1]       # NavieComplexLSTM input/hidden size
    I = H = hidden // 2
    k = 1.0 / np.sqrt(H)

    def lstm_w(shape):
        return jax.random.uniform(next(keys), shape, jnp.float32, -k, k)

    lstms = []
    for _ in range(cfg["rnn_layers"]):
        lstms.append(dict(
            r_wih=lstm_w((4 * H, I)), r_whh=lstm_w((4 * H, H)),
            r_bih=lstm_w((4 * H,)), r_bhh=lstm_w((4 * H,)),
            i_wih=lstm_w((4 * H, I)), i_whh=lstm_w((4 * H, H)),
            i_bih=lstm_w((4 * H,)), i_bhh=lstm_w((4 * H,)),
        ))

    decoder = []
    for ci in range(len(chans) - 1, 0, -1):
        out_full = chans[ci - 1] if ci != 1 else 2
        cin_half, cout_half = chans[ci], out_full // 2
        d = dict(
            wr=conv_w((cin_half, cout_half, kh, kw)), br=jnp.zeros((cout_half,), jnp.float32),
            wi=conv_w((cin_half, cout_half, kh, kw)), bi=jnp.zeros((cout_half,), jnp.float32),
        )
        if ci != 1:
            d.update(gamma=jnp.ones((out_full,), jnp.float32),
                     beta=jnp.zeros((out_full,), jnp.float32),
                     alpha=jnp.full((1,), 0.25, jnp.float32))
        decoder.append(d)

    return dict(
        stft_W=jnp.asarray(stft_kernel.T),     # (win_len, fft+2)
        istft_W=jnp.asarray(istft_kernel),     # (fft+2, win_len)
        encoder=encoder, lstm=lstms, decoder=decoder,
    )


# ----------------------------------------------------------------------------
# DCCRN forward
# ----------------------------------------------------------------------------
def dccrn_forward(params, mic, far, near, echo):
    cfg = CONFIG
    win_len, hop = cfg["win_size"], cfg["hop_size"]
    half = win_len // 2 + 1

    # one batched STFT GEMM for all four waveforms (echo stays in the batch to
    # mirror the reference forward; it is essentially free once batched)
    wavs = jnp.concatenate([mic, far, near, echo], axis=0)
    specs = conv_stft(wavs, params["stft_W"], win_len, hop)          # (4B, fft+2, T)
    mic_specs, far_specs, near_specs, echo_specs = jnp.split(specs, 4, axis=0)
    _ = echo_specs                                                   # unused (as in reference)

    mic_real, mic_imag = mic_specs[:, :half], mic_specs[:, half:]
    far_real, far_imag = far_specs[:, :half], far_specs[:, half:]

    cspecs = jnp.stack([mic_real, far_real, mic_imag, far_imag], axis=1)
    cspecs = cspecs[:, :, 1:]                   # drop DC bin

    out = cspecs
    encoder_out = []
    for lp in params["encoder"]:
        flat, (Bc, Ho, Wo) = complex_conv2d_fused(
            out, lp["wr"], lp["br"], lp["wi"], lp["bi"],
            cfg["stride"], (cfg["padding"][0], 0))
        out = bn_prelu_to_nchw(flat, lp["gamma"], lp["beta"], lp["alpha"], Bc, Ho, Wo)
        encoder_out.append(out)

    B, C, D, T2 = out.shape
    outp = out.transpose(3, 0, 1, 2)            # (T, B, C, D)
    r_rnn_in = outp[:, :, :C // 2].reshape(T2, B, C // 2 * D)
    i_rnn_in = outp[:, :, C // 2:].reshape(T2, B, C // 2 * D)
    for lstm_p in params["lstm"]:
        r_rnn_in, i_rnn_in = naive_complex_lstm(r_rnn_in, i_rnn_in, lstm_p)
    r_rnn_in = r_rnn_in.reshape(T2, B, C // 2, D)
    i_rnn_in = i_rnn_in.reshape(T2, B, C // 2, D)
    out = jnp.concatenate([r_rnn_in, i_rnn_in], axis=2).transpose(1, 2, 3, 0)

    for idx, dp in enumerate(params["decoder"]):
        out = complex_cat([out, encoder_out[-1 - idx]], 1)
        flat, (Bc, Ho, Wo) = complex_conv_transpose2d_fused(
            out, dp["wr"], dp["br"], dp["wi"], dp["bi"],
            cfg["stride"], cfg["padding"], (1, 0))
        if "gamma" in dp:
            out = bn_prelu_to_nchw(flat, dp["gamma"], dp["beta"], dp["alpha"], Bc, Ho, Wo)
        else:
            out = flat_to_nchw(flat, Bc, Ho, Wo)

    mask_real = jnp.pad(out[:, 0], ((0, 0), (1, 0), (0, 0)))
    mask_imag = jnp.pad(out[:, 1], ((0, 0), (1, 0), (0, 0)))

    out_spec, out_wav = pallas_mask_istft(mask_real, mask_imag, mic_real, mic_imag,
                                          params["istft_W"], win_len, hop)
    return out_spec, out_wav, near_specs


# ----------------------------------------------------------------------------
if __name__ == "__main__":
    root = jax.random.PRNGKey(0)
    k_mic, k_far, k_near, k_echo, k_params = jax.random.split(root, 5)
    B, L = 2, 64
    mic = jax.random.normal(k_mic, (B, L), jnp.float32)
    far = jax.random.normal(k_far, (B, L), jnp.float32)
    near = jax.random.normal(k_near, (B, L), jnp.float32)
    echo = jax.random.normal(k_echo, (B, L), jnp.float32)

    params = init_params(k_params, CONFIG)

    out_spec, out_wav, near_specs = jax.jit(dccrn_forward)(params, mic, far, near, echo)
    jax.block_until_ready((out_spec, out_wav, near_specs))

    assert out_spec.shape == (B, CONFIG["win_size"] + 2, 9)
    assert out_wav.shape == (B, L)
    assert near_specs.shape == (B, CONFIG["win_size"] + 2, 9)
    print("KERNEL_OK")
</pallas_src>

<mosaic_0001>
module attributes {stable_mosaic.version = 11 : i64} {
  func.func @_matmul_bias_kernel(%arg0: i32, %arg1: memref<72x16xbf16, #tpu.memory_space<vmem>>, %arg2: memref<16x128xbf16, #tpu.memory_space<vmem>>, %arg3: memref<1x128xf32, #tpu.memory_space<vmem>>, %arg4: memref<72x128xf32, #tpu.memory_space<vmem>>) attributes {dimension_semantics = [#tpu.dimension_semantics<parallel>], iteration_bounds = array<i64: 1>, scalar_prefetch = 0 : i64, scratch_operands = 0 : i64, tpu.core_type = #tpu.core_type<tc>, window_params = [{transform_indices = @transform_0, window_bounds = array<i64: 72, 16>}, {pipeline_mode = #tpu.pipeline_mode<synchronous>, transform_indices = @transform_1, window_bounds = array<i64: 16, 128>}, {pipeline_mode = #tpu.pipeline_mode<synchronous>, transform_indices = @transform_2, window_bounds = array<i64: 1, 128>}, {transform_indices = @transform_3, window_bounds = array<i64: 72, 128>}]} {
    %c0 = arith.constant 0 : index
    %c0_0 = arith.constant 0 : index
    %0 = vector.load %arg1[%c0, %c0_0] : memref<72x16xbf16, #tpu.memory_space<vmem>>, vector<72x16xbf16>
    %c0_1 = arith.constant 0 : index
    %c0_2 = arith.constant 0 : index
    %1 = vector.load %arg2[%c0_1, %c0_2] : memref<16x128xbf16, #tpu.memory_space<vmem>>, vector<16x128xbf16>
    %cst = arith.constant dense<0.000000e+00> : vector<72x128xf32>
    %2 = tpu.matmul %0, %1, %cst {dimension_numbers = #tpu.dot_dimension_numbers<[1], [0], [0], [1], [0, 0, 1, 1], [], []>} : vector<72x16xbf16>, vector<16x128xbf16>, vector<72x128xf32> -> vector<72x128xf32>
    %c0_3 = arith.constant 0 : index
    %c0_4 = arith.constant 0 : index
    %3 = vector.load %arg3[%c0_3, %c0_4] : memref<1x128xf32, #tpu.memory_space<vmem>>, vector<1x128xf32>
    %4 = vector.broadcast %3 : vector<1x128xf32> to vector<72x128xf32>
    %5 = arith.addf %2, %4 : vector<72x128xf32>
    %c0_5 = arith.constant 0 : index
    %c0_6 = arith.constant 0 : index
    %6 = vector.load %arg4[%c0_5, %c0_6] : memref<72x128xf32, #tpu.memory_space<vmem>>, vector<72x128xf32>
    tpu.vector_store %arg4[%c0_5, %c0_6], %5 {strides = array<i32>} : memref<72x128xf32, #tpu.memory_space<vmem>>, vector<72x128xf32>,
    return
  }
  func.func @transform_0(%arg0: i32) -> (i32, i32) {
    %c0_i32 = arith.constant 0 : i32
    %c0_i32_0 = arith.constant 0 : i32
    return %arg0, %c0_i32 : i32, i32
  }
  func.func @transform_1(%arg0: i32) -> (i32, i32) {
    %c0_i32 = arith.constant 0 : i32
    %c0_i32_0 = arith.constant 0 : i32
    %c0_i32_1 = arith.constant 0 : i32
    return %c0_i32, %c0_i32_0 : i32, i32
  }
  func.func @transform_2(%arg0: i32) -> (i32, i32) {
    %c0_i32 = arith.constant 0 : i32
    %c0_i32_0 = arith.constant 0 : i32
    %c0_i32_1 = arith.constant 0 : i32
    return %c0_i32, %c0_i32_0 : i32, i32
  }
  func.func @transform_3(%arg0: i32) -> (i32, i32) {
    %c0_i32 = arith.constant 0 : i32
    %c0_i32_0 = arith.constant 0 : i32
    return %arg0, %c0_i32 : i32, i32
  }
}

module attributes {stable_mosaic.version = 11 : i64} {
  func.func @_matmul_bias_kernel(%arg0: i32, %arg1: memref<64x40xbf16, #tpu.memory_space<vmem>>, %arg2: memref<40x128xbf16, #tpu.memory_space<vmem>>, %arg3: memref<1x128xf32, #tpu.memory_space<vmem>>, %arg4: memref<64x128xf32, #tpu.memory_space<vmem>>) attributes {dimension_semantics = [#tpu.dimension_semantics<parallel>], iteration_bounds = array<i64: 1>, scalar_prefetch = 0 : i64, scratch_operands = 0 : i64, tpu.core_type = #tpu.core_type<tc>, window_params = [{transform_indices = @transform_0, window_bounds = array<i64: 64, 40>}, {pipeline_mode = #tpu.pipeline_mode<synchronous>, transform_indices = @transform_1, window_bounds = array<i64: 40, 128>}, {pipeline_mode = #tpu.pipeline_mode<synchronous>, transform_indices = @transform_2, window_bounds = array<i64: 1, 128>}, {transform_indices = @transform_3, window_bounds = array<i64: 64, 128>}]} {
    %c0 = arith.constant 0 : index
    %c0_0 = arith.constant 0 : index
    %0 = vector.load %arg1[%c0, %c0_0] : memref<64x40xbf16, #tpu.memory_space<vmem>>, vector<64x40xbf16>
    %c0_1 = arith.constant 0 : index
    %c0_2 = arith.constant 0 : index
    %1 = vector.load %arg2[%c0_1, %c0_2] : memref<40x128xbf16, #tpu.memory_space<vmem>>, vector<40x128xbf16>
    %cst = arith.constant dense<0.000000e+00> : vector<64x128xf32>
    %2 = tpu.matmul %0, %1, %cst {dimension_numbers = #tpu.dot_dimension_numbers<[1], [0], [0], [1], [0, 0, 1, 1], [], []>} : vector<64x40xbf16>, vector<40x128xbf16>, vector<64x128xf32> -> vector<64x128xf32>
    %c0_3 = arith.constant 0 : index
    %c0_4 = arith.constant 0 : index
    %3 = vector.load %arg3[%c0_3, %c0_4] : memref<1x128xf32, #tpu.memory_space<vmem>>, vector<1x128xf32>
    %4 = vector.broadcast %3 : vector<1x128xf32> to vector<64x128xf32>
    %5 = arith.addf %2, %4 : vector<64x128xf32>
    %c0_5 = arith.constant 0 : index
    %c0_6 = arith.constant 0 : index
    %6 = vector.load %arg4[%c0_5, %c0_6] : memref<64x128xf32, #tpu.memory_space<vmem>>, vector<64x128xf32>
    tpu.vector_store %arg4[%c0_5, %c0_6], %5 {strides = array<i32>} : memref<64x128xf32, #tpu.memory_space<vmem>>, vector<64x128xf32>,
    return
  }
  func.func @transform_0(%arg0: i32) -> (i32, i32) {
    %c0_i32 = arith.constant 0 : i32
    %c0_i32_0 = arith.constant 0 : i32
    return %arg0, %c0_i32 : i32, i32
  }
  func.func @transform_1(%arg0: i32) -> (i32, i32) {
    %c0_i32 = arith.constant 0 : i32
    %c0_i32_0 = arith.constant 0 : i32
    %c0_i32_1 = arith.constant 0 : i32
    return %c0_i32, %c0_i32_0 : i32, i32
  }
  func.func @transform_2(%arg0: i32) -> (i32, i32) {
    %c0_i32 = arith.constant 0 : i32
    %c0_i32_0 = arith.constant 0 : i32
    %c0_i32_1 = arith.constant 0 : i32
    return %c0_i32, %c0_i32_0 : i32, i32
  }
  func.func @transform_3(%arg0: i32) -> (i32, i32) {
    %c0_i32 = arith.constant 0 : i32
    %c0_i32_0 = arith.constant 0 : i32
    return %arg0, %c0_i32 : i32, i32
  }
}

module attributes {stable_mosaic.version = 11 : i64} {
  func.func @kernel(%arg0: memref<8x64xf32, #tpu.memory_space<vmem>>, %arg1: memref<8x1xf32, #tpu.memory_space<vmem>>, %arg2: memref<8x1xf32, #tpu.memory_space<vmem>>, %arg3: memref<1x1xf32, #tpu.memory_space<vmem>>, %arg4: memref<8x64xf32, #tpu.memory_space<vmem>>) attributes {dimension_semantics = [], scalar_prefetch = 0 : i64, scratch_operands = 0 : i64, tpu.core_type = #tpu.core_type<tc>} {
    %c0 = arith.constant 0 : index
    %c0_0 = arith.constant 0 : index
    %0 = vector.load %arg0[%c0, %c0_0] : memref<8x64xf32, #tpu.memory_space<vmem>>, vector<8x64xf32>
    %cst = arith.constant dense<0.000000e+00> : vector<8xf32>
    %1 = vector.multi_reduction <add>, %0, %cst [1] : vector<8x64xf32> to vector<8xf32>
    %2 = vector.shape_cast %1 : vector<8xf32> to vector<8x1xf32>
    %cst_1 = arith.constant 6.400000e+01 : f32
    %3 = vector.broadcast %cst_1 : f32 to vector<8x1xf32>
    %4 = arith.divf %2, %3 : vector<8x1xf32>
    %5 = vector.broadcast %4 : vector<8x1xf32> to vector<8x64xf32>
    %6 = arith.subf %0, %5 : vector<8x64xf32>
    %7 = arith.mulf %6, %6 : vector<8x64xf32>
    %cst_2 = arith.constant dense<0.000000e+00> : vector<8xf32>
    %8 = vector.multi_reduction <add>, %7, %cst_2 [1] : vector<8x64xf32> to vector<8xf32>
    %9 = vector.shape_cast %8 : vector<8xf32> to vector<8x1xf32>
    %cst_3 = arith.constant 6.400000e+01 : f32
    %10 = vector.broadcast %cst_3 : f32 to vector<8x1xf32>
    %11 = arith.divf %9, %10 : vector<8x1xf32>
    %12 = vector.broadcast %4 : vector<8x1xf32> to vector<8x64xf32>
    %13 = arith.subf %0, %12 : vector<8x64xf32>
    %cst_4 = arith.constant 9.99999974E-6 : f32
    %14 = vector.broadcast %cst_4 : f32 to vector<8x1xf32>
    %15 = arith.addf %11, %14 : vector<8x1xf32>
    %16 = math.rsqrt %15 : vector<8x1xf32>
    %17 = vector.broadcast %16 : vector<8x1xf32> to vector<8x64xf32>
    %18 = arith.mulf %13, %17 : vector<8x64xf32>
    %c0_5 = arith.constant 0 : index
    %c0_6 = arith.constant 0 : index
    %19 = vector.load %arg1[%c0_5, %c0_6] : memref<8x1xf32, #tpu.memory_space<vmem>>, vector<8x1xf32>
    %20 = vector.broadcast %19 : vector<8x1xf32> to vector<8x64xf32>
    %21 = arith.mulf %18, %20 : vector<8x64xf32>
    %c0_7 = arith.constant 0 : index
    %c0_8 = arith.constant 0 : index
    %22 = vector.load %arg2[%c0_7, %c0_8] : memref<8x1xf32, #tpu.memory_space<vmem>>, vector<8x1xf32>
    %23 = vector.broadcast %22 : vector<8x1xf32> to vector<8x64xf32>
    %24 = arith.addf %21, %23 : vector<8x64xf32>
    %c0_9 = arith.constant 0 : index
    %c0_10 = arith.constant 0 : index
    %25 = vector.load %arg3[%c0_9, %c0_10] : memref<1x1xf32, #tpu.memory_space<vmem>>, vector<1x1xf32>
    %26 = vector.extract %25[0, 0] : f32 from vector<1x1xf32>
    %cst_11 = arith.constant 0.000000e+00 : f32
    %27 = vector.broadcast %cst_11 : f32 to vector<8x64xf32>
    %28 = arith.cmpf ogt, %24, %27 : vector<8x64xf32>
    %29 = vector.broadcast %26 : f32 to vector<8x64xf32>
    %30 = arith.mulf %29, %24 : vector<8x64xf32>
    %31 = arith.select %28, %24, %30 : vector<8x64xi1>, vector<8x64xf32>
    %c0_12 = arith.constant 0 : index
    %c0_13 = arith.constant 0 : index
    %32 = vector.load %arg4[%c0_12, %c0_13] : memref<8x64xf32, #tpu.memory_space<vmem>>, vector<8x64xf32>
    tpu.vector_store %arg4[%c0_12, %c0_13], %31 {strides = array<i32>} : memref<8x64xf32, #tpu.memory_space<vmem>>, vector<8x64xf32>,
    return
  }
}

module attributes {stable_mosaic.version = 11 : i64} {
  func.func @kernel(%arg0: memref<16x28xf32, #tpu.memory_space<vmem>>, %arg1: memref<16x1xf32, #tpu.memory_space<vmem>>, %arg2: memref<16x1xf32, #tpu.memory_space<vmem>>, %arg3: memref<1x1xf32, #tpu.memory_space<vmem>>, %arg4: memref<16x28xf32, #tpu.memory_space<vmem>>) attributes {dimension_semantics = [], scalar_prefetch = 0 : i64, scratch_operands = 0 : i64, tpu.core_type = #tpu.core_type<tc>} {
    %c0 = arith.constant 0 : index
    %c0_0 = arith.constant 0 : index
    %0 = vector.load %arg0[%c0, %c0_0] : memref<16x28xf32, #tpu.memory_space<vmem>>, vector<16x28xf32>
    %cst = arith.constant dense<0.000000e+00> : vector<16xf32>
    %1 = vector.multi_reduction <add>, %0, %cst [1] : vector<16x28xf32> to vector<16xf32>
    %2 = vector.shape_cast %1 : vector<16xf32> to vector<16x1xf32>
    %cst_1 = arith.constant 2.800000e+01 : f32
    %3 = vector.broadcast %cst_1 : f32 to vector<16x1xf32>
    %4 = arith.divf %2, %3 : vector<16x1xf32>
    %5 = vector.broadcast %4 : vector<16x1xf32> to vector<16x28xf32>
    %6 = arith.subf %0, %5 : vector<16x28xf32>
    %7 = arith.mulf %6, %6 : vector<16x28xf32>
    %cst_2 = arith.constant dense<0.000000e+00> : vector<16xf32>
    %8 = vector.multi_reduction <add>, %7, %cst_2 [1] : vector<16x28xf32> to vector<16xf32>
    %9 = vector.shape_cast %8 : vector<16xf32> to vector<16x1xf32>
    %cst_3 = arith.constant 2.800000e+01 : f32
    %10 = vector.broadcast %cst_3 : f32 to vector<16x1xf32>
    %11 = arith.divf %9, %10 : vector<16x1xf32>
    %12 = vector.broadcast %4 : vector<16x1xf32> to vector<16x28xf32>
    %13 = arith.subf %0, %12 : vector<16x28xf32>
    %cst_4 = arith.constant 9.99999974E-6 : f32
    %14 = vector.broadcast %cst_4 : f32 to vector<16x1xf32>
    %15 = arith.addf %11, %14 : vector<16x1xf32>
    %16 = math.rsqrt %15 : vector<16x1xf32>
    %17 = vector.broadcast %16 : vector<16x1xf32> to vector<16x28xf32>
    %18 = arith.mulf %13, %17 : vector<16x28xf32>
    %c0_5 = arith.constant 0 : index
    %c0_6 = arith.constant 0 : index
    %19 = vector.load %arg1[%c0_5, %c0_6] : memref<16x1xf32, #tpu.memory_space<vmem>>, vector<16x1xf32>
    %20 = vector.broadcast %19 : vector<16x1xf32> to vector<16x28xf32>
    %21 = arith.mulf %18, %20 : vector<16x28xf32>
    %c0_7 = arith.constant 0 : index
    %c0_8 = arith.constant 0 : index
    %22 = vector.load %arg2[%c0_7, %c0_8] : memref<16x1xf32, #tpu.memory_space<vmem>>, vector<16x1xf32>
    %23 = vector.broadcast %22 : vector<16x1xf32> to vector<16x28xf32>
    %24 = arith.addf %21, %23 : vector<16x28xf32>
    %c0_9 = arith.constant 0 : index
    %c0_10 = arith.constant 0 : index
    %25 = vector.load %arg3[%c0_9, %c0_10] : memref<1x1xf32, #tpu.memory_space<vmem>>, vector<1x1xf32>
    %26 = vector.extract %25[0, 0] : f32 from vector<1x1xf32>
    %cst_11 = arith.constant 0.000000e+00 : f32
    %27 = vector.broadcast %cst_11 : f32 to vector<16x28xf32>
    %28 = arith.cmpf ogt, %24, %27 : vector<16x28xf32>
    %29 = vector.broadcast %26 : f32 to vector<16x28xf32>
    %30 = arith.mulf %29, %24 : vector<16x28xf32>
    %31 = arith.select %28, %24, %30 : vector<16x28xi1>, vector<16x28xf32>
    %c0_12 = arith.constant 0 : index
    %c0_13 = arith.constant 0 : index
    %32 = vector.load %arg4[%c0_12, %c0_13] : memref<16x28xf32, #tpu.memory_space<vmem>>, vector<16x28xf32>
    tpu.vector_store %arg4[%c0_12, %c0_13], %31 {strides = array<i32>} : memref<16x28xf32, #tpu.memory_space<vmem>>, vector<16x28xf32>,
    return
  }
}

module attributes {stable_mosaic.version = 11 : i64} {
  func.func @_matmul_bias_kernel(%arg0: i32, %arg1: memref<28x80xbf16, #tpu.memory_space<vmem>>, %arg2: memref<80x128xbf16, #tpu.memory_space<vmem>>, %arg3: memref<1x128xf32, #tpu.memory_space<vmem>>, %arg4: memref<28x128xf32, #tpu.memory_space<vmem>>) attributes {dimension_semantics = [#tpu.dimension_semantics<parallel>], iteration_bounds = array<i64: 1>, scalar_prefetch = 0 : i64, scratch_operands = 0 : i64, tpu.core_type = #tpu.core_type<tc>, window_params = [{transform_indices = @transform_0, window_bounds = array<i64: 28, 80>}, {pipeline_mode = #tpu.pipeline_mode<synchronous>, transform_indices = @transform_1, window_bounds = array<i64: 80, 128>}, {pipeline_mode = #tpu.pipeline_mode<synchronous>, transform_indices = @transform_2, window_bounds = array<i64: 1, 128>}, {transform_indices = @transform_3, window_bounds = array<i64: 28, 128>}]} {
    %c0 = arith.constant 0 : index
    %c0_0 = arith.constant 0 : index
    %0 = vector.load %arg1[%c0, %c0_0] : memref<28x80xbf16, #tpu.memory_space<vmem>>, vector<28x80xbf16>
    %c0_1 = arith.constant 0 : index
    %c0_2 = arith.constant 0 : index
    %1 = vector.load %arg2[%c0_1, %c0_2] : memref<80x128xbf16, #tpu.memory_space<vmem>>, vector<80x128xbf16>
    %cst = arith.constant dense<0.000000e+00> : vector<28x128xf32>
    %2 = tpu.matmul %0, %1, %cst {dimension_numbers = #tpu.dot_dimension_numbers<[1], [0], [0], [1], [0, 0, 1, 1], [], []>} : vector<28x80xbf16>, vector<80x128xbf16>, vector<28x128xf32> -> vector<28x128xf32>
    %c0_3 = arith.constant 0 : index
    %c0_4 = arith.constant 0 : index
    %3 = vector.load %arg3[%c0_3, %c0_4] : memref<1x128xf32, #tpu.memory_space<vmem>>, vector<1x128xf32>
    %4 = vector.broadcast %3 : vector<1x128xf32> to vector<28x128xf32>
    %5 = arith.addf %2, %4 : vector<28x128xf32>
    %c0_5 = arith.constant 0 : index
    %c0_6 = arith.constant 0 : index
    %6 = vector.load %arg4[%c0_5, %c0_6] : memref<28x128xf32, #tpu.memory_space<vmem>>, vector<28x128xf32>
    tpu.vector_store %arg4[%c0_5, %c0_6], %5 {strides = array<i32>} : memref<28x128xf32, #tpu.memory_space<vmem>>, vector<28x128xf32>,
    return
  }
  func.func @transform_0(%arg0: i32) -> (i32, i32) {
    %c0_i32 = arith.constant 0 : i32
    %c0_i32_0 = arith.constant 0 : i32
    return %arg0, %c0_i32 : i32, i32
  }
  func.func @transform_1(%arg0: i32) -> (i32, i32) {
    %c0_i32 = arith.constant 0 : i32
    %c0_i32_0 = arith.constant 0 : i32
    %c0_i32_1 = arith.constant 0 : i32
    return %c0_i32, %c0_i32_0 : i32, i32
  }
  func.func @transform_2(%arg0: i32) -> (i32, i32) {
    %c0_i32 = arith.constant 0 : i32
    %c0_i32_0 = arith.constant 0 : i32
    %c0_i32_1 = arith.constant 0 : i32
    return %c0_i32, %c0_i32_0 : i32, i32
  }
  func.func @transform_3(%arg0: i32) -> (i32, i32) {
    %c0_i32 = arith.constant 0 : i32
    %c0_i32_0 = arith.constant 0 : i32
    return %arg0, %c0_i32 : i32, i32
  }
}

module attributes {stable_mosaic.version = 11 : i64} {
  func.func @kernel(%arg0: memref<7x4x128xf32, #tpu.memory_space<vmem>>, %arg1: memref<32x128xf32, #tpu.memory_space<vmem>>, %arg2: memref<7x4x32xf32, #tpu.memory_space<vmem>>) attributes {dimension_semantics = [], scalar_prefetch = 0 : i64, scratch_operands = 0 : i64, tpu.core_type = #tpu.core_type<tc>} {
    %c0 = arith.constant 0 : index
    %c0_0 = arith.constant 0 : index
    %0 = vector.load %arg1[%c0, %c0_0] : memref<32x128xf32, #tpu.memory_space<vmem>>, vector<32x128xf32>
    %cst = arith.constant 0.000000e+00 : f32
    %1 = vector.broadcast %cst : f32 to vector<4x32xf32>
    %cst_1 = arith.constant 0.000000e+00 : f32
    %2 = vector.broadcast %cst_1 : f32 to vector<4x32xf32>
    %c0_i32 = arith.constant 0 : i32
    %3 = arith.index_cast %c0_i32 : i32 to index
    %c0_2 = arith.constant 0 : index
    %c0_3 = arith.constant 0 : index
    %4 = vector.load %arg0[%3, %c0_2, %c0_3] : memref<7x4x128xf32, #tpu.memory_space<vmem>>, vector<1x4x128xf32>
    %5 = vector.shape_cast %4 : vector<1x4x128xf32> to vector<4x128xf32>
    %cst_4 = arith.constant dense<0.000000e+00> : vector<4x128xf32>
    %6 = tpu.matmul %1, %0, %cst_4 {dimension_numbers = #tpu.dot_dimension_numbers<[1], [0], [0], [1], [0, 0, 1, 1], [], []>} : vector<4x32xf32>, vector<32x128xf32>, vector<4x128xf32> -> vector<4x128xf32>
    %7 = arith.addf %5, %6 : vector<4x128xf32>
    %cst_5 = arith.constant 5.000000e-01 : f32
    %8 = vector.broadcast %cst_5 : f32 to vector<4x128xf32>
    %9 = arith.mulf %8, %7 : vector<4x128xf32>
    %10 = math.tanh %9 : vector<4x128xf32>
    %cst_6 = arith.constant 5.000000e-01 : f32
    %11 = vector.broadcast %cst_6 : f32 to vector<4x128xf32>
    %12 = arith.mulf %11, %10 : vector<4x128xf32>
    %cst_7 = arith.constant 5.000000e-01 : f32
    %13 = vector.broadcast %cst_7 : f32 to vector<4x128xf32>
    %14 = arith.addf %12, %13 : vector<4x128xf32>
    %15 = math.tanh %7 : vector<4x128xf32>
    %16 = vector.extract_strided_slice %14 {offsets = [0, 0], sizes = [4, 32], strides = [1, 1]} : vector<4x128xf32> to vector<4x32xf32>
    %17 = vector.extract_strided_slice %14 {offsets = [0, 32], sizes = [4, 32], strides = [1, 1]} : vector<4x128xf32> to vector<4x32xf32>
    %18 = vector.extract_strided_slice %15 {offsets = [0, 64], sizes = [4, 32], strides = [1, 1]} : vector<4x128xf32> to vector<4x32xf32>
    %19 = vector.extract_strided_slice %14 {offsets = [0, 96], sizes = [4, 32], strides = [1, 1]} : vector<4x128xf32> to vector<4x32xf32>
    %20 = arith.mulf %17, %2 : vector<4x32xf32>
    %21 = arith.mulf %16, %18 : vector<4x32xf32>
    %22 = arith.addf %20, %21 : vector<4x32xf32>
    %23 = math.tanh %22 : vector<4x32xf32>
    %24 = arith.mulf %19, %23 : vector<4x32xf32>
    %25 = arith.index_cast %c0_i32 : i32 to index
    %c0_8 = arith.constant 0 : index
    %c0_9 = arith.constant 0 : index
    %26 = vector.load %arg2[%25, %c0_8, %c0_9] : memref<7x4x32xf32, #tpu.memory_space<vmem>>, vector<1x4x32xf32>
    %27 = vector.shape_cast %26 : vector<1x4x32xf32> to vector<4x32xf32>
    %28 = vector.shape_cast %24 : vector<4x32xf32> to vector<1x4x32xf32>
    tpu.vector_store %arg2[%25, %c0_8, %c0_9], %28 {strides = array<i32>} : memref<7x4x32xf32, #tpu.memory_space<vmem>>, vector<1x4x32xf32>,
    %c1_i32 = arith.constant 1 : i32
    %29 = arith.index_cast %c1_i32 : i32 to index
    %c0_10 = arith.constant 0 : index
    %c0_11 = arith.constant 0 : index
    %30 = vector.load %arg0[%29, %c0_10, %c0_11] : memref<7x4x128xf32, #tpu.memory_space<vmem>>, vector<1x4x128xf32>
    %31 = vector.shape_cast %30 : vector<1x4x128xf32> to vector<4x128xf32>
    %cst_12 = arith.constant dense<0.000000e+00> : vector<4x128xf32>
    %32 = tpu.matmul %24, %0, %cst_12 {dimension_numbers = #tpu.dot_dimension_numbers<[1], [0], [0], [1], [0, 0, 1, 1], [], []>} : vector<4x32xf32>, vector<32x128xf32>, vector<4x128xf32> -> vector<4x128xf32>
    %33 = arith.addf %31, %32 : vector<4x128xf32>
    %cst_13 = arith.constant 5.000000e-01 : f32
    %34 = vector.broadcast %cst_13 : f32 to vector<4x128xf32>
    %35 = arith.mulf %34, %33 : vector<4x128xf32>
    %36 = math.tanh %35 : vector<4x128xf32>
    %cst_14 = arith.constant 5.000000e-01 : f32
    %37 = vector.broadcast %cst_14 : f32 to vector<4x128xf32>
    %38 = arith.mulf %37, %36 : vector<4x128xf32>
    %cst_15 = arith.constant 5.000000e-01 : f32
    %39 = vector.broadcast %cst_15 : f32 to vector<4x128xf32>
    %40 = arith.addf %38, %39 : vector<4x128xf32>
    %41 = math.tanh %33 : vector<4x128xf32>
    %42 = vector.extract_strided_slice %40 {offsets = [0, 0], sizes = [4, 32], strides = [1, 1]} : vector<4x128xf32> to vector<4x32xf32>
    %43 = vector.extract_strided_slice %40 {offsets = [0, 32], sizes = [4, 32], strides = [1, 1]} : vector<4x128xf32> to vector<4x32xf32>
    %44 = vector.extract_strided_slice %41 {offsets = [0, 64], sizes = [4, 32], strides = [1, 1]} : vector<4x128xf32> to vector<4x32xf32>
    %45 = vector.extract_strided_slice %40 {offsets = [0, 96], sizes = [4, 32], strides = [1, 1]} : vector<4x128xf32> to vector<4x32xf32>
    %46 = arith.mulf %43, %22 : vector<4x32xf32>
    %47 = arith.mulf %42, %44 : vector<4x32xf32>
    %48 = arith.addf %46, %47 : vector<4x32xf32>
    %49 = math.tanh %48 : vector<4x32xf32>
    %50 = arith.mulf %45, %49 : vector<4x32xf32>
    %51 = arith.index_cast %c1_i32 : i32 to index
    %c0_16 = arith.constant 0 : index
    %c0_17 = arith.constant 0 : index
    %52 = vector.load %arg2[%51, %c0_16, %c0_17] : memref<7x4x32xf32, #tpu.memory_space<vmem>>, vector<1x4x32xf32>
    %53 = vector.shape_cast %52 : vector<1x4x32xf32> to vector<4x32xf32>
    %54 = vector.shape_cast %50 : vector<4x32xf32> to vector<1x4x32xf32>
    tpu.vector_store %arg2[%51, %c0_16, %c0_17], %54 {strides = array<i32>} : memref<7x4x32xf32, #tpu.memory_space<vmem>>, vector<1x4x32xf32>,
    %c2_i32 = arith.constant 2 : i32
    %55 = arith.index_cast %c2_i32 : i32 to index
    %c0_18 = arith.constant 0 : index
    %c0_19 = arith.constant 0 : index
    %56 = vector.load %arg0[%55, %c0_18, %c0_19] : memref<7x4x128xf32, #tpu.memory_space<vmem>>, vector<1x4x128xf32>
    %57 = vector.shape_cast %56 : vector<1x4x128xf32> to vector<4x128xf32>
    %cst_20 = arith.constant dense<0.000000e+00> : vector<4x128xf32>
    %58 = tpu.matmul %50, %0, %cst_20 {dimension_numbers = #tpu.dot_dimension_numbers<[1], [0], [0], [1], [0, 0, 1, 1], [], []>} : vector<4x32xf32>, vector<32x128xf32>, vector<4x128xf32> -> vector<4x128xf32>
    %59 = arith.addf %57, %58 : vector<4x128xf32>
    %cst_21 = arith.constant 5.000000e-01 : f32
    %60 = vector.broadcast %cst_21 : f32 to vector<4x128xf32>
    %61 = arith.mulf %60, %59 : vector<4x128xf32>
    %62 = math.tanh %61 : vector<4x128xf32>
    %cst_22 = arith.constant 5.000000e-01 : f32
    %63 = vector.broadcast %cst_22 : f32 to vector<4x128xf32>
    %64 = arith.mulf %63, %62 : vector<4x128xf32>
    %cst_23 = arith.constant 5.000000e-01 : f32
    %65 = vector.broadcast %cst_23 : f32 to vector<4x128xf32>
    %66 = arith.addf %64, %65 : vector<4x128xf32>
    %67 = math.tanh %59 : vector<4x128xf32>
    %68 = vector.extract_strided_slice %66 {offsets = [0, 0], sizes = [4, 32], strides = [1, 1]} : vector<4x128xf32> to vector<4x32xf32>
    %69 = vector.extract_strided_slice %66 {offsets = [0, 32], sizes = [4, 32], strides = [1, 1]} : vector<4x128xf32> to vector<4x32xf32>
    %70 = vector.extract_strided_slice %67 {offsets = [0, 64], sizes = [4, 32], strides = [1, 1]} : vector<4x128xf32> to vector<4x32xf32>
    %71 = vector.extract_strided_slice %66 {offsets = [0, 96], sizes = [4, 32], strides = [1, 1]} : vector<4x128xf32> to vector<4x32xf32>
    %72 = arith.mulf %69, %48 : vector<4x32xf32>
    %73 = arith.mulf %68, %70 : vector<4x32xf32>
    %74 = arith.addf %72, %73 : vector<4x32xf32>
    %75 = math.tanh %74 : vector<4x32xf32>
    %76 = arith.mulf %71, %75 : vector<4x32xf32>
    %77 = arith.index_cast %c2_i32 : i32 to index
    %c0_24 = arith.constant 0 : index
    %c0_25 = arith.constant 0 : index
    %78 = vector.load %arg2[%77, %c0_24, %c0_25] : memref<7x4x32xf32, #tpu.memory_space<vmem>>, vector<1x4x32xf32>
    %79 = vector.shape_cast %78 : vector<1x4x32xf32> to vector<4x32xf32>
    %80 = vector.shape_cast %76 : vector<4x32xf32> to vector<1x4x32xf32>
    tpu.vector_store %arg2[%77, %c0_24, %c0_25], %80 {strides = array<i32>} : memref<7x4x32xf32, #tpu.memory_space<vmem>>, vector<1x4x32xf32>,
    %c3_i32 = arith.constant 3 : i32
    %81 = arith.index_cast %c3_i32 : i32 to index
    %c0_26 = arith.constant 0 : index
    %c0_27 = arith.constant 0 : index
    %82 = vector.load %arg0[%81, %c0_26, %c0_27] : memref<7x4x128xf32, #tpu.memory_space<vmem>>, vector<1x4x128xf32>
    %83 = vector.shape_cast %82 : vector<1x4x128xf32> to vector<4x128xf32>
    %cst_28 = arith.constant dense<0.000000e+00> : vector<4x128xf32>
    %84 = tpu.matmul %76, %0, %cst_28 {dimension_numbers = #tpu.dot_dimension_numbers<[1], [0], [0], [1], [0, 0, 1, 1], [], []>} : vector<4x32xf32>, vector<32x128xf32>, vector<4x128xf32> -> vector<4x128xf32>
    %85 = arith.addf %83, %84 : vector<4x128xf32>
    %cst_29 = arith.constant 5.000000e-01 : f32
    %86 = vector.broadcast %cst_29 : f32 to vector<4x128xf32>
    %87 = arith.mulf %86, %85 : vector<4x128xf32>
    %88 = math.tanh %87 : vector<4x128xf32>
    %cst_30 = arith.constant 5.000000e-01 : f32
    %89 = vector.broadcast %cst_30 : f32 to vector<4x128xf32>
    %90 = arith.mulf %89, %88 : vector<4x128xf32>
    %cst_31 = arith.constant 5.000000e-01 : f32
    %91 = vector.broadcast %cst_31 : f32 to vector<4x128xf32>
    %92 = arith.addf %90, %91 : vector<4x128xf32>
    %93 = math.tanh %85 : vector<4x128xf32>
    %94 = vector.extract_strided_slice %92 {offsets = [0, 0], sizes = [4, 32], strides = [1, 1]} : vector<4x128xf32> to vector<4x32xf32>
    %95 = vector.extract_strided_slice %92 {offsets = [0, 32], sizes = [4, 32], strides = [1, 1]} : vector<4x128xf32> to vector<4x32xf32>
    %96 = vector.extract_strided_slice %93 {offsets = [0, 64], sizes = [4, 32], strides = [1, 1]} : vector<4x128xf32> to vector<4x32xf32>
    %97 = vector.extract_strided_slice %92 {offsets = [0, 96], sizes = [4, 32], strides = [1, 1]} : vector<4x128xf32> to vector<4x32xf32>
    %98 = arith.mulf %95, %74 : vector<4x32xf32>
    %99 = arith.mulf %94, %96 : vector<4x32xf32>
    %100 = arith.addf %98, %99 : vector<4x32xf32>
    %101 = math.tanh %100 : vector<4x32xf32>
    %102 = arith.mulf %97, %101 : vector<4x32xf32>
    %103 = arith.index_cast %c3_i32 : i32 to index
    %c0_32 = arith.constant 0 : index
    %c0_33 = arith.constant 0 : index
    %104 = vector.load %arg2[%103, %c0_32, %c0_33] : memref<7x4x32xf32, #tpu.memory_space<vmem>>, vector<1x4x32xf32>
    %105 = vector.shape_cast %104 : vector<1x4x32xf32> to vector<4x32xf32>
    %106 = vector.shape_cast %102 : vector<4x32xf32> to vector<1x4x32xf32>
    tpu.vector_store %arg2[%103, %c0_32, %c0_33], %106 {strides = array<i32>} : memref<7x4x32xf32, #tpu.memory_space<vmem>>, vector<1x4x32xf32>,
    %c4_i32 = arith.constant 4 : i32
    %107 = arith.index_cast %c4_i32 : i32 to index
    %c0_34 = arith.constant 0 : index
    %c0_35 = arith.constant 0 : index
    %108 = vector.load %arg0[%107, %c0_34, %c0_35] : memref<7x4x128xf32, #tpu.memory_space<vmem>>, vector<1x4x128xf32>
    %109 = vector.shape_cast %108 : vector<1x4x128xf32> to vector<4x128xf32>
    %cst_36 = arith.constant dense<0.000000e+00> : vector<4x128xf32>
    %110 = tpu.matmul %102, %0, %cst_36 {dimension_numbers = #tpu.dot_dimension_numbers<[1], [0], [0], [1], [0, 0, 1, 1], [], []>} : vector<4x32xf32>, vector<32x128xf32>, vector<4x128xf32> -> vector<4x128xf32>
    %111 = arith.addf %109, %110 : vector<4x128xf32>
    %cst_37 = arith.constant 5.000000e-01 : f32
    %112 = vector.broadcast %cst_37 : f32 to vector<4x128xf32>
    %113 = arith.mulf %112, %111 : vector<4x128xf32>
    %114 = math.tanh %113 : vector<4x128xf32>
    %cst_38 = arith.constant 5.000000e-01 : f32
    %115 = vector.broadcast %cst_38 : f32 to vector<4x128xf32>
    %116 = arith.mulf %115, %114 : vector<4x128xf32>
    %cst_39 = arith.constant 5.000000e-01 : f32
    %117 = vector.broadcast %cst_39 : f32 to vector<4x128xf32>
    %118 = arith.addf %116, %117 : vector<4x128xf32>
    %119 = math.tanh %111 : vector<4x128xf32>
    %120 = vector.extract_strided_slice %118 {offsets = [0, 0], sizes = [4, 32], strides = [1, 1]} : vector<4x128xf32> to vector<4x32xf32>
    %121 = vector.extract_strided_slice %118 {offsets = [0, 32], sizes = [4, 32], strides = [1, 1]} : vector<4x128xf32> to vector<4x32xf32>
    %122 = vector.extract_strided_slice %119 {offsets = [0, 64], sizes = [4, 32], strides = [1, 1]} : vector<4x128xf32> to vector<4x32xf32>
    %123 = vector.extract_strided_slice %118 {offsets = [0, 96], sizes = [4, 32], strides = [1, 1]} : vector<4x128xf32> to vector<4x32xf32>
    %124 = arith.mulf %121, %100 : vector<4x32xf32>
    %125 = arith.mulf %120, %122 : vector<4x32xf32>
    %126 = arith.addf %124, %125 : vector<4x32xf32>
    %127 = math.tanh %126 : vector<4x32xf32>
    %128 = arith.mulf %123, %127 : vector<4x32xf32>
    %129 = arith.index_cast %c4_i32 : i32 to index
    %c0_40 = arith.constant 0 : index
    %c0_41 = arith.constant 0 : index
    %130 = vector.load %arg2[%129, %c0_40, %c0_41] : memref<7x4x32xf32, #tpu.memory_space<vmem>>, vector<1x4x32xf32>
    %131 = vector.shape_cast %130 : vector<1x4x32xf32> to vector<4x32xf32>
    %132 = vector.shape_cast %128 : vector<4x32xf32> to vector<1x4x32xf32>
    tpu.vector_store %arg2[%129, %c0_40, %c0_41], %132 {strides = array<i32>} : memref<7x4x32xf32, #tpu.memory_space<vmem>>, vector<1x4x32xf32>,
    %c5_i32 = arith.constant 5 : i32
    %133 = arith.index_cast %c5_i32 : i32 to index
    %c0_42 = arith.constant 0 : index
    %c0_43 = arith.constant 0 : index
    %134 = vector.load %arg0[%133, %c0_42, %c0_43] : memref<7x4x128xf32, #tpu.memory_space<vmem>>, vector<1x4x128xf32>
    %135 = vector.shape_cast %134 : vector<1x4x128xf32> to vector<4x128xf32>
    %cst_44 = arith.constant dense<0.000000e+00> : vector<4x128xf32>
    %136 = tpu.matmul %128, %0, %cst_44 {dimension_numbers = #tpu.dot_dimension_numbers<[1], [0], [0], [1], [0, 0, 1, 1], [], []>} : vector<4x32xf32>, vector<32x128xf32>, vector<4x128xf32> -> vector<4x128xf32>
    %137 = arith.addf %135, %136 : vector<4x128xf32>
    %cst_45 = arith.constant 5.000000e-01 : f32
    %138 = vector.broadcast %cst_45 : f32 to vector<4x128xf32>
    %139 = arith.mulf %138, %137 : vector<4x128xf32>
    %140 = math.tanh %139 : vector<4x128xf32>
    %cst_46 = arith.constant 5.000000e-01 : f32
    %141 = vector.broadcast %cst_46 : f32 to vector<4x128xf32>
    %142 = arith.mulf %141, %140 : vector<4x128xf32>
    %cst_47 = arith.constant 5.000000e-01 : f32
    %143 = vector.broadcast %cst_47 : f32 to vector<4x128xf32>
    %144 = arith.addf %142, %143 : vector<4x128xf32>
    %145 = math.tanh %137 : vector<4x128xf32>
    %146 = vector.extract_strided_slice %144 {offsets = [0, 0], sizes = [4, 32], strides = [1, 1]} : vector<4x128xf32> to vector<4x32xf32>
    %147 = vector.extract_strided_slice %144 {offsets = [0, 32], sizes = [4, 32], strides = [1, 1]} : vector<4x128xf32> to vector<4x32xf32>
    %148 = vector.extract_strided_slice %145 {offsets = [0, 64], sizes = [4, 32], strides = [1, 1]} : vector<4x128xf32> to vector<4x32xf32>
    %149 = vector.extract_strided_slice %144 {offsets = [0, 96], sizes = [4, 32], strides = [1, 1]} : vector<4x128xf32> to vector<4x32xf32>
    %150 = arith.mulf %147, %126 : vector<4x32xf32>
    %151 = arith.mulf %146, %148 : vector<4x32xf32>
    %152 = arith.addf %150, %151 : vector<4x32xf32>
    %153 = math.tanh %152 : vector<4x32xf32>
    %154 = arith.mulf %149, %153 : vector<4x32xf32>
    %155 = arith.index_cast %c5_i32 : i32 to index
    %c0_48 = arith.constant 0 : index
    %c0_49 = arith.constant 0 : index
    %156 = vector.load %arg2[%155, %c0_48, %c0_49] : memref<7x4x32xf32, #tpu.memory_space<vmem>>, vector<1x4x32xf32>
    %157 = vector.shape_cast %156 : vector<1x4x32xf32> to vector<4x32xf32>
    %158 = vector.shape_cast %154 : vector<4x32xf32> to vector<1x4x32xf32>
    tpu.vector_store %arg2[%155, %c0_48, %c0_49], %158 {strides = array<i32>} : memref<7x4x32xf32, #tpu.memory_space<vmem>>, vector<1x4x32xf32>,
    %c6_i32 = arith.constant 6 : i32
    %159 = arith.index_cast %c6_i32 : i32 to index
    %c0_50 = arith.constant 0 : index
    %c0_51 = arith.constant 0 : index
    %160 = vector.load %arg0[%159, %c0_50, %c0_51] : memref<7x4x128xf32, #tpu.memory_space<vmem>>, vector<1x4x128xf32>
    %161 = vector.shape_cast %160 : vector<1x4x128xf32> to vector<4x128xf32>
    %cst_52 = arith.constant dense<0.000000e+00> : vector<4x128xf32>
    %162 = tpu.matmul %154, %0, %cst_52 {dimension_numbers = #tpu.dot_dimension_numbers<[1], [0], [0], [1], [0, 0, 1, 1], [], []>} : vector<4x32xf32>, vector<32x128xf32>, vector<4x128xf32> -> vector<4x128xf32>
    %163 = arith.addf %161, %162 : vector<4x128xf32>
    %cst_53 = arith.constant 5.000000e-01 : f32
    %164 = vector.broadcast %cst_53 : f32 to vector<4x128xf32>
    %165 = arith.mulf %164, %163 : vector<4x128xf32>
    %166 = math.tanh %165 : vector<4x128xf32>
    %cst_54 = arith.constant 5.000000e-01 : f32
    %167 = vector.broadcast %cst_54 : f32 to vector<4x128xf32>
    %168 = arith.mulf %167, %166 : vector<4x128xf32>
    %cst_55 = arith.constant 5.000000e-01 : f32
    %169 = vector.broadcast %cst_55 : f32 to vector<4x128xf32>
    %170 = arith.addf %168, %169 : vector<4x128xf32>
    %171 = math.tanh %163 : vector<4x128xf32>
    %172 = vector.extract_strided_slice %170 {offsets = [0, 0], sizes = [4, 32], strides = [1, 1]} : vector<4x128xf32> to vector<4x32xf32>
    %173 = vector.extract_strided_slice %170 {offsets = [0, 32], sizes = [4, 32], strides = [1, 1]} : vector<4x128xf32> to vector<4x32xf32>
    %174 = vector.extract_strided_slice %171 {offsets = [0, 64], sizes = [4, 32], strides = [1, 1]} : vector<4x128xf32> to vector<4x32xf32>
    %175 = vector.extract_strided_slice %170 {offsets = [0, 96], sizes = [4, 32], strides = [1, 1]} : vector<4x128xf32> to vector<4x32xf32>
    %176 = arith.mulf %173, %152 : vector<4x32xf32>
    %177 = arith.mulf %172, %174 : vector<4x32xf32>
    %178 = arith.addf %176, %177 : vector<4x32xf32>
    %179 = math.tanh %178 : vector<4x32xf32>
    %180 = arith.mulf %175, %179 : vector<4x32xf32>
    %181 = arith.index_cast %c6_i32 : i32 to index
    %c0_56 = arith.constant 0 : index
    %c0_57 = arith.constant 0 : index
    %182 = vector.load %arg2[%181, %c0_56, %c0_57] : memref<7x4x32xf32, #tpu.memory_space<vmem>>, vector<1x4x32xf32>
    %183 = vector.shape_cast %182 : vector<1x4x32xf32> to vector<4x32xf32>
    %184 = vector.shape_cast %180 : vector<4x32xf32> to vector<1x4x32xf32>
    tpu.vector_store %arg2[%181, %c0_56, %c0_57], %184 {strides = array<i32>} : memref<7x4x32xf32, #tpu.memory_space<vmem>>, vector<1x4x32xf32>,
    %c7_i32 = arith.constant 7 : i32
    return
  }
}

module attributes {stable_mosaic.version = 11 : i64} {
  func.func @_matmul_bias_kernel(%arg0: i32, %arg1: memref<28x16xbf16, #tpu.memory_space<vmem>>, %arg2: memref<16x128xbf16, #tpu.memory_space<vmem>>, %arg3: memref<1x128xf32, #tpu.memory_space<vmem>>, %arg4: memref<28x128xf32, #tpu.memory_space<vmem>>) attributes {dimension_semantics = [#tpu.dimension_semantics<parallel>], iteration_bounds = array<i64: 1>, scalar_prefetch = 0 : i64, scratch_operands = 0 : i64, tpu.core_type = #tpu.core_type<tc>, window_params = [{transform_indices = @transform_0, window_bounds = array<i64: 28, 16>}, {pipeline_mode = #tpu.pipeline_mode<synchronous>, transform_indices = @transform_1, window_bounds = array<i64: 16, 128>}, {pipeline_mode = #tpu.pipeline_mode<synchronous>, transform_indices = @transform_2, window_bounds = array<i64: 1, 128>}, {transform_indices = @transform_3, window_bounds = array<i64: 28, 128>}]} {
    %c0 = arith.constant 0 : index
    %c0_0 = arith.constant 0 : index
    %0 = vector.load %arg1[%c0, %c0_0] : memref<28x16xbf16, #tpu.memory_space<vmem>>, vector<28x16xbf16>
    %c0_1 = arith.constant 0 : index
    %c0_2 = arith.constant 0 : index
    %1 = vector.load %arg2[%c0_1, %c0_2] : memref<16x128xbf16, #tpu.memory_space<vmem>>, vector<16x128xbf16>
    %cst = arith.constant dense<0.000000e+00> : vector<28x128xf32>
    %2 = tpu.matmul %0, %1, %cst {dimension_numbers = #tpu.dot_dimension_numbers<[1], [0], [0], [1], [0, 0, 1, 1], [], []>} : vector<28x16xbf16>, vector<16x128xbf16>, vector<28x128xf32> -> vector<28x128xf32>
    %c0_3 = arith.constant 0 : index
    %c0_4 = arith.constant 0 : index
    %3 = vector.load %arg3[%c0_3, %c0_4] : memref<1x128xf32, #tpu.memory_space<vmem>>, vector<1x128xf32>
    %4 = vector.broadcast %3 : vector<1x128xf32> to vector<28x128xf32>
    %5 = arith.addf %2, %4 : vector<28x128xf32>
    %c0_5 = arith.constant 0 : index
    %c0_6 = arith.constant 0 : index
    %6 = vector.load %arg4[%c0_5, %c0_6] : memref<28x128xf32, #tpu.memory_space<vmem>>, vector<28x128xf32>
    tpu.vector_store %arg4[%c0_5, %c0_6], %5 {strides = array<i32>} : memref<28x128xf32, #tpu.memory_space<vmem>>, vector<28x128xf32>,
    return
  }
  func.func @transform_0(%arg0: i32) -> (i32, i32) {
    %c0_i32 = arith.constant 0 : i32
    %c0_i32_0 = arith.constant 0 : i32
    return %arg0, %c0_i32 : i32, i32
  }
  func.func @transform_1(%arg0: i32) -> (i32, i32) {
    %c0_i32 = arith.constant 0 : i32
    %c0_i32_0 = arith.constant 0 : i32
    %c0_i32_1 = arith.constant 0 : i32
    return %c0_i32, %c0_i32_0 : i32, i32
  }
  func.func @transform_2(%arg0: i32) -> (i32, i32) {
    %c0_i32 = arith.constant 0 : i32
    %c0_i32_0 = arith.constant 0 : i32
    %c0_i32_1 = arith.constant 0 : i32
    return %c0_i32, %c0_i32_0 : i32, i32
  }
  func.func @transform_3(%arg0: i32) -> (i32, i32) {
    %c0_i32 = arith.constant 0 : i32
    %c0_i32_0 = arith.constant 0 : i32
    return %arg0, %c0_i32 : i32, i32
  }
}

module attributes {stable_mosaic.version = 11 : i64} {
  func.func @_matmul_bias_kernel(%arg0: i32, %arg1: memref<64x320xbf16, #tpu.memory_space<vmem>>, %arg2: memref<320x128xbf16, #tpu.memory_space<vmem>>, %arg3: memref<1x128xf32, #tpu.memory_space<vmem>>, %arg4: memref<64x128xf32, #tpu.memory_space<vmem>>) attributes {dimension_semantics = [#tpu.dimension_semantics<parallel>], iteration_bounds = array<i64: 1>, scalar_prefetch = 0 : i64, scratch_operands = 0 : i64, tpu.core_type = #tpu.core_type<tc>, window_params = [{transform_indices = @transform_0, window_bounds = array<i64: 64, 320>}, {pipeline_mode = #tpu.pipeline_mode<synchronous>, transform_indices = @transform_1, window_bounds = array<i64: 320, 128>}, {pipeline_mode = #tpu.pipeline_mode<synchronous>, transform_indices = @transform_2, window_bounds = array<i64: 1, 128>}, {transform_indices = @transform_3, window_bounds = array<i64: 64, 128>}]} {
    %c0 = arith.constant 0 : index
    %c0_0 = arith.constant 0 : index
    %0 = vector.load %arg1[%c0, %c0_0] : memref<64x320xbf16, #tpu.memory_space<vmem>>, vector<64x320xbf16>
    %c0_1 = arith.constant 0 : index
    %c0_2 = arith.constant 0 : index
    %1 = vector.load %arg2[%c0_1, %c0_2] : memref<320x128xbf16, #tpu.memory_space<vmem>>, vector<320x128xbf16>
    %cst = arith.constant dense<0.000000e+00> : vector<64x128xf32>
    %2 = tpu.matmul %0, %1, %cst {dimension_numbers = #tpu.dot_dimension_numbers<[1], [0], [0], [1], [0, 0, 1, 1], [], []>} : vector<64x320xbf16>, vector<320x128xbf16>, vector<64x128xf32> -> vector<64x128xf32>
    %c0_3 = arith.constant 0 : index
    %c0_4 = arith.constant 0 : index
    %3 = vector.load %arg3[%c0_3, %c0_4] : memref<1x128xf32, #tpu.memory_space<vmem>>, vector<1x128xf32>
    %4 = vector.broadcast %3 : vector<1x128xf32> to vector<64x128xf32>
    %5 = arith.addf %2, %4 : vector<64x128xf32>
    %c0_5 = arith.constant 0 : index
    %c0_6 = arith.constant 0 : index
    %6 = vector.load %arg4[%c0_5, %c0_6] : memref<64x128xf32, #tpu.memory_space<vmem>>, vector<64x128xf32>
    tpu.vector_store %arg4[%c0_5, %c0_6], %5 {strides = array<i32>} : memref<64x128xf32, #tpu.memory_space<vmem>>, vector<64x128xf32>,
    return
  }
  func.func @transform_0(%arg0: i32) -> (i32, i32) {
    %c0_i32 = arith.constant 0 : i32
    %c0_i32_0 = arith.constant 0 : i32
    return %arg0, %c0_i32 : i32, i32
  }
  func.func @transform_1(%arg0: i32) -> (i32, i32) {
    %c0_i32 = arith.constant 0 : i32
    %c0_i32_0 = arith.constant 0 : i32
    %c0_i32_1 = arith.constant 0 : i32
    return %c0_i32, %c0_i32_0 : i32, i32
  }
  func.func @transform_2(%arg0: i32) -> (i32, i32) {
    %c0_i32 = arith.constant 0 : i32
    %c0_i32_0 = arith.constant 0 : i32
    %c0_i32_1 = arith.constant 0 : i32
    return %c0_i32, %c0_i32_0 : i32, i32
  }
  func.func @transform_3(%arg0: i32) -> (i32, i32) {
    %c0_i32 = arith.constant 0 : i32
    %c0_i32_0 = arith.constant 0 : i32
    return %arg0, %c0_i32 : i32, i32
  }
}

module attributes {stable_mosaic.version = 11 : i64} {
  func.func @_matmul_bias_kernel(%arg0: i32, %arg1: memref<80x160xbf16, #tpu.memory_space<vmem>>, %arg2: memref<160x128xbf16, #tpu.memory_space<vmem>>, %arg3: memref<1x128xf32, #tpu.memory_space<vmem>>, %arg4: memref<80x128xf32, #tpu.memory_space<vmem>>) attributes {dimension_semantics = [#tpu.dimension_semantics<parallel>], iteration_bounds = array<i64: 2>, scalar_prefetch = 0 : i64, scratch_operands = 0 : i64, tpu.core_type = #tpu.core_type<tc>, window_params = [{transform_indices = @transform_0, window_bounds = array<i64: 80, 160>}, {pipeline_mode = #tpu.pipeline_mode<synchronous>, transform_indices = @transform_1, window_bounds = array<i64: 160, 128>}, {pipeline_mode = #tpu.pipeline_mode<synchronous>, transform_indices = @transform_2, window_bounds = array<i64: 1, 128>}, {transform_indices = @transform_3, window_bounds = array<i64: 80, 128>}]} {
    %c0 = arith.constant 0 : index
    %c0_0 = arith.constant 0 : index
    %0 = vector.load %arg1[%c0, %c0_0] : memref<80x160xbf16, #tpu.memory_space<vmem>>, vector<80x160xbf16>
    %c0_1 = arith.constant 0 : index
    %c0_2 = arith.constant 0 : index
    %1 = vector.load %arg2[%c0_1, %c0_2] : memref<160x128xbf16, #tpu.memory_space<vmem>>, vector<160x128xbf16>
    %cst = arith.constant dense<0.000000e+00> : vector<80x128xf32>
    %2 = tpu.matmul %0, %1, %cst {dimension_numbers = #tpu.dot_dimension_numbers<[1], [0], [0], [1], [0, 0, 1, 1], [], []>} : vector<80x160xbf16>, vector<160x128xbf16>, vector<80x128xf32> -> vector<80x128xf32>
    %c0_3 = arith.constant 0 : index
    %c0_4 = arith.constant 0 : index
    %3 = vector.load %arg3[%c0_3, %c0_4] : memref<1x128xf32, #tpu.memory_space<vmem>>, vector<1x128xf32>
    %4 = vector.broadcast %3 : vector<1x128xf32> to vector<80x128xf32>
    %5 = arith.addf %2, %4 : vector<80x128xf32>
    %c0_5 = arith.constant 0 : index
    %c0_6 = arith.constant 0 : index
    %6 = vector.load %arg4[%c0_5, %c0_6] : memref<80x128xf32, #tpu.memory_space<vmem>>, vector<80x128xf32>
    tpu.vector_store %arg4[%c0_5, %c0_6], %5 {strides = array<i32>} : memref<80x128xf32, #tpu.memory_space<vmem>>, vector<80x128xf32>,
    return
  }
  func.func @transform_0(%arg0: i32) -> (i32, i32) {
    %c0_i32 = arith.constant 0 : i32
    %c0_i32_0 = arith.constant 0 : i32
    return %arg0, %c0_i32 : i32, i32
  }
  func.func @transform_1(%arg0: i32) -> (i32, i32) {
    %c0_i32 = arith.constant 0 : i32
    %c0_i32_0 = arith.constant 0 : i32
    %c0_i32_1 = arith.constant 0 : i32
    return %c0_i32, %c0_i32_0 : i32, i32
  }
  func.func @transform_2(%arg0: i32) -> (i32, i32) {
    %c0_i32 = arith.constant 0 : i32
    %c0_i32_0 = arith.constant 0 : i32
    %c0_i32_1 = arith.constant 0 : i32
    return %c0_i32, %c0_i32_0 : i32, i32
  }
  func.func @transform_3(%arg0: i32) -> (i32, i32) {
    %c0_i32 = arith.constant 0 : i32
    %c0_i32_0 = arith.constant 0 : i32
    return %arg0, %c0_i32 : i32, i32
  }
}

module attributes {stable_mosaic.version = 11 : i64} {
  func.func @kernel(%arg0: i32, %arg1: memref<18x9xf32, #tpu.memory_space<vmem>>, %arg2: memref<18x9xf32, #tpu.memory_space<vmem>>, %arg3: memref<18x9xf32, #tpu.memory_space<vmem>>, %arg4: memref<18x9xf32, #tpu.memory_space<vmem>>, %arg5: memref<9x128xf32, #tpu.memory_space<vmem>>, %arg6: memref<9x128xf32, #tpu.memory_space<vmem>>, %arg7: memref<18x9xf32, #tpu.memory_space<vmem>>, %arg8: memref<18x9xf32, #tpu.memory_space<vmem>>, %arg9: memref<18x128xf32, #tpu.memory_space<vmem>>) attributes {dimension_semantics = [#tpu.dimension_semantics<parallel>], iteration_bounds = array<i64: 1>, scalar_prefetch = 0 : i64, scratch_operands = 0 : i64, tpu.core_type = #tpu.core_type<tc>, window_params = [{transform_indices = @transform_0, window_bounds = array<i64: 18, 9>}, {transform_indices = @transform_1, window_bounds = array<i64: 18, 9>}, {transform_indices = @transform_2, window_bounds = array<i64: 18, 9>}, {transform_indices = @transform_3, window_bounds = array<i64: 18, 9>}, {pipeline_mode = #tpu.pipeline_mode<synchronous>, transform_indices = @transform_4, window_bounds = array<i64: 9, 128>}, {pipeline_mode = #tpu.pipeline_mode<synchronous>, transform_indices = @transform_5, window_bounds = array<i64: 9, 128>}, {transform_indices = @transform_6, window_bounds = array<i64: 18, 9>}, {transform_indices = @transform_7, window_bounds = array<i64: 18, 9>}, {transform_indices = @transform_8, window_bounds = array<i64: 18, 128>}]} {
    %c0 = arith.constant 0 : index
    %c0_0 = arith.constant 0 : index
    %0 = vector.load %arg1[%c0, %c0_0] : memref<18x9xf32, #tpu.memory_space<vmem>>, vector<18x9xf32>
    %c0_1 = arith.constant 0 : index
    %c0_2 = arith.constant 0 : index
    %1 = vector.load %arg2[%c0_1, %c0_2] : memref<18x9xf32, #tpu.memory_space<vmem>>, vector<18x9xf32>
    %c0_3 = arith.constant 0 : index
    %c0_4 = arith.constant 0 : index
    %2 = vector.load %arg3[%c0_3, %c0_4] : memref<18x9xf32, #tpu.memory_space<vmem>>, vector<18x9xf32>
    %c0_5 = arith.constant 0 : index
    %c0_6 = arith.constant 0 : index
    %3 = vector.load %arg4[%c0_5, %c0_6] : memref<18x9xf32, #tpu.memory_space<vmem>>, vector<18x9xf32>
    %4 = arith.mulf %2, %2 : vector<18x9xf32>
    %5 = arith.mulf %3, %3 : vector<18x9xf32>
    %6 = arith.addf %4, %5 : vector<18x9xf32>
    %cst = arith.constant 9.99999993E-9 : f32
    %7 = vector.broadcast %cst : f32 to vector<18x9xf32>
    %8 = arith.addf %6, %7 : vector<18x9xf32>
    %9 = math.rsqrt %8 : vector<18x9xf32>
    %10 = arith.mulf %8, %9 : vector<18x9xf32>
    %11 = arith.mulf %2, %9 : vector<18x9xf32>
    %12 = arith.mulf %3, %9 : vector<18x9xf32>
    %13 = arith.mulf %0, %0 : vector<18x9xf32>
    %14 = arith.mulf %1, %1 : vector<18x9xf32>
    %15 = arith.addf %13, %14 : vector<18x9xf32>
    %16 = math.sqrt %15 : vector<18x9xf32>
    %cst_7 = arith.constant 9.99999993E-9 : f32
    %17 = vector.broadcast %cst_7 : f32 to vector<18x9xf32>
    %18 = arith.addf %16, %17 : vector<18x9xf32>
    %19 = tpu.reciprocal %18 {approx = true} : vector<18x9xf32> -> vector<18x9xf32>
    %20 = arith.mulf %0, %19 : vector<18x9xf32>
    %21 = arith.mulf %1, %19 : vector<18x9xf32>
    %22 = arith.mulf %20, %20 : vector<18x9xf32>
    %23 = arith.mulf %21, %21 : vector<18x9xf32>
    %24 = arith.addf %22, %23 : vector<18x9xf32>
    %cst_8 = arith.constant 1.000000e-24 : f32
    %25 = vector.broadcast %cst_8 : f32 to vector<18x9xf32>
    %26 = arith.addf %24, %25 : vector<18x9xf32>
    %27 = math.rsqrt %26 : vector<18x9xf32>
    %28 = arith.mulf %20, %27 : vector<18x9xf32>
    %29 = arith.mulf %21, %27 : vector<18x9xf32>
    %30 = math.tanh %16 : vector<18x9xf32>
    %31 = arith.mulf %30, %10 : vector<18x9xf32>
    %32 = arith.mulf %11, %28 : vector<18x9xf32>
    %33 = arith.mulf %12, %29 : vector<18x9xf32>
    %34 = arith.subf %32, %33 : vector<18x9xf32>
    %35 = arith.mulf %31, %34 : vector<18x9xf32>
    %36 = arith.mulf %12, %28 : vector<18x9xf32>
    %37 = arith.mulf %11, %29 : vector<18x9xf32>
    %38 = arith.addf %36, %37 : vector<18x9xf32>
    %39 = arith.mulf %31, %38 : vector<18x9xf32>
    %c0_9 = arith.constant 0 : index
    %c0_10 = arith.constant 0 : index
    %40 = vector.load %arg7[%c0_9, %c0_10] : memref<18x9xf32, #tpu.memory_space<vmem>>, vector<18x9xf32>
    tpu.vector_store %arg7[%c0_9, %c0_10], %35 {strides = array<i32>} : memref<18x9xf32, #tpu.memory_space<vmem>>, vector<18x9xf32>,
    %c0_11 = arith.constant 0 : index
    %c0_12 = arith.constant 0 : index
    %41 = vector.load %arg8[%c0_11, %c0_12] : memref<18x9xf32, #tpu.memory_space<vmem>>, vector<18x9xf32>
    tpu.vector_store %arg8[%c0_11, %c0_12], %39 {strides = array<i32>} : memref<18x9xf32, #tpu.memory_space<vmem>>, vector<18x9xf32>,
    %c0_13 = arith.constant 0 : index
    %c0_14 = arith.constant 0 : index
    %42 = vector.load %arg5[%c0_13, %c0_14] : memref<9x128xf32, #tpu.memory_space<vmem>>, vector<9x128xf32>
    %cst_15 = arith.constant dense<0.000000e+00> : vector<18x128xf32>
    %43 = tpu.matmul %35, %42, %cst_15 {dimension_numbers = #tpu.dot_dimension_numbers<[1], [0], [0], [1], [0, 0, 1, 1], [], []>} : vector<18x9xf32>, vector<9x128xf32>, vector<18x128xf32> -> vector<18x128xf32>
    %c0_16 = arith.constant 0 : index
    %c0_17 = arith.constant 0 : index
    %44 = vector.load %arg6[%c0_16, %c0_17] : memref<9x128xf32, #tpu.memory_space<vmem>>, vector<9x128xf32>
    %cst_18 = arith.constant dense<0.000000e+00> : vector<18x128xf32>
    %45 = tpu.matmul %39, %44, %cst_18 {dimension_numbers = #tpu.dot_dimension_numbers<[1], [0], [0], [1], [0, 0, 1, 1], [], []>} : vector<18x9xf32>, vector<9x128xf32>, vector<18x128xf32> -> vector<18x128xf32>
    %46 = arith.addf %43, %45 : vector<18x128xf32>
    %c0_19 = arith.constant 0 : index
    %c0_20 = arith.constant 0 : index
    %47 = vector.load %arg9[%c0_19, %c0_20] : memref<18x128xf32, #tpu.memory_space<vmem>>, vector<18x128xf32>
    tpu.vector_store %arg9[%c0_19, %c0_20], %46 {strides = array<i32>} : memref<18x128xf32, #tpu.memory_space<vmem>>, vector<18x128xf32>,
    return
  }
  func.func @transform_0(%arg0: i32) -> (i32, i32) {
    %c0_i32 = arith.constant 0 : i32
    %c0_i32_0 = arith.constant 0 : i32
    return %arg0, %c0_i32 : i32, i32
  }
  func.func @transform_1(%arg0: i32) -> (i32, i32) {
    %c0_i32 = arith.constant 0 : i32
    %c0_i32_0 = arith.constant 0 : i32
    return %arg0, %c0_i32 : i32, i32
  }
  func.func @transform_2(%arg0: i32) -> (i32, i32) {
    %c0_i32 = arith.constant 0 : i32
    %c0_i32_0 = arith.constant 0 : i32
    return %arg0, %c0_i32 : i32, i32
  }
  func.func @transform_3(%arg0: i32) -> (i32, i32) {
    %c0_i32 = arith.constant 0 : i32
    %c0_i32_0 = arith.constant 0 : i32
    return %arg0, %c0_i32 : i32, i32
  }
  func.func @transform_4(%arg0: i32) -> (i32, i32) {
    %c0_i32 = arith.constant 0 : i32
    %c0_i32_0 = arith.constant 0 : i32
    %c0_i32_1 = arith.constant 0 : i32
    return %c0_i32, %c0_i32_0 : i32, i32
  }
  func.func @transform_5(%arg0: i32) -> (i32, i32) {
    %c0_i32 = arith.constant 0 : i32
    %c0_i32_0 = arith.constant 0 : i32
    %c0_i32_1 = arith.constant 0 : i32
    return %c0_i32, %c0_i32_0 : i32, i32
  }
  func.func @transform_6(%arg0: i32) -> (i32, i32) {
    %c0_i32 = arith.constant 0 : i32
    %c0_i32_0 = arith.constant 0 : i32
    return %arg0, %c0_i32 : i32, i32
  }
  func.func @transform_7(%arg0: i32) -> (i32, i32) {
    %c0_i32 = arith.constant 0 : i32
    %c0_i32_0 = arith.constant 0 : i32
    return %arg0, %c0_i32 : i32, i32
  }
  func.func @transform_8(%arg0: i32) -> (i32, i32) {
    %c0_i32 = arith.constant 0 : i32
    %c0_i32_0 = arith.constant 0 : i32
    return %arg0, %c0_i32 : i32, i32
  }
}

</mosaic_0001>

<llo_original>
// kernel: dccrn_forward.13
$region0: #{dccrn_forward.13}
  #allocation0 [shape = 'u32[]', space=smem, size = 0x4, offset = 0x4, fixed_abs, tag = 'smem constant byte address 0x4 - core index']
  #allocation1 [shape = 'u32[144,128]{1,0:T(1,128)}', space=vmem, size = 0x12000, scoped, tag = 'internal scratch']
  %s0 = inlined_call_operand.vmem [shape: bf16[72,16], index: 0, kind: input, shape index: {}]
  %s1 = inlined_call_operand.vmem [shape: bf16[16,128], index: 1, kind: input, shape index: {}]
  %s2 = inlined_call_operand.vmem [shape: f32[1,128], index: 2, kind: input, shape index: {}]
  %s3 = inlined_call_operand.vmem [shape: f32[72,128], index: 3, kind: output, shape index: {}]
  %s4 = sld [smem:[#allocation0]]
  $region22: #{dccrn_forward.13} parent=0
    _
  %s6 = ssub.s32 1, %s4
  %s7 = scalar_select 0, %s6, %s4
  // Predicated region
  $region2: #{dccrn_forward.13} parent=0 // pred_check
    _
  $region3: #{dccrn_forward.13} parent=0 // pred_check_branch
    %9 = sbr.rel (0) target = $region5
  $region4: #{dccrn_forward.13} parent=0 // pred_region
    _
  $region5: #{dccrn_forward.13} parent=0 // pred_fallthru
    _
  // Predicated region
  $region6: #{dccrn_forward.13} parent=0 // pred_check
    _
  $region7: #{dccrn_forward.13} parent=0 // pred_check_branch
    %11 = sbr.rel (0) target = $region9
  $region8: #{dccrn_forward.13} parent=0 // pred_region
    _
  $region9: #{dccrn_forward.13} parent=0 // pred_fallthru
    _
  // Predicated region
  $region10: #{dccrn_forward.13} parent=0 // pred_check
    _
  $region11: #{dccrn_forward.13} parent=0 // pred_check_branch
    %13 = sbr.rel (0) target = $region13
  $region12: #{dccrn_forward.13} parent=0 // pred_region
    _
  $region13: #{dccrn_forward.13} parent=0 // pred_fallthru
    _
  %v15 = vld [vmem:[%s0] sm:$0xf]
  %v16 = vld [vmem:[%s0 + $0x4] sm:$0xf]
  %v17 = vld [vmem:[%s0 + $0x8] sm:$0xf]
  %v18 = vld [vmem:[%s0 + $0xc] sm:$0xf]
  %v19 = vld [vmem:[%s0 + $0x10] sm:$0xf]
  %v20 = vld [vmem:[%s0 + $0x14] sm:$0xf]
  %v21 = vld [vmem:[%s0 + $0x18] sm:$0xf]
  %v22 = vld [vmem:[%s0 + $0x1c] sm:$0xf]
  %v23 = vld [vmem:[%s0 + $0x20] sm:$0xf]
  %v24 = vld [vmem:[%s1] sm:$0xf]
  %v25 = vld [vmem:[%s1 + $0x4] sm:$0xf]
  %v26 = vld [vmem:[%s2] sm:$0x1]
  %v28 = vlaneseq
  %v29 = vshrl.u32 %v28, 7
  %v30 = vsub.s32 0, %v29
  %v31 = vrot.slane %v26, %v30
  %v42 = vunpack.c.l.b16 %v15
  %v43 = vunpack.c.l.b16 %v16
  %v44 = vunpack.c.l.b16 %v17
  %v45 = vunpack.c.l.b16 %v18
  %v46 = vunpack.c.l.b16 %v19
  %v47 = vunpack.c.l.b16 %v20
  %v48 = vunpack.c.l.b16 %v21
  %v49 = vunpack.c.l.b16 %v22
  %v50 = vunpack.c.l.b16 %v23
  %v51 = vpack.c.b16 %v43, %v42
  %v52 = vpack.c.b16 %v45, %v44
  %v53 = vpack.c.b16 %v47, %v46
  %v54 = vpack.c.b16 %v49, %v48
  %v55 = vpack.c.b16 %v50, %v50
  %v58 = vunpack.c.l.b16 %v24
  %v59 = vunpack.c.l.b16 %v25
  %v60 = vpack.c.b16 %v59, %v58
  %vm62 = vcmask 130048
  %v64 = vsel %vm62, %v51, 0
  %v67 = vsel %vm62, %v52, 0
  %v70 = vsel %vm62, %v53, 0
  %v73 = vsel %vm62, %v54, 0
  %v76 = vsel %vm62, %v55, 0
  %78 = vmatprep.subr.bf16.mxu0 0
  %79 = vmatpush1.bf16.msra.mxu0 %v60
  %80 = vmatprep.subr.bf16.mxu0 0
  %81 = vmatpush1.bf16.msra.mxu0 0
  %82 = vmatprep.subr.bf16.mxu0 0
  %83 = vmatpush1.bf16.msra.mxu0 0
  %84 = vmatprep.subr.bf16.mxu0 0
  %85 = vmatpush1.bf16.msra.mxu0 0
  %86 = vmatprep.subr.bf16.mxu0 0
  %87 = vmatpush1.bf16.msra.mxu0 0
  %88 = vmatprep.subr.bf16.mxu0 0
  %89 = vmatpush1.bf16.msra.mxu0 0
  %90 = vmatprep.subr.bf16.mxu0 0
  %91 = vmatpush1.bf16.msra.mxu0 0
  %92 = vmatprep.subr.bf16.mxu0 0
  %93 = vmatpush1.bf16.msra.mxu0 0
  %94 = vmatprep.subr.bf16.mxu0 0
  %95 = vmatpush1.bf16.msra.mxu0 0
  %96 = vmatprep.subr.bf16.mxu0 0
  %97 = vmatpush1.bf16.msra.mxu0 0
  %98 = vmatprep.subr.bf16.mxu0 0
  %99 = vmatpush1.bf16.msra.mxu0 0
  %100 = vmatprep.subr.bf16.mxu0 0
  %101 = vmatpush1.bf16.msra.mxu0 0
  %102 = vmatprep.subr.bf16.mxu0 0
  %103 = vmatpush1.bf16.msra.mxu0 0
  %104 = vmatprep.subr.bf16.mxu0 0
  %105 = vmatpush1.bf16.msra.mxu0 0
  %106 = vmatprep.subr.bf16.mxu0 0
  %107 = vmatpush1.bf16.msra.mxu0 0
  %108 = vmatprep.subr.bf16.mxu0 0
  %109 = vmatpush1.bf16.msra.mxu0 0
  %110 = vmatprep.mubr.bf16.mxu0 0
  %111 = vmatmul.mubr.bf16.gmra.mrb[0].mxu0 %v64
  %v112 = vpop.f32.mrb[0].mxu0
  %v113 = vadd.f32 %v31, %v112
  %v114 = vpop.f32.mrb[0].mxu0
  %v115 = vpop.f32.mrb[0].mxu0
  %v116 = vadd.f32 %v31, %v115
  %v117 = vpop.f32.mrb[0].mxu0
  %118 = vmatprep.mubr.bf16.mxu0 0
  %119 = vmatmul.mubr.bf16.gmra.mrb[0].mxu0 %v67
  %v120 = vpop.f32.mrb[0].mxu0
  %v121 = vadd.f32 %v31, %v120
  %v122 = vpop.f32.mrb[0].mxu0
  %v123 = vpop.f32.mrb[0].mxu0
  %v124 = vadd.f32 %v31, %v123
  %v125 = vpop.f32.mrb[0].mxu0
  %126 = vmatprep.mubr.bf16.mxu0 0
  %127 = vmatmul.mubr.bf16.gmra.mrb[0].mxu0 %v70
  %v128 = vpop.f32.mrb[0].mxu0
  %v129 = vadd.f32 %v31, %v128
  %v130 = vpop.f32.mrb[0].mxu0
  %v131 = vpop.f32.mrb[0].mxu0
  %v132 = vadd.f32 %v31, %v131
  %v133 = vpop.f32.mrb[0].mxu0
  %134 = vmatprep.mubr.bf16.mxu0 0
  %135 = vmatmul.mubr.bf16.gmra.mrb[0].mxu0 %v73
  %v136 = vpop.f32.mrb[0].mxu0
  %v137 = vadd.f32 %v31, %v136
  %v138 = vpop.f32.mrb[0].mxu0
  %v139 = vpop.f32.mrb[0].mxu0
  %v140 = vadd.f32 %v31, %v139
  %v141 = vpop.f32.mrb[0].mxu0
  %142 = vmatprep.mubr.bf16.mxu0 0
  %143 = vmatmul.mubr.bf16.gmra.mrb[0].mxu0 %v76
  %v144 = vpop.f32.mrb[0].mxu0
  %v145 = vadd.f32 %v31, %v144
  %v146 = vpop.f32.mrb[0].mxu0
  %v147 = vpop.f32.mrb[0].mxu0
  %v148 = vpop.f32.mrb[0].mxu0
  %149 = vdwg.mxu0
  %150 = vst [vmem:[%s3] sm:$0xff] %v113
  %151 = vst [vmem:[%s3 + $0x8] sm:$0xff] %v116
  %152 = vst [vmem:[%s3 + $0x10] sm:$0xff] %v121
  %153 = vst [vmem:[%s3 + $0x18] sm:$0xff] %v124
  %154 = vst [vmem:[%s3 + $0x20] sm:$0xff] %v129
  %155 = vst [vmem:[%s3 + $0x28] sm:$0xff] %v132
  %156 = vst [vmem:[%s3 + $0x30] sm:$0xff] %v137
  %157 = vst [vmem:[%s3 + $0x38] sm:$0xff] %v140
  %158 = vst [vmem:[%s3 + $0x40] sm:$0xff] %v145
  // Predicated region
  $region14: #{dccrn_forward.13} parent=0 // pred_check
    _
  $region15: #{dccrn_forward.13} parent=0 // pred_check_branch
    %160 = sbr.rel (0) target = $region17
  $region16: #{dccrn_forward.13} parent=0 // pred_region
    _
  $region17: #{dccrn_forward.13} parent=0 // pred_fallthru
    _
  // Predicated region
  $region18: #{dccrn_forward.13} parent=0 // pred_check
    _
  $region19: #{dccrn_forward.13} parent=0 // pred_check_branch
    %162 = sbr.rel (0) target = $region21
  $region20: #{dccrn_forward.13} parent=0 // pred_region
    _
  $region21: #{dccrn_forward.13} parent=0 // pred_fallthru
    _

// kernel: dccrn_forward.14
$region0: #{dccrn_forward.14}
  #allocation0 [shape = 'u32[]', space=smem, size = 0x4, offset = 0x4, fixed_abs, tag = 'smem constant byte address 0x4 - core index']
  #allocation1 [shape = 'u32[144,128]{1,0:T(1,128)}', space=vmem, size = 0x12000, scoped, tag = 'internal scratch']
  %s0 = inlined_call_operand.vmem [shape: bf16[64,40], index: 0, kind: input, shape index: {}]
  %s1 = inlined_call_operand.vmem [shape: bf16[40,128], index: 1, kind: input, shape index: {}]
  %s2 = inlined_call_operand.vmem [shape: f32[1,128], index: 2, kind: input, shape index: {}]
  %s3 = inlined_call_operand.vmem [shape: f32[64,128], index: 3, kind: output, shape index: {}]
  %s4 = sld [smem:[#allocation0]]
  $region22: #{dccrn_forward.14} parent=0
    _
  %s6 = ssub.s32 1, %s4
  %s7 = scalar_select 0, %s6, %s4
  // Predicated region
  $region2: #{dccrn_forward.14} parent=0 // pred_check
    _
  $region3: #{dccrn_forward.14} parent=0 // pred_check_branch
    %9 = sbr.rel (0) target = $region5
  $region4: #{dccrn_forward.14} parent=0 // pred_region
    _
  $region5: #{dccrn_forward.14} parent=0 // pred_fallthru
    _
  // Predicated region
  $region6: #{dccrn_forward.14} parent=0 // pred_check
    _
  $region7: #{dccrn_forward.14} parent=0 // pred_check_branch
    %11 = sbr.rel (0) target = $region9
  $region8: #{dccrn_forward.14} parent=0 // pred_region
    _
  $region9: #{dccrn_forward.14} parent=0 // pred_fallthru
    _
  // Predicated region
  $region10: #{dccrn_forward.14} parent=0 // pred_check
    _
  $region11: #{dccrn_forward.14} parent=0 // pred_check_branch
    %13 = sbr.rel (0) target = $region13
  $region12: #{dccrn_forward.14} parent=0 // pred_region
    _
  $region13: #{dccrn_forward.14} parent=0 // pred_fallthru
    _
  %v15 = vld [vmem:[%s0] sm:$0xf]
  %v16 = vld [vmem:[%s0 + $0x4] sm:$0xf]
  %v17 = vld [vmem:[%s0 + $0x8] sm:$0xf]
  %v18 = vld [vmem:[%s0 + $0xc] sm:$0xf]
  %v19 = vld [vmem:[%s0 + $0x10] sm:$0xf]
  %v20 = vld [vmem:[%s0 + $0x14] sm:$0xf]
  %v21 = vld [vmem:[%s0 + $0x18] sm:$0xf]
  %v22 = vld [vmem:[%s0 + $0x1c] sm:$0xf]
  %v23 = vld [vmem:[%s1] sm:$0xf]
  %v24 = vld [vmem:[%s1 + $0x4] sm:$0xf]
  %v25 = vld [vmem:[%s1 + $0x8] sm:$0xf]
  %v26 = vld [vmem:[%s1 + $0xc] sm:$0xf]
  %v27 = vld [vmem:[%s1 + $0x10] sm:$0xf]
  %v28 = vld [vmem:[%s2] sm:$0x1]
  %v30 = vlaneseq
  %v31 = vshrl.u32 %v30, 7
  %v32 = vsub.s32 0, %v31
  %v33 = vrot.slane %v28, %v32
  %v43 = vunpack.c.l.b16 %v15
  %v44 = vunpack.c.l.b16 %v16
  %v45 = vunpack.c.l.b16 %v17
  %v46 = vunpack.c.l.b16 %v18
  %v47 = vunpack.c.l.b16 %v19
  %v48 = vunpack.c.l.b16 %v20
  %v49 = vunpack.c.l.b16 %v21
  %v50 = vunpack.c.l.b16 %v22
  %v51 = vpack.c.b16 %v44, %v43
  %v52 = vpack.c.b16 %v46, %v45
  %v53 = vpack.c.b16 %v48, %v47
  %v54 = vpack.c.b16 %v50, %v49
  %v60 = vunpack.c.l.b16 %v23
  %v61 = vunpack.c.l.b16 %v24
  %v62 = vunpack.c.l.b16 %v25
  %v63 = vunpack.c.l.b16 %v26
  %v64 = vunpack.c.l.b16 %v27
  %v65 = vpack.c.b16 %v61, %v60
  %v66 = vpack.c.b16 %v63, %v62
  %v67 = vpack.c.b16 %v64, %v64
  %vm70 = vcmask 326656
  %v72 = vsel %vm70, %v51, 0
  %v75 = vsel %vm70, %v52, 0
  %v78 = vsel %vm70, %v53, 0
  %v81 = vsel %vm70, %v54, 0
  %vm83 = vcmask 1043456
  %v85 = vsel %vm83, %v67, 0
  %87 = vmatprep.subr.bf16.mxu0 0
  %88 = vmatpush1.bf16.msra.mxu0 %v65
  %89 = vmatprep.subr.bf16.mxu0 0
  %90 = vmatpush1.bf16.msra.mxu0 %v66
  %91 = vmatprep.subr.bf16.mxu0 0
  %92 = vmatpush1.bf16.msra.mxu0 %v85
  %93 = vmatprep.subr.bf16.mxu0 0
  %94 = vmatpush1.bf16.msra.mxu0 0
  %95 = vmatprep.subr.bf16.mxu0 0
  %96 = vmatpush1.bf16.msra.mxu0 0
  %97 = vmatprep.subr.bf16.mxu0 0
  %98 = vmatpush1.bf16.msra.mxu0 0
  %99 = vmatprep.subr.bf16.mxu0 0
  %100 = vmatpush1.bf16.msra.mxu0 0
  %101 = vmatprep.subr.bf16.mxu0 0
  %102 = vmatpush1.bf16.msra.mxu0 0
  %103 = vmatprep.subr.bf16.mxu0 0
  %104 = vmatpush1.bf16.msra.mxu0 0
  %105 = vmatprep.subr.bf16.mxu0 0
  %106 = vmatpush1.bf16.msra.mxu0 0
  %107 = vmatprep.subr.bf16.mxu0 0
  %108 = vmatpush1.bf16.msra.mxu0 0
  %109 = vmatprep.subr.bf16.mxu0 0
  %110 = vmatpush1.bf16.msra.mxu0 0
  %111 = vmatprep.subr.bf16.mxu0 0
  %112 = vmatpush1.bf16.msra.mxu0 0
  %113 = vmatprep.subr.bf16.mxu0 0
  %114 = vmatpush1.bf16.msra.mxu0 0
  %115 = vmatprep.subr.bf16.mxu0 0
  %116 = vmatpush1.bf16.msra.mxu0 0
  %117 = vmatprep.subr.bf16.mxu0 0
  %118 = vmatpush1.bf16.msra.mxu0 0
  %119 = vmatprep.mubr.bf16.mxu0 0
  %120 = vmatmul.mubr.bf16.gmra.mrb[0].mxu0 %v72
  %v121 = vpop.f32.mrb[0].mxu0
  %v122 = vadd.f32 %v33, %v121
  %v123 = vpop.f32.mrb[0].mxu0
  %v124 = vpop.f32.mrb[0].mxu0
  %v125 = vadd.f32 %v33, %v124
  %v126 = vpop.f32.mrb[0].mxu0
  %127 = vmatprep.mubr.bf16.mxu0 0
  %128 = vmatmul.mubr.bf16.gmra.mrb[0].mxu0 %v75
  %v129 = vpop.f32.mrb[0].mxu0
  %v130 = vadd.f32 %v33, %v129
  %v131 = vpop.f32.mrb[0].mxu0
  %v132 = vpop.f32.mrb[0].mxu0
  %v133 = vadd.f32 %v33, %v132
  %v134 = vpop.f32.mrb[0].mxu0
  %135 = vmatprep.mubr.bf16.mxu0 0
  %136 = vmatmul.mubr.bf16.gmra.mrb[0].mxu0 %v78
  %v137 = vpop.f32.mrb[0].mxu0
  %v138 = vadd.f32 %v33, %v137
  %v139 = vpop.f32.mrb[0].mxu0
  %v140 = vpop.f32.mrb[0].mxu0
  %v141 = vadd.f32 %v33, %v140
  %v142 = vpop.f32.mrb[0].mxu0
  %143 = vmatprep.mubr.bf16.mxu0 0
  %144 = vmatmul.mubr.bf16.gmra.mrb[0].mxu0 %v81
  %v145 = vpop.f32.mrb[0].mxu0
  %v146 = vadd.f32 %v33, %v145
  %v147 = vpop.f32.mrb[0].mxu0
  %v148 = vpop.f32.mrb[0].mxu0
  %v149 = vadd.f32 %v33, %v148
  %v150 = vpop.f32.mrb[0].mxu0
  %151 = vdwg.mxu0
  %152 = vst [vmem:[%s3] sm:$0xff] %v122
  %153 = vst [vmem:[%s3 + $0x8] sm:$0xff] %v125
  %154 = vst [vmem:[%s3 + $0x10] sm:$0xff] %v130
  %155 = vst [vmem:[%s3 + $0x18] sm:$0xff] %v133
  %156 = vst [vmem:[%s3 + $0x20] sm:$0xff] %v138
  %157 = vst [vmem:[%s3 + $0x28] sm:$0xff] %v141
  %158 = vst [vmem:[%s3 + $0x30] sm:$0xff] %v146
  %159 = vst [vmem:[%s3 + $0x38] sm:$0xff] %v149
  // Predicated region
  $region14: #{dccrn_forward.14} parent=0 // pred_check
    _
  $region15: #{dccrn_forward.14} parent=0 // pred_check_branch
    %161 = sbr.rel (0) target = $region17
  $region16: #{dccrn_forward.14} parent=0 // pred_region
    _
  $region17: #{dccrn_forward.14} parent=0 // pred_fallthru
    _
  // Predicated region
  $region18: #{dccrn_forward.14} parent=0 // pred_check
    _
  $region19: #{dccrn_forward.14} parent=0 // pred_check_branch
    %163 = sbr.rel (0) target = $region21
  $region20: #{dccrn_forward.14} parent=0 // pred_region
    _
  $region21: #{dccrn_forward.14} parent=0 // pred_fallthru
    _

// kernel: dccrn_forward.15
$region0: #{dccrn_forward.15}
  #allocation0 [shape = 'u32[]', space=smem, size = 0x4, offset = 0x4, fixed_abs, tag = 'smem constant byte address 0x4 - core index']
  #allocation1 [shape = 'u32[144,128]{1,0:T(1,128)}', space=vmem, size = 0x12000, scoped, tag = 'internal scratch']
  #allocation2 [shape = 'f32[1,1]{1,0:T(1,128)S(1)}', space=vmem, size = 0x200, scoped, tag = 'scoped memory for dccrn_forward.15']
  %s0 = inlined_call_operand.vmem [shape: f32[8,64], index: 0, kind: input, shape index: {}]
  %s1 = inlined_call_operand.vmem [shape: f32[8,1], index: 1, kind: input, shape index: {}]
  %s2 = inlined_call_operand.vmem [shape: f32[8,1], index: 2, kind: input, shape index: {}]
  %s3 = inlined_call_operand.<no memory space> [shape: f32[1,1], index: 3, kind: input, shape index: {}]
  %s4 = inlined_call_operand.vmem [shape: f32[8,64], index: 4, kind: output, shape index: {}]
  %s5 = sld [smem:[#allocation0]]
  $region26: #{dccrn_forward.15} parent=0
    _
  %s7 = ssub.s32 1, %s5
  %s8 = scalar_select 0, %s7, %s5
  %v9 = vstv %s3
  %10 = vst [vmem:[#allocation2] sm:$0x1] %v9
  // Predicated region
  $region2: #{dccrn_forward.15} parent=0 // pred_check
    _
  $region3: #{dccrn_forward.15} parent=0 // pred_check_branch
    %12 = sbr.rel (0) target = $region5
  $region4: #{dccrn_forward.15} parent=0 // pred_region
    _
  $region5: #{dccrn_forward.15} parent=0 // pred_fallthru
    _
  // Predicated region
  $region6: #{dccrn_forward.15} parent=0 // pred_check
    _
  $region7: #{dccrn_forward.15} parent=0 // pred_check_branch
    %14 = sbr.rel (0) target = $region9
  $region8: #{dccrn_forward.15} parent=0 // pred_region
    _
  $region9: #{dccrn_forward.15} parent=0 // pred_fallthru
    _
  // Predicated region
  $region10: #{dccrn_forward.15} parent=0 // pred_check
    _
  $region11: #{dccrn_forward.15} parent=0 // pred_check_branch
    %16 = sbr.rel (0) target = $region13
  $region12: #{dccrn_forward.15} parent=0 // pred_region
    _
  $region13: #{dccrn_forward.15} parent=0 // pred_fallthru
    _
  // Predicated region
  $region14: #{dccrn_forward.15} parent=0 // pred_check
    _
  $region15: #{dccrn_forward.15} parent=0 // pred_check_branch
    %18 = sbr.rel (0) target = $region17
  $region16: #{dccrn_forward.15} parent=0 // pred_region
    _
  $region17: #{dccrn_forward.15} parent=0 // pred_fallthru
    _
  %v19 = vld [vmem:[%s0] sm:$0xff]
  %vm20 = vcmask 523264
  %v21 = vsel %vm20, %v19, 0.0
  %22 = vadd.xlane.f32.xlu0 %v21
  %v23 = vpop.xlane.xlu0 %22
  %v24 = vrcp.pop 64.0
  %v25 = vmul.f32 %v23, %v24
  %v26 = vsub.f32 %v19, %v25
  %v27 = vmul.f32 %v26, %v26
  %v28 = vsel %vm20, %v27, 0.0
  %29 = vadd.xlane.f32.xlu0 %v28
  %v30 = vpop.xlane.xlu0 %29
  %v31 = vmul.f32 %v30, %v24
  %v32 = vadd.f32 %v31, 1e-05
  %v33 = vrsqrt.pop %v32
  %v34 = vmul.f32 %v26, %v33
  %v35 = vld [vmem:[%s1] sm:$0xff]
  %37 = vset.pattern.permute.xlu0 0
  %38 = vperm.xlu0 %37, %v35
  %v39 = vpop.permute.xlu0 %38
  %v41 = vmul.f32 %v34, %v39
  %v42 = vld [vmem:[%s2] sm:$0xff]
  %44 = vset.pattern.permute.xlu0 0
  %45 = vperm.xlu0 %44, %v42
  %v46 = vpop.permute.xlu0 %45
  %v48 = vadd.f32 %v41, %v46
  %v49 = vld [vmem:[#allocation2] sm:$0x1]
  %s50 = vtos %v49
  %vm51 = vcmp.gt.f32.partialorder %v48, 0.0
  %v52 = vstv %s50
  %v53 = vmul.f32 %v52, %v48
  %v54 = vsel %vm51, %v48, %v53
  %55 = vst.msk [vmem:[%s4] sm:$0xff] %vm20, %v54
  // Predicated region
  $region18: #{dccrn_forward.15} parent=0 // pred_check
    _
  $region19: #{dccrn_forward.15} parent=0 // pred_check_branch
    %57 = sbr.rel (0) target = $region21
  $region20: #{dccrn_forward.15} parent=0 // pred_region
    _
  $region21: #{dccrn_forward.15} parent=0 // pred_fallthru
    _
  // Predicated region
  $region22: #{dccrn_forward.15} parent=0 // pred_check
    _
  $region23: #{dccrn_forward.15} parent=0 // pred_check_branch
    %59 = sbr.rel (0) target = $region25
  $region24: #{dccrn_forward.15} parent=0 // pred_region
    _
  $region25: #{dccrn_forward.15} parent=0 // pred_fallthru
    _

// kernel: dccrn_forward.17
$region0: #{dccrn_forward.17}
  #allocation0 [shape = 'u32[]', space=smem, size = 0x4, offset = 0x4, fixed_abs, tag = 'smem constant byte address 0x4 - core index']
  #allocation1 [shape = 'u32[144,128]{1,0:T(1,128)}', space=vmem, size = 0x12000, scoped, tag = 'internal scratch']
  #allocation2 [shape = 'f32[1,1]{1,0:T(1,128)S(1)}', space=vmem, size = 0x200, scoped, tag = 'scoped memory for dccrn_forward.17']
  %s0 = inlined_call_operand.vmem [shape: f32[16,28], index: 0, kind: input, shape index: {}]
  %s1 = inlined_call_operand.vmem [shape: f32[16,1], index: 1, kind: input, shape index: {}]
  %s2 = inlined_call_operand.vmem [shape: f32[16,1], index: 2, kind: input, shape index: {}]
  %s3 = inlined_call_operand.<no memory space> [shape: f32[1,1], index: 3, kind: input, shape index: {}]
  %s4 = inlined_call_operand.vmem [shape: f32[16,28], index: 4, kind: output, shape index: {}]
  %s5 = sld [smem:[#allocation0]]
  $region26: #{dccrn_forward.17} parent=0
    _
  %s7 = ssub.s32 1, %s5
  %s8 = scalar_select 0, %s7, %s5
  %v9 = vstv %s3
  %10 = vst [vmem:[#allocation2] sm:$0x1] %v9
  // Predicated region
  $region2: #{dccrn_forward.17} parent=0 // pred_check
    _
  $region3: #{dccrn_forward.17} parent=0 // pred_check_branch
    %12 = sbr.rel (0) target = $region5
  $region4: #{dccrn_forward.17} parent=0 // pred_region
    _
  $region5: #{dccrn_forward.17} parent=0 // pred_fallthru
    _
  // Predicated region
  $region6: #{dccrn_forward.17} parent=0 // pred_check
    _
  $region7: #{dccrn_forward.17} parent=0 // pred_check_branch
    %14 = sbr.rel (0) target = $region9
  $region8: #{dccrn_forward.17} parent=0 // pred_region
    _
  $region9: #{dccrn_forward.17} parent=0 // pred_fallthru
    _
  // Predicated region
  $region10: #{dccrn_forward.17} parent=0 // pred_check
    _
  $region11: #{dccrn_forward.17} parent=0 // pred_check_branch
    %16 = sbr.rel (0) target = $region13
  $region12: #{dccrn_forward.17} parent=0 // pred_region
    _
  $region13: #{dccrn_forward.17} parent=0 // pred_fallthru
    _
  // Predicated region
  $region14: #{dccrn_forward.17} parent=0 // pred_check
    _
  $region15: #{dccrn_forward.17} parent=0 // pred_check_branch
    %18 = sbr.rel (0) target = $region17
  $region16: #{dccrn_forward.17} parent=0 // pred_region
    _
  $region17: #{dccrn_forward.17} parent=0 // pred_fallthru
    _
  %v19 = vld [vmem:[%s0] sm:$0xff]
  %v20 = vld [vmem:[%s0 + $0x8] sm:$0xff]
  %vm21 = vcmask 228352
  %v22 = vsel %vm21, %v19, 0.0
  %23 = vadd.xlane.f32.xlu0 %v22
  %v24 = vpop.xlane.xlu0 %23
  %v25 = vsel %vm21, %v20, 0.0
  %26 = vadd.xlane.f32.xlu0 %v25
  %v27 = vpop.xlane.xlu0 %26
  %v28 = vrcp.pop 28.0
  %v29 = vmul.f32 %v24, %v28
  %v30 = vmul.f32 %v27, %v28
  %v31 = vsub.f32 %v19, %v29
  %v32 = vsub.f32 %v20, %v30
  %v33 = vmul.f32 %v31, %v31
  %v34 = vmul.f32 %v32, %v32
  %v35 = vsel %vm21, %v33, 0.0
  %36 = vadd.xlane.f32.xlu0 %v35
  %v37 = vpop.xlane.xlu0 %36
  %v38 = vsel %vm21, %v34, 0.0
  %39 = vadd.xlane.f32.xlu0 %v38
  %v40 = vpop.xlane.xlu0 %39
  %v41 = vmul.f32 %v37, %v28
  %v42 = vmul.f32 %v40, %v28
  %v43 = vadd.f32 %v41, 1e-05
  %v44 = vadd.f32 %v42, 1e-05
  %v45 = vrsqrt.pop %v43
  %v46 = vrsqrt.pop %v44
  %v47 = vmul.f32 %v31, %v45
  %v48 = vmul.f32 %v32, %v46
  %v49 = vld [vmem:[%s1] sm:$0xff]
  %v50 = vld [vmem:[%s1 + $0x8] sm:$0xff]
  %52 = vset.pattern.permute.xlu0 0
  %53 = vperm.xlu0 %52, %v49
  %v54 = vpop.permute.xlu0 %53
  %57 = vset.pattern.permute.xlu0 0
  %58 = vperm.xlu0 %57, %v50
  %v59 = vpop.permute.xlu0 %58
  %v61 = vmul.f32 %v47, %v54
  %v62 = vmul.f32 %v48, %v59
  %v63 = vld [vmem:[%s2] sm:$0xff]
  %v64 = vld [vmem:[%s2 + $0x8] sm:$0xff]
  %66 = vset.pattern.permute.xlu0 0
  %67 = vperm.xlu0 %66, %v63
  %v68 = vpop.permute.xlu0 %67
  %71 = vset.pattern.permute.xlu0 0
  %72 = vperm.xlu0 %71, %v64
  %v73 = vpop.permute.xlu0 %72
  %v75 = vadd.f32 %v61, %v68
  %v76 = vadd.f32 %v62, %v73
  %v77 = vld [vmem:[#allocation2] sm:$0x1]
  %s78 = vtos %v77
  %vm79 = vcmp.gt.f32.partialorder %v75, 0.0
  %vm80 = vcmp.gt.f32.partialorder %v76, 0.0
  %v81 = vstv %s78
  %v82 = vmul.f32 %v81, %v75
  %v83 = vmul.f32 %v81, %v76
  %v84 = vsel %vm79, %v75, %v82
  %v85 = vsel %vm80, %v76, %v83
  %86 = vst.msk [vmem:[%s4] sm:$0xff] %vm21, %v84
  %87 = vst.msk [vmem:[%s4 + $0x8] sm:$0xff] %vm21, %v85
  // Predicated region
  $region18: #{dccrn_forward.17} parent=0 // pred_check
    _
  $region19: #{dccrn_forward.17} parent=0 // pred_check_branch
    %89 = sbr.rel (0) target = $region21
  $region20: #{dccrn_forward.17} parent=0 // pred_region
    _
  $region21: #{dccrn_forward.17} parent=0 // pred_fallthru
    _
  // Predicated region
  $region22: #{dccrn_forward.17} parent=0 // pred_check
    _
  $region23: #{dccrn_forward.17} parent=0 // pred_check_branch
    %91 = sbr.rel (0) target = $region25
  $region24: #{dccrn_forward.17} parent=0 // pred_region
    _
  $region25: #{dccrn_forward.17} parent=0 // pred_fallthru
    _

// kernel: dccrn_forward.16
$region0: #{dccrn_forward.16}
  #allocation0 [shape = 'u32[]', space=smem, size = 0x4, offset = 0x4, fixed_abs, tag = 'smem constant byte address 0x4 - core index']
  #allocation1 [shape = 'u32[144,128]{1,0:T(1,128)}', space=vmem, size = 0x12000, scoped, tag = 'internal scratch']
  %s0 = inlined_call_operand.vmem [shape: bf16[28,80], index: 0, kind: input, shape index: {}]
  %s1 = inlined_call_operand.vmem [shape: bf16[80,128], index: 1, kind: input, shape index: {}]
  %s2 = inlined_call_operand.vmem [shape: f32[1,128], index: 2, kind: input, shape index: {}]
  %s3 = inlined_call_operand.vmem [shape: f32[28,128], index: 3, kind: output, shape index: {}]
  %s4 = sld [smem:[#allocation0]]
  $region22: #{dccrn_forward.16} parent=0
    _
  %s6 = ssub.s32 1, %s4
  %s7 = scalar_select 0, %s6, %s4
  // Predicated region
  $region2: #{dccrn_forward.16} parent=0 // pred_check
    _
  $region3: #{dccrn_forward.16} parent=0 // pred_check_branch
    %9 = sbr.rel (0) target = $region5
  $region4: #{dccrn_forward.16} parent=0 // pred_region
    _
  $region5: #{dccrn_forward.16} parent=0 // pred_fallthru
    _
  // Predicated region
  $region6: #{dccrn_forward.16} parent=0 // pred_check
    _
  $region7: #{dccrn_forward.16} parent=0 // pred_check_branch
    %11 = sbr.rel (0) target = $region9
  $region8: #{dccrn_forward.16} parent=0 // pred_region
    _
  $region9: #{dccrn_forward.16} parent=0 // pred_fallthru
    _
  // Predicated region
  $region10: #{dccrn_forward.16} parent=0 // pred_check
    _
  $region11: #{dccrn_forward.16} parent=0 // pred_check_branch
    %13 = sbr.rel (0) target = $region13
  $region12: #{dccrn_forward.16} parent=0 // pred_region
    _
  $region13: #{dccrn_forward.16} parent=0 // pred_fallthru
    _
  %v15 = vld [vmem:[%s0] sm:$0xf]
  %v16 = vld [vmem:[%s0 + $0x4] sm:$0xf]
  %v17 = vld [vmem:[%s0 + $0x8] sm:$0xf]
  %v18 = vld [vmem:[%s0 + $0xc] sm:$0x3]
  %v19 = vld [vmem:[%s1] sm:$0xf]
  %v20 = vld [vmem:[%s1 + $0x4] sm:$0xf]
  %v21 = vld [vmem:[%s1 + $0x8] sm:$0xf]
  %v22 = vld [vmem:[%s1 + $0xc] sm:$0xf]
  %v23 = vld [vmem:[%s1 + $0x10] sm:$0xf]
  %v24 = vld [vmem:[%s1 + $0x14] sm:$0xf]
  %v25 = vld [vmem:[%s1 + $0x18] sm:$0xf]
  %v26 = vld [vmem:[%s1 + $0x1c] sm:$0xf]
  %v27 = vld [vmem:[%s1 + $0x20] sm:$0xf]
  %v28 = vld [vmem:[%s1 + $0x24] sm:$0xf]
  %v29 = vld [vmem:[%s2] sm:$0x1]
  %v31 = vlaneseq
  %v32 = vshrl.u32 %v31, 7
  %v33 = vsub.s32 0, %v32
  %v34 = vrot.slane %v29, %v33
  %v40 = vunpack.c.l.b16 %v15
  %v41 = vunpack.c.l.b16 %v16
  %v42 = vunpack.c.l.b16 %v17
  %v43 = vunpack.c.l.b16 %v18
  %v44 = vpack.c.b16 %v41, %v40
  %v45 = vpack.c.b16 %v43, %v42
  %v56 = vunpack.c.l.b16 %v19
  %v57 = vunpack.c.l.b16 %v20
  %v58 = vunpack.c.l.b16 %v21
  %v59 = vunpack.c.l.b16 %v22
  %v60 = vunpack.c.l.b16 %v23
  %v61 = vunpack.c.l.b16 %v24
  %v62 = vunpack.c.l.b16 %v25
  %v63 = vunpack.c.l.b16 %v26
  %v64 = vunpack.c.l.b16 %v27
  %v65 = vunpack.c.l.b16 %v28
  %v66 = vpack.c.b16 %v57, %v56
  %v67 = vpack.c.b16 %v59, %v58
  %v68 = vpack.c.b16 %v61, %v60
  %v69 = vpack.c.b16 %v63, %v62
  %v70 = vpack.c.b16 %v65, %v64
  %vm76 = vcmask 654336
  %v78 = vsel %vm76, %v44, 0
  %v81 = vsel %vm76, %v45, 0
  %83 = vmatprep.subr.bf16.mxu0 0
  %84 = vmatpush1.bf16.msra.mxu0 %v66
  %85 = vmatprep.subr.bf16.mxu0 0
  %86 = vmatpush1.bf16.msra.mxu0 %v67
  %87 = vmatprep.subr.bf16.mxu0 0
  %88 = vmatpush1.bf16.msra.mxu0 %v68
  %89 = vmatprep.subr.bf16.mxu0 0
  %90 = vmatpush1.bf16.msra.mxu0 %v69
  %91 = vmatprep.subr.bf16.mxu0 0
  %92 = vmatpush1.bf16.msra.mxu0 %v70
  %93 = vmatprep.subr.bf16.mxu0 0
  %94 = vmatpush1.bf16.msra.mxu0 0
  %95 = vmatprep.subr.bf16.mxu0 0
  %96 = vmatpush1.bf16.msra.mxu0 0
  %97 = vmatprep.subr.bf16.mxu0 0
  %98 = vmatpush1.bf16.msra.mxu0 0
  %99 = vmatprep.subr.bf16.mxu0 0
  %100 = vmatpush1.bf16.msra.mxu0 0
  %101 = vmatprep.subr.bf16.mxu0 0
  %102 = vmatpush1.bf16.msra.mxu0 0
  %103 = vmatprep.subr.bf16.mxu0 0
  %104 = vmatpush1.bf16.msra.mxu0 0
  %105 = vmatprep.subr.bf16.mxu0 0
  %106 = vmatpush1.bf16.msra.mxu0 0
  %107 = vmatprep.subr.bf16.mxu0 0
  %108 = vmatpush1.bf16.msra.mxu0 0
  %109 = vmatprep.subr.bf16.mxu0 0
  %110 = vmatpush1.bf16.msra.mxu0 0
  %111 = vmatprep.subr.bf16.mxu0 0
  %112 = vmatpush1.bf16.msra.mxu0 0
  %113 = vmatprep.subr.bf16.mxu0 0
  %114 = vmatpush1.bf16.msra.mxu0 0
  %115 = vmatprep.mubr.bf16.mxu0 0
  %116 = vmatmul.mubr.bf16.gmra.mrb[0].mxu0 %v78
  %v117 = vpop.f32.mrb[0].mxu0
  %v118 = vadd.f32 %v34, %v117
  %v119 = vpop.f32.mrb[0].mxu0
  %v120 = vpop.f32.mrb[0].mxu0
  %v121 = vadd.f32 %v34, %v120
  %v122 = vpop.f32.mrb[0].mxu0
  %123 = vmatprep.mubr.bf16.mxu0 0
  %124 = vmatmul.mubr.bf16.gmra.mrb[0].mxu0 %v81
  %v125 = vpop.f32.mrb[0].mxu0
  %v126 = vadd.f32 %v34, %v125
  %v127 = vpop.f32.mrb[0].mxu0
  %v128 = vpop.f32.mrb[0].mxu0
  %v129 = vadd.f32 %v34, %v128
  %v130 = vpop.f32.mrb[0].mxu0
  %131 = vdwg.mxu0
  %132 = vst [vmem:[%s3] sm:$0xff] %v118
  %133 = vst [vmem:[%s3 + $0x8] sm:$0xff] %v121
  %134 = vst [vmem:[%s3 + $0x10] sm:$0xff] %v126
  %135 = vst [vmem:[%s3 + $0x18] sm:$0xf] %v129
  // Predicated region
  $region14: #{dccrn_forward.16} parent=0 // pred_check
    _
  $region15: #{dccrn_forward.16} parent=0 // pred_check_branch
    %137 = sbr.rel (0) target = $region17
  $region16: #{dccrn_forward.16} parent=0 // pred_region
    _
  $region17: #{dccrn_forward.16} parent=0 // pred_fallthru
    _
  // Predicated region
  $region18: #{dccrn_forward.16} parent=0 // pred_check
    _
  $region19: #{dccrn_forward.16} parent=0 // pred_check_branch
    %139 = sbr.rel (0) target = $region21
  $region20: #{dccrn_forward.16} parent=0 // pred_region
    _
  $region21: #{dccrn_forward.16} parent=0 // pred_fallthru
    _

// kernel: dccrn_forward.18
$region0: #{dccrn_forward.18}
  #allocation0 [shape = 'u32[]', space=smem, size = 0x4, offset = 0x4, fixed_abs, tag = 'smem constant byte address 0x4 - core index']
  #allocation1 [shape = 'u32[144,128]{1,0:T(1,128)}', space=vmem, size = 0x12000, scoped, tag = 'internal scratch']
  %s0 = inlined_call_operand.vmem [shape: bf16[28,16], index: 0, kind: input, shape index: {}]
  %s1 = inlined_call_operand.vmem [shape: bf16[16,128], index: 1, kind: input, shape index: {}]
  %s2 = inlined_call_operand.vmem [shape: f32[1,128], index: 2, kind: input, shape index: {}]
  %s3 = inlined_call_operand.vmem [shape: f32[28,128], index: 3, kind: output, shape index: {}]
  %s4 = sld [smem:[#allocation0]]
  $region22: #{dccrn_forward.18} parent=0
    _
  %s6 = ssub.s32 1, %s4
  %s7 = scalar_select 0, %s6, %s4
  // Predicated region
  $region2: #{dccrn_forward.18} parent=0 // pred_check
    _
  $region3: #{dccrn_forward.18} parent=0 // pred_check_branch
    %9 = sbr.rel (0) target = $region5
  $region4: #{dccrn_forward.18} parent=0 // pred_region
    _
  $region5: #{dccrn_forward.18} parent=0 // pred_fallthru
    _
  // Predicated region
  $region6: #{dccrn_forward.18} parent=0 // pred_check
    _
  $region7: #{dccrn_forward.18} parent=0 // pred_check_branch
    %11 = sbr.rel (0) target = $region9
  $region8: #{dccrn_forward.18} parent=0 // pred_region
    _
  $region9: #{dccrn_forward.18} parent=0 // pred_fallthru
    _
  // Predicated region
  $region10: #{dccrn_forward.18} parent=0 // pred_check
    _
  $region11: #{dccrn_forward.18} parent=0 // pred_check_branch
    %13 = sbr.rel (0) target = $region13
  $region12: #{dccrn_forward.18} parent=0 // pred_region
    _
  $region13: #{dccrn_forward.18} parent=0 // pred_fallthru
    _
  %v15 = vld [vmem:[%s0] sm:$0xf]
  %v16 = vld [vmem:[%s0 + $0x4] sm:$0xf]
  %v17 = vld [vmem:[%s0 + $0x8] sm:$0xf]
  %v18 = vld [vmem:[%s0 + $0xc] sm:$0x3]
  %v19 = vld [vmem:[%s1] sm:$0xf]
  %v20 = vld [vmem:[%s1 + $0x4] sm:$0xf]
  %v21 = vld [vmem:[%s2] sm:$0x1]
  %v23 = vlaneseq
  %v24 = vshrl.u32 %v23, 7
  %v25 = vsub.s32 0, %v24
  %v26 = vrot.slane %v21, %v25
  %v32 = vunpack.c.l.b16 %v15
  %v33 = vunpack.c.l.b16 %v16
  %v34 = vunpack.c.l.b16 %v17
  %v35 = vunpack.c.l.b16 %v18
  %v36 = vpack.c.b16 %v33, %v32
  %v37 = vpack.c.b16 %v35, %v34
  %v40 = vunpack.c.l.b16 %v19
  %v41 = vunpack.c.l.b16 %v20
  %v42 = vpack.c.b16 %v41, %v40
  %vm44 = vcmask 130048
  %v46 = vsel %vm44, %v36, 0
  %v49 = vsel %vm44, %v37, 0
  %51 = vmatprep.subr.bf16.mxu0 0
  %52 = vmatpush1.bf16.msra.mxu0 %v42
  %53 = vmatprep.subr.bf16.mxu0 0
  %54 = vmatpush1.bf16.msra.mxu0 0
  %55 = vmatprep.subr.bf16.mxu0 0
  %56 = vmatpush1.bf16.msra.mxu0 0
  %57 = vmatprep.subr.bf16.mxu0 0
  %58 = vmatpush1.bf16.msra.mxu0 0
  %59 = vmatprep.subr.bf16.mxu0 0
  %60 = vmatpush1.bf16.msra.mxu0 0
  %61 = vmatprep.subr.bf16.mxu0 0
  %62 = vmatpush1.bf16.msra.mxu0 0
  %63 = vmatprep.subr.bf16.mxu0 0
  %64 = vmatpush1.bf16.msra.mxu0 0
  %65 = vmatprep.subr.bf16.mxu0 0
  %66 = vmatpush1.bf16.msra.mxu0 0
  %67 = vmatprep.subr.bf16.mxu0 0
  %68 = vmatpush1.bf16.msra.mxu0 0
  %69 = vmatprep.subr.bf16.mxu0 0
  %70 = vmatpush1.bf16.msra.mxu0 0
  %71 = vmatprep.subr.bf16.mxu0 0
  %72 = vmatpush1.bf16.msra.mxu0 0
  %73 = vmatprep.subr.bf16.mxu0 0
  %74 = vmatpush1.bf16.msra.mxu0 0
  %75 = vmatprep.subr.bf16.mxu0 0
  %76 = vmatpush1.bf16.msra.mxu0 0
  %77 = vmatprep.subr.bf16.mxu0 0
  %78 = vmatpush1.bf16.msra.mxu0 0
  %79 = vmatprep.subr.bf16.mxu0 0
  %80 = vmatpush1.bf16.msra.mxu0 0
  %81 = vmatprep.subr.bf16.mxu0 0
  %82 = vmatpush1.bf16.msra.mxu0 0
  %83 = vmatprep.mubr.bf16.mxu0 0
  %84 = vmatmul.mubr.bf16.gmra.mrb[0].mxu0 %v46
  %v85 = vpop.f32.mrb[0].mxu0
  %v86 = vadd.f32 %v26, %v85
  %v87 = vpop.f32.mrb[0].mxu0
  %v88 = vpop.f32.mrb[0].mxu0
  %v89 = vadd.f32 %v26, %v88
  %v90 = vpop.f32.mrb[0].mxu0
  %91 = vmatprep.mubr.bf16.mxu0 0
  %92 = vmatmul.mubr.bf16.gmra.mrb[0].mxu0 %v49
  %v93 = vpop.f32.mrb[0].mxu0
  %v94 = vadd.f32 %v26, %v93
  %v95 = vpop.f32.mrb[0].mxu0
  %v96 = vpop.f32.mrb[0].mxu0
  %v97 = vadd.f32 %v26, %v96
  %v98 = vpop.f32.mrb[0].mxu0
  %99 = vdwg.mxu0
  %100 = vst [vmem:[%s3] sm:$0xff] %v86
  %101 = vst [vmem:[%s3 + $0x8] sm:$0xff] %v89
  %102 = vst [vmem:[%s3 + $0x10] sm:$0xff] %v94
  %103 = vst [vmem:[%s3 + $0x18] sm:$0xf] %v97
  // Predicated region
  $region14: #{dccrn_forward.18} parent=0 // pred_check
    _
  $region15: #{dccrn_forward.18} parent=0 // pred_check_branch
    %105 = sbr.rel (0) target = $region17
  $region16: #{dccrn_forward.18} parent=0 // pred_region
    _
  $region17: #{dccrn_forward.18} parent=0 // pred_fallthru
    _
  // Predicated region
  $region18: #{dccrn_forward.18} parent=0 // pred_check
    _
  $region19: #{dccrn_forward.18} parent=0 // pred_check_branch
    %107 = sbr.rel (0) target = $region21
  $region20: #{dccrn_forward.18} parent=0 // pred_region
    _
  $region21: #{dccrn_forward.18} parent=0 // pred_fallthru
    _

// kernel: dccrn_forward.19
$region0: #{dccrn_forward.19}
  #allocation0 [shape = 'u32[]', space=smem, size = 0x4, offset = 0x4, fixed_abs, tag = 'smem constant byte address 0x4 - core index']
  #allocation1 [shape = 'u32[144,128]{1,0:T(1,128)}', space=vmem, size = 0x12000, scoped, tag = 'internal scratch']
  %s0 = inlined_call_operand.vmem [shape: f32[7,4,128], index: 0, kind: input, shape index: {}]
  %s1 = inlined_call_operand.vmem [shape: f32[32,128], index: 1, kind: input, shape index: {}]
  %s2 = inlined_call_operand.vmem [shape: f32[7,4,32], index: 2, kind: output, shape index: {}]
  %s3 = sld [smem:[#allocation0]]
  $region18: #{dccrn_forward.19} parent=0
    _
  %s5 = ssub.s32 1, %s3
  %s6 = scalar_select 0, %s5, %s3
  // Predicated region
  $region2: #{dccrn_forward.19} parent=0 // pred_check
    _
  $region3: #{dccrn_forward.19} parent=0 // pred_check_branch
    %8 = sbr.rel (0) target = $region5
  $region4: #{dccrn_forward.19} parent=0 // pred_region
    _
  $region5: #{dccrn_forward.19} parent=0 // pred_fallthru
    _
  // Predicated region
  $region6: #{dccrn_forward.19} parent=0 // pred_check
    _
  $region7: #{dccrn_forward.19} parent=0 // pred_check_branch
    %10 = sbr.rel (0) target = $region9
  $region8: #{dccrn_forward.19} parent=0 // pred_region
    _
  $region9: #{dccrn_forward.19} parent=0 // pred_fallthru
    _
  %v11 = vld [vmem:[%s1] sm:$0xff]
  %v12 = vld [vmem:[%s1 + $0x8] sm:$0xff]
  %v13 = vld [vmem:[%s1 + $0x10] sm:$0xff]
  %v14 = vld [vmem:[%s1 + $0x18] sm:$0xff]
  %v15 = vld [vmem:[%s0] sm:$0xf]
  %vm16 = vcmask 261120
  %v18 = vsel %vm16, 0.0, 0
  %20 = vmatprep.subr.mxu0 0.0
  %21 = vmatpush1.msra.mxu0 %v11
  %22 = vmatprep.subr.mxu0 0.0
  %23 = vmatpush1.msra.mxu0 %v12
  %24 = vmatprep.subr.mxu0 0.0
  %25 = vmatpush1.msra.mxu0 %v13
  %26 = vmatprep.subr.mxu0 0.0
  %27 = vmatpush1.msra.mxu0 %v14
  %28 = vmatprep.subr.mxu0 0.0
  %29 = vmatpush1.msra.mxu0 0.0
  %30 = vmatprep.subr.mxu0 0.0
  %31 = vmatpush1.msra.mxu0 0.0
  %32 = vmatprep.subr.mxu0 0.0
  %33 = vmatpush1.msra.mxu0 0.0
  %34 = vmatprep.subr.mxu0 0.0
  %35 = vmatpush1.msra.mxu0 0.0
  %36 = vmatprep.subr.mxu0 0.0
  %37 = vmatpush1.msra.mxu0 0.0
  %38 = vmatprep.subr.mxu0 0.0
  %39 = vmatpush1.msra.mxu0 0.0
  %40 = vmatprep.subr.mxu0 0.0
  %41 = vmatpush1.msra.mxu0 0.0
  %42 = vmatprep.subr.mxu0 0.0
  %43 = vmatpush1.msra.mxu0 0.0
  %44 = vmatprep.subr.mxu0 0.0
  %45 = vmatpush1.msra.mxu0 0.0
  %46 = vmatprep.subr.mxu0 0.0
  %47 = vmatpush1.msra.mxu0 0.0
  %48 = vmatprep.subr.mxu0 0.0
  %49 = vmatpush1.msra.mxu0 0.0
  %50 = vmatprep.subr.mxu0 0.0
  %51 = vmatpush1.msra.mxu0 0.0
  %52 = vmatprep.subr.mxu0 0.0
  %53 = vmatpush1.msra.mxu0 0.0
  %54 = vmatprep.subr.mxu0 0.0
  %55 = vmatpush1.msra.mxu0 0.0
  %56 = vmatprep.subr.mxu0 0.0
  %57 = vmatpush1.msra.mxu0 0.0
  %58 = vmatprep.subr.mxu0 0.0
  %59 = vmatpush1.msra.mxu0 0.0
  %60 = vmatprep.subr.mxu0 0.0
  %61 = vmatpush1.msra.mxu0 0.0
  %62 = vmatprep.subr.mxu0 0.0
  %63 = vmatpush1.msra.mxu0 0.0
  %64 = vmatprep.subr.mxu0 0.0
  %65 = vmatpush1.msra.mxu0 0.0
  %66 = vmatprep.subr.mxu0 0.0
  %67 = vmatpush1.msra.mxu0 0.0
  %68 = vmatprep.subr.mxu0 0.0
  %69 = vmatpush1.msra.mxu0 0.0
  %70 = vmatprep.subr.mxu0 0.0
  %71 = vmatpush1.msra.mxu0 0.0
  %72 = vmatprep.subr.mxu0 0.0
  %73 = vmatpush1.msra.mxu0 0.0
  %74 = vmatprep.subr.mxu0 0.0
  %75 = vmatpush1.msra.mxu0 0.0
  %76 = vmatprep.subr.mxu0 0.0
  %77 = vmatpush1.msra.mxu0 0.0
  %78 = vmatprep.subr.mxu0 0.0
  %79 = vmatpush1.msra.mxu0 0.0
  %80 = vmatprep.subr.mxu0 0.0
  %81 = vmatpush1.msra.mxu0 0.0
  %82 = vmatprep.subr.mxu0 0.0
  %83 = vmatpush1.msra.mxu0 0.0
  %84 = vmatprep.mubr.f32.mxu0 0.0
  %85 = vmatmul.mubr.f32.gmra.mrb[0].mxu0 %v18
  %v86 = vpop.f32.mrb[0].mxu0
  %v87 = vadd.f32 0.0, %v86
  %v88 = vpop.f32.mrb[0].mxu0
  %89 = vdwg.mxu0
  %v90 = vadd.f32 %v15, %v87
  %v91 = vmul.f32 %v90, 0.5
  %v92 = vtanh.pop %v91
  %v93 = vmul.f32 %v92, 0.5
  %v94 = vadd.f32 %v93, 0.5
  %v95 = vtanh.pop %v90
  %v96 = vmul.f32 %v94, 0.0
  %98 = vrot.lane.b32.xlu0 %v95, 64
  %v99 = vpop.permute.xlu0 %98
  %v101 = vmul.f32 %v94, %v99
  %103 = vrot.lane.b32.xlu0 %v101, 32
  %v104 = vpop.permute.xlu0 %103
  %v106 = vadd.f32 %v96, %v104
  %v107 = vtanh.pop %v106
  %109 = vrot.lane.b32.xlu0 %v107, 64
  %v110 = vpop.permute.xlu0 %109
  %v112 = vmul.f32 %v94, %v110
  %114 = vrot.lane.b32.xlu0 %v112, 32
  %v115 = vpop.permute.xlu0 %114
  %vm117 = vcmask 257024
  %118 = vst.msk [vmem:[%s2] sm:$0xf] %vm117, %v115
  %s119 = scalar_lea.vmem %s0, 4
  %v120 = vld [vmem:[%s119] sm:$0xf]
  %v121 = vsel %vm16, %v115, 0
  %123 = vmatprep.subr.mxu0 0.0
  %124 = vmatpush1.msra.mxu0 %v11
  %125 = vmatprep.subr.mxu0 0.0
  %126 = vmatpush1.msra.mxu0 %v12
  %127 = vmatprep.subr.mxu0 0.0
  %128 = vmatpush1.msra.mxu0 %v13
  %129 = vmatprep.subr.mxu0 0.0
  %130 = vmatpush1.msra.mxu0 %v14
  %131 = vmatprep.subr.mxu0 0.0
  %132 = vmatpush1.msra.mxu0 0.0
  %133 = vmatprep.subr.mxu0 0.0
  %134 = vmatpush1.msra.mxu0 0.0
  %135 = vmatprep.subr.mxu0 0.0
  %136 = vmatpush1.msra.mxu0 0.0
  %137 = vmatprep.subr.mxu0 0.0
  %138 = vmatpush1.msra.mxu0 0.0
  %139 = vmatprep.subr.mxu0 0.0
  %140 = vmatpush1.msra.mxu0 0.0
  %141 = vmatprep.subr.mxu0 0.0
  %142 = vmatpush1.msra.mxu0 0.0
  %143 = vmatprep.subr.mxu0 0.0
  %144 = vmatpush1.msra.mxu0 0.0
  %145 = vmatprep.subr.mxu0 0.0
  %146 = vmatpush1.msra.mxu0 0.0
  %147 = vmatprep.subr.mxu0 0.0
  %148 = vmatpush1.msra.mxu0 0.0
  %149 = vmatprep.subr.mxu0 0.0
  %150 = vmatpush1.msra.mxu0 0.0
  %151 = vmatprep.subr.mxu0 0.0
  %152 = vmatpush1.msra.mxu0 0.0
  %153 = vmatprep.subr.mxu0 0.0
  %154 = vmatpush1.msra.mxu0 0.0
  %155 = vmatprep.subr.mxu0 0.0
  %156 = vmatpush1.msra.mxu0 0.0
  %157 = vmatprep.subr.mxu0 0.0
  %158 = vmatpush1.msra.mxu0 0.0
  %159 = vmatprep.subr.mxu0 0.0
  %160 = vmatpush1.msra.mxu0 0.0
  %161 = vmatprep.subr.mxu0 0.0
  %162 = vmatpush1.msra.mxu0 0.0
  %163 = vmatprep.subr.mxu0 0.0
  %164 = vmatpush1.msra.mxu0 0.0
  %165 = vmatprep.subr.mxu0 0.0
  %166 = vmatpush1.msra.mxu0 0.0
  %167 = vmatprep.subr.mxu0 0.0
  %168 = vmatpush1.msra.mxu0 0.0
  %169 = vmatprep.subr.mxu0 0.0
  %170 = vmatpush1.msra.mxu0 0.0
  %171 = vmatprep.subr.mxu0 0.0
  %172 = vmatpush1.msra.mxu0 0.0
  %173 = vmatprep.subr.mxu0 0.0
  %174 = vmatpush1.msra.mxu0 0.0
  %175 = vmatprep.subr.mxu0 0.0
  %176 = vmatpush1.msra.mxu0 0.0
  %177 = vmatprep.subr.mxu0 0.0
  %178 = vmatpush1.msra.mxu0 0.0
  %179 = vmatprep.subr.mxu0 0.0
  %180 = vmatpush1.msra.mxu0 0.0
  %181 = vmatprep.subr.mxu0 0.0
  %182 = vmatpush1.msra.mxu0 0.0
  %183 = vmatprep.subr.mxu0 0.0
  %184 = vmatpush1.msra.mxu0 0.0
  %185 = vmatprep.subr.mxu0 0.0
  %186 = vmatpush1.msra.mxu0 0.0
  %187 = vmatprep.mubr.f32.mxu0 0.0
  %188 = vmatmul.mubr.f32.gmra.mrb[0].mxu0 %v121
  %v189 = vpop.f32.mrb[0].mxu0
  %v190 = vadd.f32 0.0, %v189
  %v191 = vpop.f32.mrb[0].mxu0
  %192 = vdwg.mxu0
  %v193 = vadd.f32 %v120, %v190
  %v194 = vmul.f32 %v193, 0.5
  %v195 = vtanh.pop %v194
  %v196 = vmul.f32 %v195, 0.5
  %v197 = vadd.f32 %v196, 0.5
  %v198 = vtanh.pop %v193
  %v199 = vmul.f32 %v197, %v106
  %201 = vrot.lane.b32.xlu0 %v198, 64
  %v202 = vpop.permute.xlu0 %201
  %v204 = vmul.f32 %v197, %v202
  %206 = vrot.lane.b32.xlu0 %v204, 32
  %v207 = vpop.permute.xlu0 %206
  %v209 = vadd.f32 %v199, %v207
  %v210 = vtanh.pop %v209
  %212 = vrot.lane.b32.xlu0 %v210, 64
  %v213 = vpop.permute.xlu0 %212
  %v215 = vmul.f32 %v197, %v213
  %217 = vrot.lane.b32.xlu0 %v215, 32
  %v218 = vpop.permute.xlu0 %217
  %s220 = scalar_lea.vmem %s2, 4
  %221 = vst.msk [vmem:[%s220] sm:$0xf] %vm117, %v218
  %s222 = scalar_lea.vmem %s0, 8
  %v223 = vld [vmem:[%s222] sm:$0xf]
  %v224 = vsel %vm16, %v218, 0
  %226 = vmatprep.subr.mxu0 0.0
  %227 = vmatpush1.msra.mxu0 %v11
  %228 = vmatprep.subr.mxu0 0.0
  %229 = vmatpush1.msra.mxu0 %v12
  %230 = vmatprep.subr.mxu0 0.0
  %231 = vmatpush1.msra.mxu0 %v13
  %232 = vmatprep.subr.mxu0 0.0
  %233 = vmatpush1.msra.mxu0 %v14
  %234 = vmatprep.subr.mxu0 0.0
  %235 = vmatpush1.msra.mxu0 0.0
  %236 = vmatprep.subr.mxu0 0.0
  %237 = vmatpush1.msra.mxu0 0.0
  %238 = vmatprep.subr.mxu0 0.0
  %239 = vmatpush1.msra.mxu0 0.0
  %240 = vmatprep.subr.mxu0 0.0
  %241 = vmatpush1.msra.mxu0 0.0
  %242 = vmatprep.subr.mxu0 0.0
  %243 = vmatpush1.msra.mxu0 0.0
  %244 = vmatprep.subr.mxu0 0.0
  %245 = vmatpush1.msra.mxu0 0.0
  %246 = vmatprep.subr.mxu0 0.0
  %247 = vmatpush1.msra.mxu0 0.0
  %248 = vmatprep.subr.mxu0 0.0
  %249 = vmatpush1.msra.mxu0 0.0
  %250 = vmatprep.subr.mxu0 0.0
  %251 = vmatpush1.msra.mxu0 0.0
  %252 = vmatprep.subr.mxu0 0.0
  %253 = vmatpush1.msra.mxu0 0.0
  %254 = vmatprep.subr.mxu0 0.0
  %255 = vmatpush1.msra.mxu0 0.0
  %256 = vmatprep.subr.mxu0 0.0
  %257 = vmatpush1.msra.mxu0 0.0
  %258 = vmatprep.subr.mxu0 0.0
  %259 = vmatpush1.msra.mxu0 0.0
  %260 = vmatprep.subr.mxu0 0.0
  %261 = vmatpush1.msra.mxu0 0.0
  %262 = vmatprep.subr.mxu0 0.0
  %263 = vmatpush1.msra.mxu0 0.0
  %264 = vmatprep.subr.mxu0 0.0
  %265 = vmatpush1.msra.mxu0 0.0
  %266 = vmatprep.subr.mxu0 0.0
  %267 = vmatpush1.msra.mxu0 0.0
  %268 = vmatprep.subr.mxu0 0.0
  %269 = vmatpush1.msra.mxu0 0.0
  %270 = vmatprep.subr.mxu0 0.0
  %271 = vmatpush1.msra.mxu0 0.0
  %272 = vmatprep.subr.mxu0 0.0
  %273 = vmatpush1.msra.mxu0 0.0
  %274 = vmatprep.subr.mxu0 0.0
  %275 = vmatpush1.msra.mxu0 0.0
  %276 = vmatprep.subr.mxu0 0.0
  %277 = vmatpush1.msra.mxu0 0.0
  %278 = vmatprep.subr.mxu0 0.0
  %279 = vmatpush1.msra.mxu0 0.0
  %280 = vmatprep.subr.mxu0 0.0
  %281 = vmatpush1.msra.mxu0 0.0
  %282 = vmatprep.subr.mxu0 0.0
  %283 = vmatpush1.msra.mxu0 0.0
  %284 = vmatprep.subr.mxu0 0.0
  %285 = vmatpush1.msra.mxu0 0.0
  %286 = vmatprep.subr.mxu0 0.0
  %287 = vmatpush1.msra.mxu0 0.0
  %288 = vmatprep.subr.mxu0 0.0
  %289 = vmatpush1.msra.mxu0 0.0
  %290 = vmatprep.mubr.f32.mxu0 0.0
  %291 = vmatmul.mubr.f32.gmra.mrb[0].mxu0 %v224
  %v292 = vpop.f32.mrb[0].mxu0
  %v293 = vadd.f32 0.0, %v292
  %v294 = vpop.f32.mrb[0].mxu0
  %295 = vdwg.mxu0
  %v296 = vadd.f32 %v223, %v293
  %v297 = vmul.f32 %v296, 0.5
  %v298 = vtanh.pop %v297
  %v299 = vmul.f32 %v298, 0.5
  %v300 = vadd.f32 %v299, 0.5
  %v301 = vtanh.pop %v296
  %v302 = vmul.f32 %v300, %v209
  %304 = vrot.lane.b32.xlu0 %v301, 64
  %v305 = vpop.permute.xlu0 %304
  %v307 = vmul.f32 %v300, %v305
  %309 = vrot.lane.b32.xlu0 %v307, 32
  %v310 = vpop.permute.xlu0 %309
  %v312 = vadd.f32 %v302, %v310
  %v313 = vtanh.pop %v312
  %315 = vrot.lane.b32.xlu0 %v313, 64
  %v316 = vpop.permute.xlu0 %315
  %v318 = vmul.f32 %v300, %v316
  %320 = vrot.lane.b32.xlu0 %v318, 32
  %v321 = vpop.permute.xlu0 %320
  %s323 = scalar_lea.vmem %s2, 8
  %324 = vst.msk [vmem:[%s323] sm:$0xf] %vm117, %v321
  %s325 = scalar_lea.vmem %s0, 12
  %v326 = vld [vmem:[%s325] sm:$0xf]
  %v327 = vsel %vm16, %v321, 0
  %329 = vmatprep.subr.mxu0 0.0
  %330 = vmatpush1.msra.mxu0 %v11
  %331 = vmatprep.subr.mxu0 0.0
  %332 = vmatpush1.msra.mxu0 %v12
  %333 = vmatprep.subr.mxu0 0.0
  %334 = vmatpush1.msra.mxu0 %v13
  %335 = vmatprep.subr.mxu0 0.0
  %336 = vmatpush1.msra.mxu0 %v14
  %337 = vmatprep.subr.mxu0 0.0
  %338 = vmatpush1.msra.mxu0 0.0
  %339 = vmatprep.subr.mxu0 0.0
  %340 = vmatpush1.msra.mxu0 0.0
  %341 = vmatprep.subr.mxu0 0.0
  %342 = vmatpush1.msra.mxu0 0.0
  %343 = vmatprep.subr.mxu0 0.0
  %344 = vmatpush1.msra.mxu0 0.0
  %345 = vmatprep.subr.mxu0 0.0
  %346 = vmatpush1.msra.mxu0 0.0
  %347 = vmatprep.subr.mxu0 0.0
  %348 = vmatpush1.msra.mxu0 0.0
  %349 = vmatprep.subr.mxu0 0.0
  %350 = vmatpush1.msra.mxu0 0.0
  %351 = vmatprep.subr.mxu0 0.0
  %352 = vmatpush1.msra.mxu0 0.0
  %353 = vmatprep.subr.mxu0 0.0
  %354 = vmatpush1.msra.mxu0 0.0
  %355 = vmatprep.subr.mxu0 0.0
  %356 = vmatpush1.msra.mxu0 0.0
  %357 = vmatprep.subr.mxu0 0.0
  %358 = vmatpush1.msra.mxu0 0.0
  %359 = vmatprep.subr.mxu0 0.0
  %360 = vmatpush1.msra.mxu0 0.0
  %361 = vmatprep.subr.mxu0 0.0
  %362 = vmatpush1.msra.mxu0 0.0
  %363 = vmatprep.subr.mxu0 0.0
  %364 = vmatpush1.msra.mxu0 0.0
  %365 = vmatprep.subr.mxu0 0.0
  %366 = vmatpush1.msra.mxu0 0.0
  %367 = vmatprep.subr.mxu0 0.0
  %368 = vmatpush1.msra.mxu0 0.0
  %369 = vmatprep.subr.mxu0 0.0
  %370 = vmatpush1.msra.mxu0 0.0
  %371 = vmatprep.subr.mxu0 0.0
  %372 = vmatpush1.msra.mxu0 0.0
  %373 = vmatprep.subr.mxu0 0.0
  %374 = vmatpush1.msra.mxu0 0.0
  %375 = vmatprep.subr.mxu0 0.0
  %376 = vmatpush1.msra.mxu0 0.0
  %377 = vmatprep.subr.mxu0 0.0
  %378 = vmatpush1.msra.mxu0 0.0
  %379 = vmatprep.subr.mxu0 0.0
  %380 = vmatpush1.msra.mxu0 0.0
  %381 = vmatprep.subr.mxu0 0.0
  %382 = vmatpush1.msra.mxu0 0.0
  %383 = vmatprep.subr.mxu0 0.0
  %384 = vmatpush1.msra.mxu0 0.0
  %385 = vmatprep.subr.mxu0 0.0
  %386 = vmatpush1.msra.mxu0 0.0
  %387 = vmatprep.subr.mxu0 0.0
  %388 = vmatpush1.msra.mxu0 0.0
  %389 = vmatprep.subr.mxu0 0.0
  %390 = vmatpush1.msra.mxu0 0.0
  %391 = vmatprep.subr.mxu0 0.0
  %392 = vmatpush1.msra.mxu0 0.0
  %393 = vmatprep.mubr.f32.mxu0 0.0
  %394 = vmatmul.mubr.f32.gmra.mrb[0].mxu0 %v327
  %v395 = vpop.f32.mrb[0].mxu0
  %v396 = vadd.f32 0.0, %v395
  %v397 = vpop.f32.mrb[0].mxu0
  %398 = vdwg.mxu0
  %v399 = vadd.f32 %v326, %v396
  %v400 = vmul.f32 %v399, 0.5
  %v401 = vtanh.pop %v400
  %v402 = vmul.f32 %v401, 0.5
  %v403 = vadd.f32 %v402, 0.5
  %v404 = vtanh.pop %v399
  %v405 = vmul.f32 %v403, %v312
  %407 = vrot.lane.b32.xlu0 %v404, 64
  %v408 = vpop.permute.xlu0 %407
  %v410 = vmul.f32 %v403, %v408
  %412 = vrot.lane.b32.xlu0 %v410, 32
  %v413 = vpop.permute.xlu0 %412
  %v415 = vadd.f32 %v405, %v413
  %v416 = vtanh.pop %v415
  %418 = vrot.lane.b32.xlu0 %v416, 64
  %v419 = vpop.permute.xlu0 %418
  %v421 = vmul.f32 %v403, %v419
  %423 = vrot.lane.b32.xlu0 %v421, 32
  %v424 = vpop.permute.xlu0 %423
  %s426 = scalar_lea.vmem %s2, 12
  %427 = vst.msk [vmem:[%s426] sm:$0xf] %vm117, %v424
  %s428 = scalar_lea.vmem %s0, 16
  %v429 = vld [vmem:[%s428] sm:$0xf]
  %v430 = vsel %vm16, %v424, 0
  %432 = vmatprep.subr.mxu0 0.0
  %433 = vmatpush1.msra.mxu0 %v11
  %434 = vmatprep.subr.mxu0 0.0
  %435 = vmatpush1.msra.mxu0 %v12
  %436 = vmatprep.subr.mxu0 0.0
  %437 = vmatpush1.msra.mxu0 %v13
  %438 = vmatprep.subr.mxu0 0.0
  %439 = vmatpush1.msra.mxu0 %v14
  %440 = vmatprep.subr.mxu0 0.0
  %441 = vmatpush1.msra.mxu0 0.0
  %442 = vmatprep.subr.mxu0 0.0
  %443 = vmatpush1.msra.mxu0 0.0
  %444 = vmatprep.subr.mxu0 0.0
  %445 = vmatpush1.msra.mxu0 0.0
  %446 = vmatprep.subr.mxu0 0.0
  %447 = vmatpush1.msra.mxu0 0.0
  %448 = vmatprep.subr.mxu0 0.0
  %449 = vmatpush1.msra.mxu0 0.0
  %450 = vmatprep.subr.mxu0 0.0
  %451 = vmatpush1.msra.mxu0 0.0
  %452 = vmatprep.subr.mxu0 0.0
  %453 = vmatpush1.msra.mxu0 0.0
  %454 = vmatprep.subr.mxu0 0.0
  %455 = vmatpush1.msra.mxu0 0.0
  %456 = vmatprep.subr.mxu0 0.0
  %457 = vmatpush1.msra.mxu0 0.0
  %458 = vmatprep.subr.mxu0 0.0
  %459 = vmatpush1.msra.mxu0 0.0
  %460 = vmatprep.subr.mxu0 0.0
  %461 = vmatpush1.msra.mxu0 0.0
  %462 = vmatprep.subr.mxu0 0.0
  %463 = vmatpush1.msra.mxu0 0.0
  %464 = vmatprep.subr.mxu0 0.0
  %465 = vmatpush1.msra.mxu0 0.0
  %466 = vmatprep.subr.mxu0 0.0
  %467 = vmatpush1.msra.mxu0 0.0
  %468 = vmatprep.subr.mxu0 0.0
  %469 = vmatpush1.msra.mxu0 0.0
  %470 = vmatprep.subr.mxu0 0.0
  %471 = vmatpush1.msra.mxu0 0.0
  %472 = vmatprep.subr.mxu0 0.0
  %473 = vmatpush1.msra.mxu0 0.0
  %474 = vmatprep.subr.mxu0 0.0
  %475 = vmatpush1.msra.mxu0 0.0
  %476 = vmatprep.subr.mxu0 0.0
  %477 = vmatpush1.msra.mxu0 0.0
  %478 = vmatprep.subr.mxu0 0.0
  %479 = vmatpush1.msra.mxu0 0.0
  %480 = vmatprep.subr.mxu0 0.0
  %481 = vmatpush1.msra.mxu0 0.0
  %482 = vmatprep.subr.mxu0 0.0
  %483 = vmatpush1.msra.mxu0 0.0
  %484 = vmatprep.subr.mxu0 0.0
  %485 = vmatpush1.msra.mxu0 0.0
  %486 = vmatprep.subr.mxu0 0.0
  %487 = vmatpush1.msra.mxu0 0.0
  %488 = vmatprep.subr.mxu0 0.0
  %489 = vmatpush1.msra.mxu0 0.0
  %490 = vmatprep.subr.mxu0 0.0
  %491 = vmatpush1.msra.mxu0 0.0
  %492 = vmatprep.subr.mxu0 0.0
  %493 = vmatpush1.msra.mxu0 0.0
  %494 = vmatprep.subr.mxu0 0.0
  %495 = vmatpush1.msra.mxu0 0.0
  %496 = vmatprep.mubr.f32.mxu0 0.0
  %497 = vmatmul.mubr.f32.gmra.mrb[0].mxu0 %v430
  %v498 = vpop.f32.mrb[0].mxu0
  %v499 = vadd.f32 0.0, %v498
  %v500 = vpop.f32.mrb[0].mxu0
  %501 = vdwg.mxu0
  %v502 = vadd.f32 %v429, %v499
  %v503 = vmul.f32 %v502, 0.5
  %v504 = vtanh.pop %v503
  %v505 = vmul.f32 %v504, 0.5
  %v506 = vadd.f32 %v505, 0.5
  %v507 = vtanh.pop %v502
  %v508 = vmul.f32 %v506, %v415
  %510 = vrot.lane.b32.xlu0 %v507, 64
  %v511 = vpop.permute.xlu0 %510
  %v513 = vmul.f32 %v506, %v511
  %515 = vrot.lane.b32.xlu0 %v513, 32
  %v516 = vpop.permute.xlu0 %515
  %v518 = vadd.f32 %v508, %v516
  %v519 = vtanh.pop %v518
  %521 = vrot.lane.b32.xlu0 %v519, 64
  %v522 = vpop.permute.xlu0 %521
  %v524 = vmul.f32 %v506, %v522
  %526 = vrot.lane.b32.xlu0 %v524, 32
  %v527 = vpop.permute.xlu0 %526
  %s529 = scalar_lea.vmem %s2, 16
  %530 = vst.msk [vmem:[%s529] sm:$0xf] %vm117, %v527
  %s531 = scalar_lea.vmem %s0, 20
  %v532 = vld [vmem:[%s531] sm:$0xf]
  %v533 = vsel %vm16, %v527, 0
  %535 = vmatprep.subr.mxu0 0.0
  %536 = vmatpush1.msra.mxu0 %v11
  %537 = vmatprep.subr.mxu0 0.0
  %538 = vmatpush1.msra.mxu0 %v12
  %539 = vmatprep.subr.mxu0 0.0
  %540 = vmatpush1.msra.mxu0 %v13
  %541 = vmatprep.subr.mxu0 0.0
  %542 = vmatpush1.msra.mxu0 %v14
  %543 = vmatprep.subr.mxu0 0.0
  %544 = vmatpush1.msra.mxu0 0.0
  %545 = vmatprep.subr.mxu0 0.0
  %546 = vmatpush1.msra.mxu0 0.0
  %547 = vmatprep.subr.mxu0 0.0
  %548 = vmatpush1.msra.mxu0 0.0
  %549 = vmatprep.subr.mxu0 0.0
  %550 = vmatpush1.msra.mxu0 0.0
  %551 = vmatprep.subr.mxu0 0.0
  %552 = vmatpush1.msra.mxu0 0.0
  %553 = vmatprep.subr.mxu0 0.0
  %554 = vmatpush1.msra.mxu0 0.0
  %555 = vmatprep.subr.mxu0 0.0
  %556 = vmatpush1.msra.mxu0 0.0
  %557 = vmatprep.subr.mxu0 0.0
  %558 = vmatpush1.msra.mxu0 0.0
  %559 = vmatprep.subr.mxu0 0.0
  %560 = vmatpush1.msra.mxu0 0.0
  %561 = vmatprep.subr.mxu0 0.0
  %562 = vmatpush1.msra.mxu0 0.0
  %563 = vmatprep.subr.mxu0 0.0
  %564 = vmatpush1.msra.mxu0 0.0
  %565 = vmatprep.subr.mxu0 0.0
  %566 = vmatpush1.msra.mxu0 0.0
  %567 = vmatprep.subr.mxu0 0.0
  %568 = vmatpush1.msra.mxu0 0.0
  %569 = vmatprep.subr.mxu0 0.0
  %570 = vmatpush1.msra.mxu0 0.0
  %571 = vmatprep.subr.mxu0 0.0
  %572 = vmatpush1.msra.mxu0 0.0
  %573 = vmatprep.subr.mxu0 0.0
  %574 = vmatpush1.msra.mxu0 0.0
  %575 = vmatprep.subr.mxu0 0.0
  %576 = vmatpush1.msra.mxu0 0.0
  %577 = vmatprep.subr.mxu0 0.0
  %578 = vmatpush1.msra.mxu0 0.0
  %579 = vmatprep.subr.mxu0 0.0
  %580 = vmatpush1.msra.mxu0 0.0
  %581 = vmatprep.subr.mxu0 0.0
  %582 = vmatpush1.msra.mxu0 0.0
  %583 = vmatprep.subr.mxu0 0.0
  %584 = vmatpush1.msra.mxu0 0.0
  %585 = vmatprep.subr.mxu0 0.0
  %586 = vmatpush1.msra.mxu0 0.0
  %587 = vmatprep.subr.mxu0 0.0
  %588 = vmatpush1.msra.mxu0 0.0
  %589 = vmatprep.subr.mxu0 0.0
  %590 = vmatpush1.msra.mxu0 0.0
  %591 = vmatprep.subr.mxu0 0.0
  %592 = vmatpush1.msra.mxu0 0.0
  %593 = vmatprep.subr.mxu0 0.0
  %594 = vmatpush1.msra.mxu0 0.0
  %595 = vmatprep.subr.mxu0 0.0
  %596 = vmatpush1.msra.mxu0 0.0
  %597 = vmatprep.subr.mxu0 0.0
  %598 = vmatpush1.msra.mxu0 0.0
  %599 = vmatprep.mubr.f32.mxu0 0.0
  %600 = vmatmul.mubr.f32.gmra.mrb[0].mxu0 %v533
  %v601 = vpop.f32.mrb[0].mxu0
  %v602 = vadd.f32 0.0, %v601
  %v603 = vpop.f32.mrb[0].mxu0
  %604 = vdwg.mxu0
  %v605 = vadd.f32 %v532, %v602
  %v606 = vmul.f32 %v605, 0.5
  %v607 = vtanh.pop %v606
  %v608 = vmul.f32 %v607, 0.5
  %v609 = vadd.f32 %v608, 0.5
  %v610 = vtanh.pop %v605
  %v611 = vmul.f32 %v609, %v518
  %613 = vrot.lane.b32.xlu0 %v610, 64
  %v614 = vpop.permute.xlu0 %613
  %v616 = vmul.f32 %v609, %v614
  %618 = vrot.lane.b32.xlu0 %v616, 32
  %v619 = vpop.permute.xlu0 %618
  %v621 = vadd.f32 %v611, %v619
  %v622 = vtanh.pop %v621
  %624 = vrot.lane.b32.xlu0 %v622, 64
  %v625 = vpop.permute.xlu0 %624
  %v627 = vmul.f32 %v609, %v625
  %629 = vrot.lane.b32.xlu0 %v627, 32
  %v630 = vpop.permute.xlu0 %629
  %s632 = scalar_lea.vmem %s2, 20
  %633 = vst.msk [vmem:[%s632] sm:$0xf] %vm117, %v630
  %s634 = scalar_lea.vmem %s0, 24
  %v635 = vld [vmem:[%s634] sm:$0xf]
  %v636 = vsel %vm16, %v630, 0
  %638 = vmatprep.subr.mxu0 0.0
  %639 = vmatpush1.msra.mxu0 %v11
  %640 = vmatprep.subr.mxu0 0.0
  %641 = vmatpush1.msra.mxu0 %v12
  %642 = vmatprep.subr.mxu0 0.0
  %643 = vmatpush1.msra.mxu0 %v13
  %644 = vmatprep.subr.mxu0 0.0
  %645 = vmatpush1.msra.mxu0 %v14
  %646 = vmatprep.subr.mxu0 0.0
  %647 = vmatpush1.msra.mxu0 0.0
  %648 = vmatprep.subr.mxu0 0.0
  %649 = vmatpush1.msra.mxu0 0.0
  %650 = vmatprep.subr.mxu0 0.0
  %651 = vmatpush1.msra.mxu0 0.0
  %652 = vmatprep.subr.mxu0 0.0
  %653 = vmatpush1.msra.mxu0 0.0
  %654 = vmatprep.subr.mxu0 0.0
  %655 = vmatpush1.msra.mxu0 0.0
  %656 = vmatprep.subr.mxu0 0.0
  %657 = vmatpush1.msra.mxu0 0.0
  %658 = vmatprep.subr.mxu0 0.0
  %659 = vmatpush1.msra.mxu0 0.0
  %660 = vmatprep.subr.mxu0 0.0
  %661 = vmatpush1.msra.mxu0 0.0
  %662 = vmatprep.subr.mxu0 0.0
  %663 = vmatpush1.msra.mxu0 0.0
  %664 = vmatprep.subr.mxu0 0.0
  %665 = vmatpush1.msra.mxu0 0.0
  %666 = vmatprep.subr.mxu0 0.0
  %667 = vmatpush1.msra.mxu0 0.0
  %668 = vmatprep.subr.mxu0 0.0
  %669 = vmatpush1.msra.mxu0 0.0
  %670 = vmatprep.subr.mxu0 0.0
  %671 = vmatpush1.msra.mxu0 0.0
  %672 = vmatprep.subr.mxu0 0.0
  %673 = vmatpush1.msra.mxu0 0.0
  %674 = vmatprep.subr.mxu0 0.0
  %675 = vmatpush1.msra.mxu0 0.0
  %676 = vmatprep.subr.mxu0 0.0
  %677 = vmatpush1.msra.mxu0 0.0
  %678 = vmatprep.subr.mxu0 0.0
  %679 = vmatpush1.msra.mxu0 0.0
  %680 = vmatprep.subr.mxu0 0.0
  %681 = vmatpush1.msra.mxu0 0.0
  %682 = vmatprep.subr.mxu0 0.0
  %683 = vmatpush1.msra.mxu0 0.0
  %684 = vmatprep.subr.mxu0 0.0
  %685 = vmatpush1.msra.mxu0 0.0
  %686 = vmatprep.subr.mxu0 0.0
  %687 = vmatpush1.msra.mxu0 0.0
  %688 = vmatprep.subr.mxu0 0.0
  %689 = vmatpush1.msra.mxu0 0.0
  %690 = vmatprep.subr.mxu0 0.0
  %691 = vmatpush1.msra.mxu0 0.0
  %692 = vmatprep.subr.mxu0 0.0
  %693 = vmatpush1.msra.mxu0 0.0
  %694 = vmatprep.subr.mxu0 0.0
  %695 = vmatpush1.msra.mxu0 0.0
  %696 = vmatprep.subr.mxu0 0.0
  %697 = vmatpush1.msra.mxu0 0.0
  %698 = vmatprep.subr.mxu0 0.0
  %699 = vmatpush1.msra.mxu0 0.0
  %700 = vmatprep.subr.mxu0 0.0
  %701 = vmatpush1.msra.mxu0 0.0
  %702 = vmatprep.mubr.f32.mxu0 0.0
  %703 = vmatmul.mubr.f32.gmra.mrb[0].mxu0 %v636
  %v704 = vpop.f32.mrb[0].mxu0
  %v705 = vadd.f32 0.0, %v704
  %v706 = vpop.f32.mrb[0].mxu0
  %707 = vdwg.mxu0
  %v708 = vadd.f32 %v635, %v705
  %v709 = vmul.f32 %v708, 0.5
  %v710 = vtanh.pop %v709
  %v711 = vmul.f32 %v710, 0.5
  %v712 = vadd.f32 %v711, 0.5
  %v713 = vtanh.pop %v708
  %v714 = vmul.f32 %v712, %v621
  %716 = vrot.lane.b32.xlu0 %v713, 64
  %v717 = vpop.permute.xlu0 %716
  %v719 = vmul.f32 %v712, %v717
  %721 = vrot.lane.b32.xlu0 %v719, 32
  %v722 = vpop.permute.xlu0 %721
  %v724 = vadd.f32 %v714, %v722
  %v725 = vtanh.pop %v724
  %727 = vrot.lane.b32.xlu0 %v725, 64
  %v728 = vpop.permute.xlu0 %727
  %v730 = vmul.f32 %v712, %v728
  %732 = vrot.lane.b32.xlu0 %v730, 32
  %v733 = vpop.permute.xlu0 %732
  %s735 = scalar_lea.vmem %s2, 24
  %736 = vst.msk [vmem:[%s735] sm:$0xf] %vm117, %v733
  // Predicated region
  $region10: #{dccrn_forward.19} parent=0 // pred_check
    _
  $region11: #{dccrn_forward.19} parent=0 // pred_check_branch
    %738 = sbr.rel (0) target = $region13
  $region12: #{dccrn_forward.19} parent=0 // pred_region
    _
  $region13: #{dccrn_forward.19} parent=0 // pred_fallthru
    _
  // Predicated region
  $region14: #{dccrn_forward.19} parent=0 // pred_check
    _
  $region15: #{dccrn_forward.19} parent=0 // pred_check_branch
    %740 = sbr.rel (0) target = $region17
  $region16: #{dccrn_forward.19} parent=0 // pred_region
    _
  $region17: #{dccrn_forward.19} parent=0 // pred_fallthru
    _

// kernel: dccrn_forward.22
$region0: #{dccrn_forward.22}
  #allocation0 [shape = 'u32[]', space=smem, size = 0x4, offset = 0x4, fixed_abs, tag = 'smem constant byte address 0x4 - core index']
  #allocation1 [shape = 'u32[144,128]{1,0:T(1,128)}', space=vmem, size = 0x12000, scoped, tag = 'internal scratch']
  %s0 = inlined_call_operand.vmem [shape: bf16[64,320], index: 0, kind: input, shape index: {}]
  %s1 = inlined_call_operand.vmem [shape: bf16[320,128], index: 1, kind: input, shape index: {}]
  %s2 = inlined_call_operand.vmem [shape: f32[1,128], index: 2, kind: input, shape index: {}]
  %s3 = inlined_call_operand.vmem [shape: f32[64,128], index: 3, kind: output, shape index: {}]
  %s4 = sld [smem:[#allocation0]]
  $region22: #{dccrn_forward.22} parent=0
    _
  %s6 = ssub.s32 1, %s4
  %s7 = scalar_select 0, %s6, %s4
  // Predicated region
  $region2: #{dccrn_forward.22} parent=0 // pred_check
    _
  $region3: #{dccrn_forward.22} parent=0 // pred_check_branch
    %9 = sbr.rel (0) target = $region5
  $region4: #{dccrn_forward.22} parent=0 // pred_region
    _
  $region5: #{dccrn_forward.22} parent=0 // pred_fallthru
    _
  // Predicated region
  $region6: #{dccrn_forward.22} parent=0 // pred_check
    _
  $region7: #{dccrn_forward.22} parent=0 // pred_check_branch
    %11 = sbr.rel (0) target = $region9
  $region8: #{dccrn_forward.22} parent=0 // pred_region
    _
  $region9: #{dccrn_forward.22} parent=0 // pred_fallthru
    _
  // Predicated region
  $region10: #{dccrn_forward.22} parent=0 // pred_check
    _
  $region11: #{dccrn_forward.22} parent=0 // pred_check_branch
    %13 = sbr.rel (0) target = $region13
  $region12: #{dccrn_forward.22} parent=0 // pred_region
    _
  $region13: #{dccrn_forward.22} parent=0 // pred_fallthru
    _
  %v15 = vld [vmem:[%s0] sm:$0xff]
  %v16 = vld [vmem:[%s0 + $0x8] sm:$0xf]
  %v17 = vld [vmem:[%s0 + $0xc] sm:$0xff]
  %v18 = vld [vmem:[%s0 + $0x14] sm:$0xf]
  %v19 = vld [vmem:[%s0 + $0x18] sm:$0xff]
  %v20 = vld [vmem:[%s0 + $0x20] sm:$0xf]
  %v21 = vld [vmem:[%s0 + $0x24] sm:$0xff]
  %v22 = vld [vmem:[%s0 + $0x2c] sm:$0xf]
  %v23 = vld [vmem:[%s0 + $0x30] sm:$0xff]
  %v24 = vld [vmem:[%s0 + $0x38] sm:$0xf]
  %v25 = vld [vmem:[%s0 + $0x3c] sm:$0xff]
  %v26 = vld [vmem:[%s0 + $0x44] sm:$0xf]
  %v27 = vld [vmem:[%s0 + $0x48] sm:$0xff]
  %v28 = vld [vmem:[%s0 + $0x50] sm:$0xf]
  %v29 = vld [vmem:[%s0 + $0x54] sm:$0xff]
  %v30 = vld [vmem:[%s0 + $0x5c] sm:$0xf]
  %v31 = vld [vmem:[%s1] sm:$0xf]
  %v32 = vld [vmem:[%s1 + $0x4] sm:$0xf]
  %v33 = vld [vmem:[%s1 + $0x8] sm:$0xf]
  %v34 = vld [vmem:[%s1 + $0xc] sm:$0xf]
  %v35 = vld [vmem:[%s1 + $0x10] sm:$0xf]
  %v36 = vld [vmem:[%s1 + $0x14] sm:$0xf]
  %v37 = vld [vmem:[%s1 + $0x18] sm:$0xf]
  %v38 = vld [vmem:[%s1 + $0x1c] sm:$0xf]
  %v39 = vld [vmem:[%s1 + $0x20] sm:$0xf]
  %v40 = vld [vmem:[%s1 + $0x24] sm:$0xf]
  %v41 = vld [vmem:[%s1 + $0x28] sm:$0xf]
  %v42 = vld [vmem:[%s1 + $0x2c] sm:$0xf]
  %v43 = vld [vmem:[%s1 + $0x30] sm:$0xf]
  %v44 = vld [vmem:[%s1 + $0x34] sm:$0xf]
  %v45 = vld [vmem:[%s1 + $0x38] sm:$0xf]
  %v46 = vld [vmem:[%s1 + $0x3c] sm:$0xf]
  %v47 = vld [vmem:[%s1 + $0x40] sm:$0xf]
  %v48 = vld [vmem:[%s1 + $0x44] sm:$0xf]
  %v49 = vld [vmem:[%s1 + $0x48] sm:$0xf]
  %v50 = vld [vmem:[%s1 + $0x4c] sm:$0xf]
  %v51 = vld [vmem:[%s1 + $0x50] sm:$0xf]
  %v52 = vld [vmem:[%s1 + $0x54] sm:$0xf]
  %v53 = vld [vmem:[%s1 + $0x58] sm:$0xf]
  %v54 = vld [vmem:[%s1 + $0x5c] sm:$0xf]
  %v55 = vld [vmem:[%s1 + $0x60] sm:$0xf]
  %v56 = vld [vmem:[%s1 + $0x64] sm:$0xf]
  %v57 = vld [vmem:[%s1 + $0x68] sm:$0xf]
  %v58 = vld [vmem:[%s1 + $0x6c] sm:$0xf]
  %v59 = vld [vmem:[%s1 + $0x70] sm:$0xf]
  %v60 = vld [vmem:[%s1 + $0x74] sm:$0xf]
  %v61 = vld [vmem:[%s1 + $0x78] sm:$0xf]
  %v62 = vld [vmem:[%s1 + $0x7c] sm:$0xf]
  %v63 = vld [vmem:[%s1 + $0x80] sm:$0xf]
  %v64 = vld [vmem:[%s1 + $0x84] sm:$0xf]
  %v65 = vld [vmem:[%s1 + $0x88] sm:$0xf]
  %v66 = vld [vmem:[%s1 + $0x8c] sm:$0xf]
  %v67 = vld [vmem:[%s1 + $0x90] sm:$0xf]
  %v68 = vld [vmem:[%s1 + $0x94] sm:$0xf]
  %v69 = vld [vmem:[%s1 + $0x98] sm:$0xf]
  %v70 = vld [vmem:[%s1 + $0x9c] sm:$0xf]
  %v71 = vld [vmem:[%s2] sm:$0x1]
  %v73 = vlaneseq
  %v74 = vshrl.u32 %v73, 7
  %v75 = vsub.s32 0, %v74
  %v76 = vrot.slane %v71, %v75
  %v94 = vunpack.c.l.b16 %v15
  %v95 = vunpack.c.h.b16 %v15
  %v96 = vunpack.c.l.b16 %v16
  %v97 = vunpack.c.l.b16 %v17
  %v98 = vunpack.c.h.b16 %v17
  %v99 = vunpack.c.l.b16 %v18
  %v100 = vunpack.c.l.b16 %v19
  %v101 = vunpack.c.h.b16 %v19
  %v102 = vunpack.c.l.b16 %v20
  %v103 = vunpack.c.l.b16 %v21
  %v104 = vunpack.c.h.b16 %v21
  %v105 = vunpack.c.l.b16 %v22
  %v106 = vunpack.c.l.b16 %v23
  %v107 = vunpack.c.h.b16 %v23
  %v108 = vunpack.c.l.b16 %v24
  %v109 = vunpack.c.l.b16 %v25
  %v110 = vunpack.c.h.b16 %v25
  %v111 = vunpack.c.l.b16 %v26
  %v112 = vunpack.c.l.b16 %v27
  %v113 = vunpack.c.h.b16 %v27
  %v114 = vunpack.c.l.b16 %v28
  %v115 = vunpack.c.l.b16 %v29
  %v116 = vunpack.c.h.b16 %v29
  %v117 = vunpack.c.l.b16 %v30
  %v118 = vpack.c.b16 %v97, %v94
  %v119 = vpack.c.b16 %v98, %v95
  %v120 = vpack.c.b16 %v99, %v96
  %v121 = vpack.c.b16 %v103, %v100
  %v122 = vpack.c.b16 %v104, %v101
  %v123 = vpack.c.b16 %v105, %v102
  %v124 = vpack.c.b16 %v109, %v106
  %v125 = vpack.c.b16 %v110, %v107
  %v126 = vpack.c.b16 %v111, %v108
  %v127 = vpack.c.b16 %v115, %v112
  %v128 = vpack.c.b16 %v116, %v113
  %v129 = vpack.c.b16 %v117, %v114
  %v178 = vunpack.c.l.b16 %v31
  %v179 = vunpack.c.l.b16 %v32
  %v180 = vunpack.c.l.b16 %v33
  %v181 = vunpack.c.l.b16 %v34
  %v182 = vunpack.c.l.b16 %v35
  %v183 = vunpack.c.l.b16 %v36
  %v184 = vunpack.c.l.b16 %v37
  %v185 = vunpack.c.l.b16 %v38
  %v186 = vunpack.c.l.b16 %v39
  %v187 = vunpack.c.l.b16 %v40
  %v188 = vunpack.c.l.b16 %v41
  %v189 = vunpack.c.l.b16 %v42
  %v190 = vunpack.c.l.b16 %v43
  %v191 = vunpack.c.l.b16 %v44
  %v192 = vunpack.c.l.b16 %v45
  %v193 = vunpack.c.l.b16 %v46
  %v194 = vunpack.c.l.b16 %v47
  %v195 = vunpack.c.l.b16 %v48
  %v196 = vunpack.c.l.b16 %v49
  %v197 = vunpack.c.l.b16 %v50
  %v198 = vunpack.c.l.b16 %v51
  %v199 = vunpack.c.l.b16 %v52
  %v200 = vunpack.c.l.b16 %v53
  %v201 = vunpack.c.l.b16 %v54
  %v202 = vunpack.c.l.b16 %v55
  %v203 = vunpack.c.l.b16 %v56
  %v204 = vunpack.c.l.b16 %v57
  %v205 = vunpack.c.l.b16 %v58
  %v206 = vunpack.c.l.b16 %v59
  %v207 = vunpack.c.l.b16 %v60
  %v208 = vunpack.c.l.b16 %v61
  %v209 = vunpack.c.l.b16 %v62
  %v210 = vunpack.c.l.b16 %v63
  %v211 = vunpack.c.l.b16 %v64
  %v212 = vunpack.c.l.b16 %v65
  %v213 = vunpack.c.l.b16 %v66
  %v214 = vunpack.c.l.b16 %v67
  %v215 = vunpack.c.l.b16 %v68
  %v216 = vunpack.c.l.b16 %v69
  %v217 = vunpack.c.l.b16 %v70
  %v218 = vpack.c.b16 %v179, %v178
  %v219 = vpack.c.b16 %v181, %v180
  %v220 = vpack.c.b16 %v183, %v182
  %v221 = vpack.c.b16 %v185, %v184
  %v222 = vpack.c.b16 %v187, %v186
  %v223 = vpack.c.b16 %v189, %v188
  %v224 = vpack.c.b16 %v191, %v190
  %v225 = vpack.c.b16 %v193, %v192
  %v226 = vpack.c.b16 %v195, %v194
  %v227 = vpack.c.b16 %v197, %v196
  %v228 = vpack.c.b16 %v199, %v198
  %v229 = vpack.c.b16 %v201, %v200
  %v230 = vpack.c.b16 %v203, %v202
  %v231 = vpack.c.b16 %v205, %v204
  %v232 = vpack.c.b16 %v207, %v206
  %v233 = vpack.c.b16 %v209, %v208
  %v234 = vpack.c.b16 %v211, %v210
  %v235 = vpack.c.b16 %v213, %v212
  %v236 = vpack.c.b16 %v215, %v214
  %v237 = vpack.c.b16 %v217, %v216
  %vm258 = vcmask 523264
  %v260 = vsel %vm258, %v120, 0
  %v263 = vsel %vm258, %v123, 0
  %v266 = vsel %vm258, %v126, 0
  %v269 = vsel %vm258, %v129, 0
  %271 = vmatprep.subr.bf16.mxu0 0
  %272 = vmatpush1.bf16.msra.mxu0 %v218
  %273 = vmatprep.subr.bf16.mxu0 0
  %274 = vmatpush1.bf16.msra.mxu0 %v219
  %275 = vmatprep.subr.bf16.mxu0 0
  %276 = vmatpush1.bf16.msra.mxu0 %v220
  %277 = vmatprep.subr.bf16.mxu0 0
  %278 = vmatpush1.bf16.msra.mxu0 %v221
  %279 = vmatprep.subr.bf16.mxu0 0
  %280 = vmatpush1.bf16.msra.mxu0 %v222
  %281 = vmatprep.subr.bf16.mxu0 0
  %282 = vmatpush1.bf16.msra.mxu0 %v223
  %283 = vmatprep.subr.bf16.mxu0 0
  %284 = vmatpush1.bf16.msra.mxu0 %v224
  %285 = vmatprep.subr.bf16.mxu0 0
  %286 = vmatpush1.bf16.msra.mxu0 %v225
  %287 = vmatprep.subr.bf16.mxu0 0
  %288 = vmatpush1.bf16.msra.mxu0 %v226
  %289 = vmatprep.subr.bf16.mxu0 0
  %290 = vmatpush1.bf16.msra.mxu0 %v227
  %291 = vmatprep.subr.bf16.mxu0 0
  %292 = vmatpush1.bf16.msra.mxu0 %v228
  %293 = vmatprep.subr.bf16.mxu0 0
  %294 = vmatpush1.bf16.msra.mxu0 %v229
  %295 = vmatprep.subr.bf16.mxu0 0
  %296 = vmatpush1.bf16.msra.mxu0 %v230
  %297 = vmatprep.subr.bf16.mxu0 0
  %298 = vmatpush1.bf16.msra.mxu0 %v231
  %299 = vmatprep.subr.bf16.mxu0 0
  %300 = vmatpush1.bf16.msra.mxu0 %v232
  %301 = vmatprep.subr.bf16.mxu0 0
  %302 = vmatpush1.bf16.msra.mxu0 %v233
  %303 = vmatprep.mubr.bf16.mxu0 %v119
  %304 = vmatmul.mubr.bf16.gmra.mrb[0].mxu0 %v118
  %v305 = vpop.f32.mrb[0].mxu0
  %v306 = vadd.f32 %v76, %v305
  %v307 = vpop.f32.mrb[0].mxu0
  %v308 = vpop.f32.mrb[0].mxu0
  %v309 = vadd.f32 %v76, %v308
  %v310 = vpop.f32.mrb[0].mxu0
  %311 = vmatprep.mubr.bf16.mxu0 %v122
  %312 = vmatmul.mubr.bf16.gmra.mrb[0].mxu0 %v121
  %v313 = vpop.f32.mrb[0].mxu0
  %v314 = vadd.f32 %v76, %v313
  %v315 = vpop.f32.mrb[0].mxu0
  %v316 = vpop.f32.mrb[0].mxu0
  %v317 = vadd.f32 %v76, %v316
  %v318 = vpop.f32.mrb[0].mxu0
  %319 = vmatprep.mubr.bf16.mxu0 %v125
  %320 = vmatmul.mubr.bf16.gmra.mrb[0].mxu0 %v124
  %v321 = vpop.f32.mrb[0].mxu0
  %v322 = vadd.f32 %v76, %v321
  %v323 = vpop.f32.mrb[0].mxu0
  %v324 = vpop.f32.mrb[0].mxu0
  %v325 = vadd.f32 %v76, %v324
  %v326 = vpop.f32.mrb[0].mxu0
  %327 = vmatprep.mubr.bf16.mxu0 %v128
  %328 = vmatmul.mubr.bf16.gmra.mrb[0].mxu0 %v127
  %v329 = vpop.f32.mrb[0].mxu0
  %v330 = vadd.f32 %v76, %v329
  %v331 = vpop.f32.mrb[0].mxu0
  %v332 = vpop.f32.mrb[0].mxu0
  %v333 = vadd.f32 %v76, %v332
  %v334 = vpop.f32.mrb[0].mxu0
  %335 = vdwg.mxu0
  %336 = vmatprep.subr.bf16.mxu0 0
  %337 = vmatpush1.bf16.msra.mxu0 %v234
  %338 = vmatprep.subr.bf16.mxu0 0
  %339 = vmatpush1.bf16.msra.mxu0 %v235
  %340 = vmatprep.subr.bf16.mxu0 0
  %341 = vmatpush1.bf16.msra.mxu0 %v236
  %342 = vmatprep.subr.bf16.mxu0 0
  %343 = vmatpush1.bf16.msra.mxu0 %v237
  %344 = vmatprep.subr.bf16.mxu0 0
  %345 = vmatpush1.bf16.msra.mxu0 0
  %346 = vmatprep.subr.bf16.mxu0 0
  %347 = vmatpush1.bf16.msra.mxu0 0
  %348 = vmatprep.subr.bf16.mxu0 0
  %349 = vmatpush1.bf16.msra.mxu0 0
  %350 = vmatprep.subr.bf16.mxu0 0
  %351 = vmatpush1.bf16.msra.mxu0 0
  %352 = vmatprep.subr.bf16.mxu0 0
  %353 = vmatpush1.bf16.msra.mxu0 0
  %354 = vmatprep.subr.bf16.mxu0 0
  %355 = vmatpush1.bf16.msra.mxu0 0
  %356 = vmatprep.subr.bf16.mxu0 0
  %357 = vmatpush1.bf16.msra.mxu0 0
  %358 = vmatprep.subr.bf16.mxu0 0
  %359 = vmatpush1.bf16.msra.mxu0 0
  %360 = vmatprep.subr.bf16.mxu0 0
  %361 = vmatpush1.bf16.msra.mxu0 0
  %362 = vmatprep.subr.bf16.mxu0 0
  %363 = vmatpush1.bf16.msra.mxu0 0
  %364 = vmatprep.subr.bf16.mxu0 0
  %365 = vmatpush1.bf16.msra.mxu0 0
  %366 = vmatprep.subr.bf16.mxu0 0
  %367 = vmatpush1.bf16.msra.mxu0 0
  %368 = vmatprep.mubr.bf16.mxu0 0
  %369 = vmatmul.mubr.bf16.gmra.mrb[0].mxu0 %v260
  %v370 = vpop.f32.mrb[0].mxu0
  %v371 = vadd.f32 %v306, %v370
  %v372 = vpop.f32.mrb[0].mxu0
  %v373 = vpop.f32.mrb[0].mxu0
  %v374 = vadd.f32 %v309, %v373
  %v375 = vpop.f32.mrb[0].mxu0
  %376 = vmatprep.mubr.bf16.mxu0 0
  %377 = vmatmul.mubr.bf16.gmra.mrb[0].mxu0 %v263
  %v378 = vpop.f32.mrb[0].mxu0
  %v379 = vadd.f32 %v314, %v378
  %v380 = vpop.f32.mrb[0].mxu0
  %v381 = vpop.f32.mrb[0].mxu0
  %v382 = vadd.f32 %v317, %v381
  %v383 = vpop.f32.mrb[0].mxu0
  %384 = vmatprep.mubr.bf16.mxu0 0
  %385 = vmatmul.mubr.bf16.gmra.mrb[0].mxu0 %v266
  %v386 = vpop.f32.mrb[0].mxu0
  %v387 = vadd.f32 %v322, %v386
  %v388 = vpop.f32.mrb[0].mxu0
  %v389 = vpop.f32.mrb[0].mxu0
  %v390 = vadd.f32 %v325, %v389
  %v391 = vpop.f32.mrb[0].mxu0
  %392 = vmatprep.mubr.bf16.mxu0 0
  %393 = vmatmul.mubr.bf16.gmra.mrb[0].mxu0 %v269
  %v394 = vpop.f32.mrb[0].mxu0
  %v395 = vadd.f32 %v330, %v394
  %v396 = vpop.f32.mrb[0].mxu0
  %v397 = vpop.f32.mrb[0].mxu0
  %v398 = vadd.f32 %v333, %v397
  %v399 = vpop.f32.mrb[0].mxu0
  %400 = vdwg.mxu0
  %401 = vst [vmem:[%s3] sm:$0xff] %v371
  %402 = vst [vmem:[%s3 + $0x8] sm:$0xff] %v374
  %403 = vst [vmem:[%s3 + $0x10] sm:$0xff] %v379
  %404 = vst [vmem:[%s3 + $0x18] sm:$0xff] %v382
  %405 = vst [vmem:[%s3 + $0x20] sm:$0xff] %v387
  %406 = vst [vmem:[%s3 + $0x28] sm:$0xff] %v390
  %407 = vst [vmem:[%s3 + $0x30] sm:$0xff] %v395
  %408 = vst [vmem:[%s3 + $0x38] sm:$0xff] %v398
  // Predicated region
  $region14: #{dccrn_forward.22} parent=0 // pred_check
    _
  $region15: #{dccrn_forward.22} parent=0 // pred_check_branch
    %410 = sbr.rel (0) target = $region17
  $region16: #{dccrn_forward.22} parent=0 // pred_region
    _
  $region17: #{dccrn_forward.22} parent=0 // pred_fallthru
    _
  // Predicated region
  $region18: #{dccrn_forward.22} parent=0 // pred_check
    _
  $region19: #{dccrn_forward.22} parent=0 // pred_check_branch
    %412 = sbr.rel (0) target = $region21
  $region20: #{dccrn_forward.22} parent=0 // pred_region
    _
  $region21: #{dccrn_forward.22} parent=0 // pred_fallthru
    _

// kernel: dccrn_forward.24
$region0: #{dccrn_forward.24}
  #allocation0 [shape = 'u32[]', space=smem, size = 0x4, offset = 0x4, fixed_abs, tag = 'smem constant byte address 0x4 - core index']
  #allocation1 [shape = 'u32[144,128]{1,0:T(1,128)}', space=vmem, size = 0x12000, scoped, tag = 'internal scratch']
  %s0 = inlined_call_operand.vmem [shape: bf16[144,160], index: 0, kind: input, shape index: {}]
  %s1 = inlined_call_operand.vmem [shape: bf16[160,128], index: 1, kind: input, shape index: {}]
  %s2 = inlined_call_operand.vmem [shape: f32[1,128], index: 2, kind: input, shape index: {}]
  %s3 = inlined_call_operand.vmem [shape: f32[144,128], index: 3, kind: output, shape index: {}]
  %s4 = sld [smem:[#allocation0]]
  $region93: #{dccrn_forward.24} parent=0
    _
  %s6 = ssub.s32 1, %s4
  %s7 = scalar_select 0, %s6, %s4
  $region1: #{dccrn_forward.24} parent=0
    #allocation2 [shape = 'u8[81920]{0}', space=vmem, size = 0x14000, scoped, tag = 'output window, operand 0']
    loop: start=0, step=1, limit=4
    $region2: #{dccrn_forward.24} parent=1 // loop_pre_header
      _
    $region3: #{dccrn_forward.24} parent=1 // loop_header
      %s9 = sphi 0, %s13
      %p10 = scmp.ge.s32.totalorder %s9, 4
      %s19 = sphi 0, %s21
      %s22 = sphi 0, %s19
      %s23 = sphi 0, %s22
      %s39 = sphi 0, %s23
      %s43 = sphi 0, %s43
      %s45 = sphi 0, %s43
      %s46 = sphi 0, %s45
      %s60 = sphi 0, %s46
      %s64 = sphi 0, %s64
      %s66 = sphi 0, %s64
      %s67 = sphi 0, %s66
      %s81 = sphi 0, %s67
      %s87 = sphi 0, %s89
      %s90 = sphi 0, %s87
      %s91 = sphi 0, %s90
      %s107 = sphi 0, %s91
    $region4: #{dccrn_forward.24} parent=1 // loop_header_branch
      %12 = sbr.rel (%p10) target = $region8
    $region5: #{dccrn_forward.24} parent=1 // loop_body
      %s14 = ssub.s32 %s9, 1
      %s15 = ssub.s32 %s9, 2
      %s16 = sadd.s32 %s9, 1
      %s17 = ssub.s32 %s9, %s16
      %p18 = scmp.eq.s32.totalorder %s17, 0
      %s20 = sadd.s32 %s19, 1
      %s21 = scalar_select %p18, %s19, %s20
      %p24 = pneg %p18
      %p25 = scmp.eq.s32.totalorder %s9, 1
      %p26 = por %p24, %p25
      %p27 = scmp.ne.s32.totalorder %s19, %s22
      %p28 = scmp.eq.s32.totalorder %s9, 0
      %p29 = por %p27, %p28
      %p30 = scmp.ne.s32.totalorder %s19, %s22
      %p31 = scmp.eq.s32.totalorder %s14, 1
      %p32 = por %p30, %p31
      %p33 = scmp.ne.s32.totalorder %s22, %s23
      %p34 = scmp.eq.s32.totalorder %s14, 0
      %p35 = por %p33, %p34
      %p36 = scmp.ne.s32.totalorder %s22, %s23
      %p37 = scmp.eq.s32.totalorder %s15, 1
      %p38 = por %p36, %p37
      %p40 = scmp.ne.s32.totalorder %s23, %s39
      %p41 = scmp.eq.s32.totalorder %s15, 0
      %p42 = por %p40, %p41
      %s44 = sadd.s32 %s43, 1
      %p47 = scmp.eq.s32.totalorder %s9, 1
      %p48 = scmp.ne.s32.totalorder %s43, %s45
      %p49 = scmp.eq.s32.totalorder %s9, 0
      %p50 = por %p48, %p49
      %p51 = scmp.ne.s32.totalorder %s43, %s45
      %p52 = scmp.eq.s32.totalorder %s14, 1
      %p53 = por %p51, %p52
      %p54 = scmp.ne.s32.totalorder %s45, %s46
      %p55 = scmp.eq.s32.totalorder %s14, 0
      %p56 = por %p54, %p55
      %p57 = scmp.ne.s32.totalorder %s45, %s46
      %p58 = scmp.eq.s32.totalorder %s15, 1
      %p59 = por %p57, %p58
      %p61 = scmp.ne.s32.totalorder %s46, %s60
      %p62 = scmp.eq.s32.totalorder %s15, 0
      %p63 = por %p61, %p62
      %s65 = sadd.s32 %s64, 1
      %p68 = scmp.eq.s32.totalorder %s9, 1
      %p69 = scmp.ne.s32.totalorder %s64, %s66
      %p70 = scmp.eq.s32.totalorder %s9, 0
      %p71 = por %p69, %p70
      %p72 = scmp.ne.s32.totalorder %s64, %s66
      %p73 = scmp.eq.s32.totalorder %s14, 1
      %p74 = por %p72, %p73
      %p75 = scmp.ne.s32.totalorder %s66, %s67
      %p76 = scmp.eq.s32.totalorder %s14, 0
      %p77 = por %p75, %p76
      %p78 = scmp.ne.s32.totalorder %s66, %s67
      %p79 = scmp.eq.s32.totalorder %s15, 1
      %p80 = por %p78, %p79
      %p82 = scmp.ne.s32.totalorder %s67, %s81
      %p83 = scmp.eq.s32.totalorder %s15, 0
      %p84 = por %p82, %p83
      %s85 = ssub.s32 %s9, %s16
      %p86 = scmp.eq.s32.totalorder %s85, 0
      %s88 = sadd.s32 %s87, 1
      %s89 = scalar_select %p86, %s87, %s88
      %p92 = pneg %p86
      %p93 = scmp.eq.s32.totalorder %s9, 1
      %p94 = por %p92, %p93
      %p95 = scmp.ne.s32.totalorder %s87, %s90
      %p96 = scmp.eq.s32.totalorder %s9, 0
      %p97 = por %p95, %p96
      %p98 = scmp.ne.s32.totalorder %s87, %s90
      %p99 = scmp.eq.s32.totalorder %s14, 1
      %p100 = por %p98, %p99
      %p101 = scmp.ne.s32.totalorder %s90, %s91
      %p102 = scmp.eq.s32.totalorder %s14, 0
      %p103 = por %p101, %p102
      %p104 = scmp.ne.s32.totalorder %s90, %s91
      %p105 = scmp.eq.s32.totalorder %s15, 1
      %p106 = por %p104, %p105
      %p108 = scmp.ne.s32.totalorder %s91, %s107
      %p109 = scmp.eq.s32.totalorder %s15, 0
      %p110 = por %p108, %p109
      %p111 = scmp.le.s32.totalorder 1, %s9
      %p112 = scmp.lt.s32.totalorder %s9, 3
      %p113 = pnand %p111, %p112
      %p114 = pneg %p113
      // Predicated region
      $region9: #{dccrn_forward.24} parent=5 // pred_check
        _
      $region10: #{dccrn_forward.24} parent=5 // pred_check_branch
        %116 = sbr.rel (%p113) target = $region12
      $region11: #{dccrn_forward.24} parent=5 // pred_region
        %s117 = ssub.s32 %s9, 1
        // Predicated region
        $region13: #{dccrn_forward.24} parent=11 // pred_check
          %p118 = pneg %p56
        $region14: #{dccrn_forward.24} parent=11 // pred_check_branch
          %120 = sbr.rel (%p118) target = $region16
        $region15: #{dccrn_forward.24} parent=11 // pred_region
          _
        $region16: #{dccrn_forward.24} parent=11 // pred_fallthru
          _
        // Predicated region
        $region17: #{dccrn_forward.24} parent=11 // pred_check
          %p121 = pneg %p77
        $region18: #{dccrn_forward.24} parent=11 // pred_check_branch
          %123 = sbr.rel (%p121) target = $region20
        $region19: #{dccrn_forward.24} parent=11 // pred_region
          _
        $region20: #{dccrn_forward.24} parent=11 // pred_fallthru
          _
      $region12: #{dccrn_forward.24} parent=5 // pred_fallthru
        _
      %p124 = scmp.lt.s32.totalorder %s9, 2
      // Predicated region
      $region21: #{dccrn_forward.24} parent=5 // pred_check
        %p125 = pneg %p124
      $region22: #{dccrn_forward.24} parent=5 // pred_check_branch
        %127 = sbr.rel (%p125) target = $region24
      $region23: #{dccrn_forward.24} parent=5 // pred_region
        // Predicated region
        $region25: #{dccrn_forward.24} parent=23 // pred_check
          %p128 = pneg %p29
        $region26: #{dccrn_forward.24} parent=23 // pred_check_branch
          %130 = sbr.rel (%p128) target = $region28
        $region27: #{dccrn_forward.24} parent=23 // pred_region
          %s131 = smul.u32 10, %s9
          %s132 = ssub.s32 18, %s131
          %p133 = scmp.lt.s32.totalorder %s132, 10
          %s134 = scalar_select %p133, %s132, 10
          %s135 = smul.u32 64, %s134
          %s136 = smul.u32 %s135, 2
          %p137 = scmp.lt.s32.totalorder %s131, 17
          %s138 = scalar_select %p137, %s131, 17
          %s139 = smul.addr %s138, 2
          %s140 = smul.addr %s139, 4
          %s141 = scalar_lea.vmem %s0, %s140
          %s142 = smul.u32 10, %s9
          %s143 = ssub.s32 18, %s142
          %p144 = scmp.lt.s32.totalorder %s143, 10
          %s145 = scalar_select %p144, %s143, 10
          %s146 = smul.u32 64, %s145
          %s147 = smul.u32 %s146, 2
        $region28: #{dccrn_forward.24} parent=23 // pred_fallthru
          _
      $region24: #{dccrn_forward.24} parent=5 // pred_fallthru
        _
      %p148 = scmp.le.s32.totalorder 1, %s9
      %p149 = scmp.lt.s32.totalorder %s9, 3
      %p150 = pnand %p148, %p149
      %p151 = pneg %p150
      // Predicated region
      $region29: #{dccrn_forward.24} parent=5 // pred_check
        _
      $region30: #{dccrn_forward.24} parent=5 // pred_check_branch
        %153 = sbr.rel (%p150) target = $region32
      $region31: #{dccrn_forward.24} parent=5 // pred_region
        %s154 = ssub.s32 %s9, 1
        %s155 = smul.u32 10, %s14
        %s156 = ssub.s32 18, %s155
        %p157 = scmp.lt.s32.totalorder %s156, 10
        %s158 = scalar_select %p157, %s156, 10
        %s159 = smul.u32 64, %s158
        %s160 = smul.u32 %s159, 2
        %p161 = scmp.lt.s32.totalorder %s155, 17
        %s162 = scalar_select %p161, %s155, 17
        %s163 = smul.addr %s162, 2
        %s164 = smul.addr %s163, 4
        %s165 = scalar_lea.vmem %s0, %s164
        %p166 = pneg %p35
        %p167 = pneg %p32
        %p168 = pneg %p56
        %p169 = pneg %p53
        %p170 = pneg %p77
        %p171 = pneg %p74
        %p172 = pneg %p103
        %p173 = pneg %p100
        %s174 = sand.u32 %s90, 1
        %s175 = sand.u32 %s90, 1
        %s176 = smul.addr %s175, 80
        %s177 = scalar_lea.vmem [#allocation2], %s176
        %s178 = smul.u32 10, %s14
        %s179 = ssub.s32 18, %s178
        %p180 = scmp.lt.s32.totalorder %s179, 10
        %s181 = scalar_select %p180, %s179, 10
        %s182 = smul.u32 64, %s181
        %s183 = smul.u32 %s182, 2
        %p184 = scmp.lt.s32.totalorder %s178, 17
        %s185 = scalar_select %p184, %s178, 17
        %s186 = smul.addr %s185, 2
        %s187 = smul.addr %s186, 4
        %s188 = scalar_lea.vmem %s0, %s187
        %s189 = smul.u32 10, %s14
        %s190 = ssub.s32 18, %s189
        %p191 = scmp.lt.s32.totalorder %s190, 10
        %s192 = scalar_select %p191, %s190, 10
        %s193 = smul.u32 64, %s192
        %s194 = smul.u32 %s193, 2
        %s195 = smul.u32 10, %s14
        %s196 = ssub.s32 18, %s195
        %p197 = scmp.lt.s32.totalorder %s196, 10
        %s198 = scalar_select %p197, %s196, 10
        %s199 = smul.u32 128, %s198
        %v201 = vld [vmem:[%s188] sm:$0xff]
        %v202 = vld [vmem:[%s188 + $0x8] sm:$0xff]
        %v203 = vld [vmem:[%s188 + $0x10] sm:$0xff]
        %v204 = vld [vmem:[%s188 + $0x18] sm:$0xff]
        %v205 = vld [vmem:[%s188 + $0x20] sm:$0xff]
        %v206 = vld [vmem:[%s188 + $0x28] sm:$0xff]
        %v207 = vld [vmem:[%s188 + $0x30] sm:$0xff]
        %v208 = vld [vmem:[%s188 + $0x38] sm:$0xff]
        %v209 = vld [vmem:[%s188 + $0x40] sm:$0xff]
        %v210 = vld [vmem:[%s188 + $0x48] sm:$0xff]
        %v211 = vld [vmem:[%s1] sm:$0xf]
        %v212 = vld [vmem:[%s1 + $0x4] sm:$0xf]
        %v213 = vld [vmem:[%s1 + $0x8] sm:$0xf]
        %v214 = vld [vmem:[%s1 + $0xc] sm:$0xf]
        %v215 = vld [vmem:[%s1 + $0x10] sm:$0xf]
        %v216 = vld [vmem:[%s1 + $0x14] sm:$0xf]
        %v217 = vld [vmem:[%s1 + $0x18] sm:$0xf]
        %v218 = vld [vmem:[%s1 + $0x1c] sm:$0xf]
        %v219 = vld [vmem:[%s1 + $0x20] sm:$0xf]
        %v220 = vld [vmem:[%s1 + $0x24] sm:$0xf]
        %v221 = vld [vmem:[%s1 + $0x28] sm:$0xf]
        %v222 = vld [vmem:[%s1 + $0x2c] sm:$0xf]
        %v223 = vld [vmem:[%s1 + $0x30] sm:$0xf]
        %v224 = vld [vmem:[%s1 + $0x34] sm:$0xf]
        %v225 = vld [vmem:[%s1 + $0x38] sm:$0xf]
        %v226 = vld [vmem:[%s1 + $0x3c] sm:$0xf]
        %v227 = vld [vmem:[%s1 + $0x40] sm:$0xf]
        %v228 = vld [vmem:[%s1 + $0x44] sm:$0xf]
        %v229 = vld [vmem:[%s1 + $0x48] sm:$0xf]
        %v230 = vld [vmem:[%s1 + $0x4c] sm:$0xf]
        %v231 = vld [vmem:[%s2] sm:$0x1]
        %v233 = vlaneseq
        %v234 = vshrl.u32 %v233, 7
        %v235 = vsub.s32 0, %v234
        %v236 = vrot.slane %v231, %v235
        %v248 = vunpack.c.l.b16 %v201
        %v249 = vunpack.c.h.b16 %v201
        %v250 = vunpack.c.l.b16 %v202
        %v251 = vunpack.c.h.b16 %v202
        %v252 = vunpack.c.l.b16 %v203
        %v253 = vunpack.c.h.b16 %v203
        %v254 = vunpack.c.l.b16 %v204
        %v255 = vunpack.c.h.b16 %v204
        %v256 = vunpack.c.l.b16 %v205
        %v257 = vunpack.c.h.b16 %v205
        %v258 = vunpack.c.l.b16 %v206
        %v259 = vunpack.c.h.b16 %v206
        %v260 = vunpack.c.l.b16 %v207
        %v261 = vunpack.c.h.b16 %v207
        %v262 = vunpack.c.l.b16 %v208
        %v263 = vunpack.c.h.b16 %v208
        %v264 = vunpack.c.l.b16 %v209
        %v265 = vunpack.c.h.b16 %v209
        %v266 = vunpack.c.l.b16 %v210
        %v267 = vunpack.c.h.b16 %v210
        %v268 = vpack.c.b16 %v250, %v248
        %v269 = vpack.c.b16 %v251, %v249
        %v270 = vpack.c.b16 %v254, %v252
        %v271 = vpack.c.b16 %v255, %v253
        %v272 = vpack.c.b16 %v258, %v256
        %v273 = vpack.c.b16 %v259, %v257
        %v274 = vpack.c.b16 %v262, %v260
        %v275 = vpack.c.b16 %v263, %v261
        %v276 = vpack.c.b16 %v266, %v264
        %v277 = vpack.c.b16 %v267, %v265
        %v303 = vunpack.c.l.b16 %v211
        %v304 = vunpack.c.l.b16 %v212
        %v305 = vunpack.c.l.b16 %v213
        %v306 = vunpack.c.l.b16 %v214
        %v307 = vunpack.c.l.b16 %v215
        %v308 = vunpack.c.l.b16 %v216
        %v309 = vunpack.c.l.b16 %v217
        %v310 = vunpack.c.l.b16 %v218
        %v311 = vunpack.c.l.b16 %v219
        %v312 = vunpack.c.l.b16 %v220
        %v313 = vunpack.c.l.b16 %v221
        %v314 = vunpack.c.l.b16 %v222
        %v315 = vunpack.c.l.b16 %v223
        %v316 = vunpack.c.l.b16 %v224
        %v317 = vunpack.c.l.b16 %v225
        %v318 = vunpack.c.l.b16 %v226
        %v319 = vunpack.c.l.b16 %v227
        %v320 = vunpack.c.l.b16 %v228
        %v321 = vunpack.c.l.b16 %v229
        %v322 = vunpack.c.l.b16 %v230
        %v323 = vpack.c.b16 %v304, %v303
        %v324 = vpack.c.b16 %v306, %v305
        %v325 = vpack.c.b16 %v308, %v307
        %v326 = vpack.c.b16 %v310, %v309
        %v327 = vpack.c.b16 %v312, %v311
        %v328 = vpack.c.b16 %v314, %v313
        %v329 = vpack.c.b16 %v316, %v315
        %v330 = vpack.c.b16 %v318, %v317
        %v331 = vpack.c.b16 %v320, %v319
        %v332 = vpack.c.b16 %v322, %v321
        %vm343 = vcmask 261120
        %v345 = vsel %vm343, %v269, 0
        %v348 = vsel %vm343, %v271, 0
        %v351 = vsel %vm343, %v273, 0
        %v354 = vsel %vm343, %v275, 0
        %v357 = vsel %vm343, %v277, 0
        %359 = vmatprep.subr.bf16.mxu0 0
        %360 = vmatpush1.bf16.msra.mxu0 %v323
        %361 = vmatprep.subr.bf16.mxu0 0
        %362 = vmatpush1.bf16.msra.mxu0 %v324
        %363 = vmatprep.subr.bf16.mxu0 0
        %364 = vmatpush1.bf16.msra.mxu0 %v325
        %365 = vmatprep.subr.bf16.mxu0 0
        %366 = vmatpush1.bf16.msra.mxu0 %v326
        %367 = vmatprep.subr.bf16.mxu0 0
        %368 = vmatpush1.bf16.msra.mxu0 %v327
        %369 = vmatprep.subr.bf16.mxu0 0
        %370 = vmatpush1.bf16.msra.mxu0 %v328
        %371 = vmatprep.subr.bf16.mxu0 0
        %372 = vmatpush1.bf16.msra.mxu0 %v329
        %373 = vmatprep.subr.bf16.mxu0 0
        %374 = vmatpush1.bf16.msra.mxu0 %v330
        %375 = vmatprep.subr.bf16.mxu0 0
        %376 = vmatpush1.bf16.msra.mxu0 %v331
        %377 = vmatprep.subr.bf16.mxu0 0
        %378 = vmatpush1.bf16.msra.mxu0 %v332
        %379 = vmatprep.subr.bf16.mxu0 0
        %380 = vmatpush1.bf16.msra.mxu0 0
        %381 = vmatprep.subr.bf16.mxu0 0
        %382 = vmatpush1.bf16.msra.mxu0 0
        %383 = vmatprep.subr.bf16.mxu0 0
        %384 = vmatpush1.bf16.msra.mxu0 0
        %385 = vmatprep.subr.bf16.mxu0 0
        %386 = vmatpush1.bf16.msra.mxu0 0
        %387 = vmatprep.subr.bf16.mxu0 0
        %388 = vmatpush1.bf16.msra.mxu0 0
        %389 = vmatprep.subr.bf16.mxu0 0
        %390 = vmatpush1.bf16.msra.mxu0 0
        %391 = vmatprep.mubr.bf16.mxu0 %v345
        %392 = vmatmul.mubr.bf16.gmra.mrb[0].mxu0 %v268
        %v393 = vpop.f32.mrb[0].mxu0
        %v394 = vadd.f32 %v236, %v393
        %v395 = vpop.f32.mrb[0].mxu0
        %v396 = vpop.f32.mrb[0].mxu0
        %v397 = vadd.f32 %v236, %v396
        %v398 = vpop.f32.mrb[0].mxu0
        %399 = vmatprep.mubr.bf16.mxu0 %v348
        %400 = vmatmul.mubr.bf16.gmra.mrb[0].mxu0 %v270
        %v401 = vpop.f32.mrb[0].mxu0
        %v402 = vadd.f32 %v236, %v401
        %v403 = vpop.f32.mrb[0].mxu0
        %v404 = vpop.f32.mrb[0].mxu0
        %v405 = vadd.f32 %v236, %v404
        %v406 = vpop.f32.mrb[0].mxu0
        %407 = vmatprep.mubr.bf16.mxu0 %v351
        %408 = vmatmul.mubr.bf16.gmra.mrb[0].mxu0 %v272
        %v409 = vpop.f32.mrb[0].mxu0
        %v410 = vadd.f32 %v236, %v409
        %v411 = vpop.f32.mrb[0].mxu0
        %v412 = vpop.f32.mrb[0].mxu0
        %v413 = vadd.f32 %v236, %v412
        %v414 = vpop.f32.mrb[0].mxu0
        %415 = vmatprep.mubr.bf16.mxu0 %v354
        %416 = vmatmul.mubr.bf16.gmra.mrb[0].mxu0 %v274
        %v417 = vpop.f32.mrb[0].mxu0
        %v418 = vadd.f32 %v236, %v417
        %v419 = vpop.f32.mrb[0].mxu0
        %v420 = vpop.f32.mrb[0].mxu0
        %v421 = vadd.f32 %v236, %v420
        %v422 = vpop.f32.mrb[0].mxu0
        %423 = vmatprep.mubr.bf16.mxu0 %v357
        %424 = vmatmul.mubr.bf16.gmra.mrb[0].mxu0 %v276
        %v425 = vpop.f32.mrb[0].mxu0
        %v426 = vadd.f32 %v236, %v425
        %v427 = vpop.f32.mrb[0].mxu0
        %v428 = vpop.f32.mrb[0].mxu0
        %v429 = vadd.f32 %v236, %v428
        %v430 = vpop.f32.mrb[0].mxu0
        %431 = vdwg.mxu0
        %432 = vst [vmem:[%s177] sm:$0xff] %v394
        %433 = vst [vmem:[%s177 + $0x8] sm:$0xff] %v397
        %434 = vst [vmem:[%s177 + $0x10] sm:$0xff] %v402
        %435 = vst [vmem:[%s177 + $0x18] sm:$0xff] %v405
        %436 = vst [vmem:[%s177 + $0x20] sm:$0xff] %v410
        %437 = vst [vmem:[%s177 + $0x28] sm:$0xff] %v413
        %438 = vst [vmem:[%s177 + $0x30] sm:$0xff] %v418
        %439 = vst [vmem:[%s177 + $0x38] sm:$0xff] %v421
        %440 = vst [vmem:[%s177 + $0x40] sm:$0xff] %v426
        %441 = vst [vmem:[%s177 + $0x48] sm:$0xff] %v429
        %s442 = sand.u32 %s90, 1
        %s443 = sand.u32 %s90, 1
        %s444 = smul.addr %s443, 80
        %s445 = scalar_lea.vmem [#allocation2], %s444
        // Predicated region
        $region33: #{dccrn_forward.24} parent=31 // pred_check
          %p446 = pneg %p100
        $region34: #{dccrn_forward.24} parent=31 // pred_check_branch
          %448 = sbr.rel (%p446) target = $region36
        $region35: #{dccrn_forward.24} parent=31 // pred_region
          %s449 = smul.u32 10, %s14
          %s450 = ssub.s32 18, %s449
          %p451 = scmp.lt.s32.totalorder %s450, 10
          %s452 = scalar_select %p451, %s450, 10
          %s453 = smul.u32 128, %s452
          %p454 = scmp.ne.s32.totalorder 0, %s453
          %s455 = smul.addr %s449, 8
          %s456 = scalar_lea.vmem %s3, %s455
          // Predicated region
          $region37: #{dccrn_forward.24} parent=35 // pred_check
            %p457 = pneg %p454
          $region38: #{dccrn_forward.24} parent=35 // pred_check_branch
            %459 = sbr.rel (%p457) target = $region40
          $region39: #{dccrn_forward.24} parent=35 // pred_region
            // Predicated region
            $region41: #{dccrn_forward.24} parent=39 // pred_check
              _
            $region42: #{dccrn_forward.24} parent=39 // pred_check_branch
              %461 = sbr.rel (0) target = $region44
            $region43: #{dccrn_forward.24} parent=39 // pred_region
              // Predicated region
              $region63: #{dccrn_forward.24} parent=43 // pred_check
                _
              $region64: #{dccrn_forward.24} parent=43 // pred_check_branch
                %529 = sbr.rel (0) target = $region66
              $region65: #{dccrn_forward.24} parent=43 // pred_region
                %s530 = sdiv.u32.pop %s452, 10
                %s531 = srem.u32.pop %s452, 10
                // While loop
                $region67: #{dccrn_forward.24} parent=65 // loop_pre_header
                  _
                $region68: #{dccrn_forward.24} parent=65 // loop_header
                  %s533 = sphi 0, %s535
                  %p534 = scmp.ge.s32.totalorder %s533, %s530
                  %s538 = sphi 0, %s563
                  %s539 = sphi %s445, %s566
                  %s540 = sphi %s456, %s567
                $region69: #{dccrn_forward.24} parent=65 // loop_header_branch
                  %537 = sbr.rel (%p534) target = $region73
                $region70: #{dccrn_forward.24} parent=65 // loop_body
                  %v541 = vld [vmem:[%s539] sm:$0xff]
                  %542 = vst [vmem:[%s540] sm:$0xff] %v541
                  %v543 = vld [vmem:[%s539 + $0x8] sm:$0xff]
                  %544 = vst [vmem:[%s540 + $0x8] sm:$0xff] %v543
                  %v545 = vld [vmem:[%s539 + $0x10] sm:$0xff]
                  %546 = vst [vmem:[%s540 + $0x10] sm:$0xff] %v545
                  %v547 = vld [vmem:[%s539 + $0x18] sm:$0xff]
                  %548 = vst [vmem:[%s540 + $0x18] sm:$0xff] %v547
                  %v549 = vld [vmem:[%s539 + $0x20] sm:$0xff]
                  %550 = vst [vmem:[%s540 + $0x20] sm:$0xff] %v549
                  %v551 = vld [vmem:[%s539 + $0x28] sm:$0xff]
                  %552 = vst [vmem:[%s540 + $0x28] sm:$0xff] %v551
                  %v553 = vld [vmem:[%s539 + $0x30] sm:$0xff]
                  %554 = vst [vmem:[%s540 + $0x30] sm:$0xff] %v553
                  %v555 = vld [vmem:[%s539 + $0x38] sm:$0xff]
                  %556 = vst [vmem:[%s540 + $0x38] sm:$0xff] %v555
                  %v557 = vld [vmem:[%s539 + $0x40] sm:$0xff]
                  %558 = vst [vmem:[%s540 + $0x40] sm:$0xff] %v557
                  %v559 = vld [vmem:[%s539 + $0x48] sm:$0xff]
                  %560 = vst [vmem:[%s540 + $0x48] sm:$0xff] %v559
                  %s561 = sadd.s32 1, %s538
                  %p562 = scmp.ge.s32.totalorder %s561, %s530
                  %s563 = scalar_select %p562, 0, %s561
                  %s564 = smul.u32 %s563, 80
                  %s565 = smul.u32 %s563, 80
                  %s566 = scalar_lea.vmem %s445, %s564 [#allocation2]
                  %s567 = scalar_lea.vmem %s456, %s565
                $region71: #{dccrn_forward.24} parent=65 // loop_footer
                  %s535 = sadd.s32 %s533, 1
                $region72: #{dccrn_forward.24} parent=65 // loop_footer_branch
                  %532 = sbr.rel target = $region68
                $region73: #{dccrn_forward.24} parent=65 // loop_exit
                  _
                %s568 = sdiv.u32.pop %s452, 10
                %s569 = srem.u32.pop %s452, 10
                %s570 = smul.u32 %s568, 10
                %s571 = smul.u32 8, %s570
                %s572 = scalar_lea.vmem %s445, %s571 [#allocation2]
                %s573 = smul.u32 8, %s570
                %s574 = scalar_lea.vmem %s456, %s573
                // While loop
                $region74: #{dccrn_forward.24} parent=65 // loop_pre_header
                  _
                $region75: #{dccrn_forward.24} parent=65 // loop_header
                  %s576 = sphi 0, %s578
                  %p577 = scmp.ge.s32.totalorder %s576, %s569
                  %s581 = sphi 0, %s588
                  %s582 = sphi %s572, %s591
                  %s583 = sphi %s574, %s592
                $region76: #{dccrn_forward.24} parent=65 // loop_header_branch
                  %580 = sbr.rel (%p577) target = $region80
                $region77: #{dccrn_forward.24} parent=65 // loop_body
                  %v584 = vld [vmem:[%s582] sm:$0xff]
                  %585 = vst [vmem:[%s583] sm:$0xff] %v584
                  %s586 = sadd.s32 1, %s581
                  %p587 = scmp.ge.s32.totalorder %s586, %s569
                  %s588 = scalar_select %p587, 0, %s586
                  %s589 = smul.u32 %s588, 8
                  %s590 = smul.u32 %s588, 8
                  %s591 = scalar_lea.vmem %s572, %s589 [#allocation2]
                  %s592 = scalar_lea.vmem %s574, %s590
                $region78: #{dccrn_forward.24} parent=65 // loop_footer
                  %s578 = sadd.s32 %s576, 1
                $region79: #{dccrn_forward.24} parent=65 // loop_footer_branch
                  %575 = sbr.rel target = $region75
                $region80: #{dccrn_forward.24} parent=65 // loop_exit
                  _
              $region66: #{dccrn_forward.24} parent=43 // pred_fallthru
                _
              // Predicated region
              $region81: #{dccrn_forward.24} parent=43 // pred_check
                _
              $region82: #{dccrn_forward.24} parent=43 // pred_check_branch
                %594 = sbr.rel target = $region84
              $region83: #{dccrn_forward.24} parent=43 // pred_region
                _
              $region84: #{dccrn_forward.24} parent=43 // pred_fallthru
                _
            $region44: #{dccrn_forward.24} parent=39 // pred_fallthru
              _
            // Predicated region
            $region45: #{dccrn_forward.24} parent=39 // pred_check
              _
            $region46: #{dccrn_forward.24} parent=39 // pred_check_branch
              %463 = sbr.rel target = $region48
            $region47: #{dccrn_forward.24} parent=39 // pred_region
              %s465 = sdiv.u32.pop %s452, 10
              %s466 = srem.u32.pop %s452, 10
              // While loop
              $region49: #{dccrn_forward.24} parent=47 // loop_pre_header
                _
              $region50: #{dccrn_forward.24} parent=47 // loop_header
                %s468 = sphi 0, %s470
                %p469 = scmp.ge.s32.totalorder %s468, %s465
                %s473 = sphi 0, %s498
                %s474 = sphi %s445, %s501
                %s475 = sphi %s456, %s502
              $region51: #{dccrn_forward.24} parent=47 // loop_header_branch
                %472 = sbr.rel (%p469) target = $region55
              $region52: #{dccrn_forward.24} parent=47 // loop_body
                %v476 = vld [vmem:[%s474] sm:$0xff]
                %477 = vst [vmem:[%s475] sm:$0xff] %v476
                %v478 = vld [vmem:[%s474 + $0x8] sm:$0xff]
                %479 = vst [vmem:[%s475 + $0x8] sm:$0xff] %v478
                %v480 = vld [vmem:[%s474 + $0x10] sm:$0xff]
                %481 = vst [vmem:[%s475 + $0x10] sm:$0xff] %v480
                %v482 = vld [vmem:[%s474 + $0x18] sm:$0xff]
                %483 = vst [vmem:[%s475 + $0x18] sm:$0xff] %v482
                %v484 = vld [vmem:[%s474 + $0x20] sm:$0xff]
                %485 = vst [vmem:[%s475 + $0x20] sm:$0xff] %v484
                %v486 = vld [vmem:[%s474 + $0x28] sm:$0xff]
                %487 = vst [vmem:[%s475 + $0x28] sm:$0xff] %v486
                %v488 = vld [vmem:[%s474 + $0x30] sm:$0xff]
                %489 = vst [vmem:[%s475 + $0x30] sm:$0xff] %v488
                %v490 = vld [vmem:[%s474 + $0x38] sm:$0xff]
                %491 = vst [vmem:[%s475 + $0x38] sm:$0xff] %v490
                %v492 = vld [vmem:[%s474 + $0x40] sm:$0xff]
                %493 = vst [vmem:[%s475 + $0x40] sm:$0xff] %v492
                %v494 = vld [vmem:[%s474 + $0x48] sm:$0xff]
                %495 = vst [vmem:[%s475 + $0x48] sm:$0xff] %v494
                %s496 = sadd.s32 1, %s473
                %p497 = scmp.ge.s32.totalorder %s496, %s465
                %s498 = scalar_select %p497, 0, %s496
                %s499 = smul.u32 %s498, 80
                %s500 = smul.u32 %s498, 80
                %s501 = scalar_lea.vmem %s445, %s499 [#allocation2]
                %s502 = scalar_lea.vmem %s456, %s500
              $region53: #{dccrn_forward.24} parent=47 // loop_footer
                %s470 = sadd.s32 %s468, 1
              $region54: #{dccrn_forward.24} parent=47 // loop_footer_branch
                %467 = sbr.rel target = $region50
              $region55: #{dccrn_forward.24} parent=47 // loop_exit
                _
              %s503 = sdiv.u32.pop %s452, 10
              %s504 = srem.u32.pop %s452, 10
              %s505 = smul.u32 %s503, 10
              %s506 = smul.u32 8, %s505
              %s507 = scalar_lea.vmem %s445, %s506 [#allocation2]
              %s508 = smul.u32 8, %s505
              %s509 = scalar_lea.vmem %s456, %s508
              // While loop
              $region56: #{dccrn_forward.24} parent=47 // loop_pre_header
                _
              $region57: #{dccrn_forward.24} parent=47 // loop_header
                %s511 = sphi 0, %s513
                %p512 = scmp.ge.s32.totalorder %s511, %s504
                %s516 = sphi 0, %s523
                %s517 = sphi %s507, %s526
                %s518 = sphi %s509, %s527
              $region58: #{dccrn_forward.24} parent=47 // loop_header_branch
                %515 = sbr.rel (%p512) target = $region62
              $region59: #{dccrn_forward.24} parent=47 // loop_body
                %v519 = vld [vmem:[%s517] sm:$0xff]
                %520 = vst [vmem:[%s518] sm:$0xff] %v519
                %s521 = sadd.s32 1, %s516
                %p522 = scmp.ge.s32.totalorder %s521, %s504
                %s523 = scalar_select %p522, 0, %s521
                %s524 = smul.u32 %s523, 8
                %s525 = smul.u32 %s523, 8
                %s526 = scalar_lea.vmem %s507, %s524 [#allocation2]
                %s527 = scalar_lea.vmem %s509, %s525
              $region60: #{dccrn_forward.24} parent=47 // loop_footer
                %s513 = sadd.s32 %s511, 1
              $region61: #{dccrn_forward.24} parent=47 // loop_footer_branch
                %510 = sbr.rel target = $region57
              $region62: #{dccrn_forward.24} parent=47 // loop_exit
                _
            $region48: #{dccrn_forward.24} parent=39 // pred_fallthru
              _
          $region40: #{dccrn_forward.24} parent=35 // pred_fallthru
            _
          %595 = vnop
        $region36: #{dccrn_forward.24} parent=31 // pred_fallthru
          _
      $region32: #{dccrn_forward.24} parent=5 // pred_fallthru
        _
      %p596 = scmp.le.s32.totalorder 2, %s9
      // Predicated region
      $region85: #{dccrn_forward.24} parent=5 // pred_check
        %p597 = pneg %p596
      $region86: #{dccrn_forward.24} parent=5 // pred_check_branch
        %599 = sbr.rel (%p597) target = $region88
      $region87: #{dccrn_forward.24} parent=5 // pred_region
        %s600 = ssub.s32 %s9, 2
        // Predicated region
        $region89: #{dccrn_forward.24} parent=87 // pred_check
          %p601 = pneg %p106
        $region90: #{dccrn_forward.24} parent=87 // pred_check_branch
          %603 = sbr.rel (%p601) target = $region92
        $region91: #{dccrn_forward.24} parent=87 // pred_region
          %s604 = sand.u32 %s91, 1
          %s605 = sand.u32 %s91, 1
          %s606 = smul.addr %s605, 80
          %s607 = scalar_lea.vmem [#allocation2], %s606
        $region92: #{dccrn_forward.24} parent=87 // pred_fallthru
          _
      $region88: #{dccrn_forward.24} parent=5 // pred_fallthru
        _
    $region6: #{dccrn_forward.24} parent=1 // loop_footer
      %s13 = sadd.s32 1, %s9
    $region7: #{dccrn_forward.24} parent=1 // loop_footer_branch
      %8 = sbr.rel target = $region3
    $region8: #{dccrn_forward.24} parent=1 // loop_exit
      _

// kernel: dccrn_forward.25
$region0: #{dccrn_forward.25}
  #allocation0 [shape = 'u32[]', space=smem, size = 0x4, offset = 0x4, fixed_abs, tag = 'smem constant byte address 0x4 - core index']
  #allocation1 [shape = 'u32[144,128]{1,0:T(1,128)}', space=vmem, size = 0x12000, scoped, tag = 'internal scratch']
  %s0 = inlined_call_operand.vmem [shape: f32[18,9], index: 0, kind: input, shape index: {}]
  %s1 = inlined_call_operand.vmem [shape: f32[18,9], index: 1, kind: input, shape index: {}]
  %s2 = inlined_call_operand.vmem [shape: f32[18,9], index: 2, kind: input, shape index: {}]
  %s3 = inlined_call_operand.vmem [shape: f32[18,9], index: 3, kind: input, shape index: {}]
  %s4 = inlined_call_operand.vmem [shape: f32[9,128], index: 4, kind: input, shape index: {}]
  %s5 = inlined_call_operand.vmem [shape: f32[9,128], index: 5, kind: input, shape index: {}]
  %s6 = inlined_call_operand.vmem [shape: f32[18,9], index: 6, kind: output, shape index: {0}]
  %s7 = inlined_call_operand.vmem [shape: f32[18,9], index: 7, kind: output, shape index: {1}]
  %s8 = inlined_call_operand.vmem [shape: f32[18,128], index: 8, kind: output, shape index: {2}]
  %9 = xla_tuple %s6, %s7, %s8
  %s10 = sld [smem:[#allocation0]]
  $region50: #{dccrn_forward.25} parent=0
    _
  %s12 = ssub.s32 1, %s10
  %s13 = scalar_select 0, %s12, %s10
  // Predicated region
  $region2: #{dccrn_forward.25} parent=0 // pred_check
    _
  $region3: #{dccrn_forward.25} parent=0 // pred_check_branch
    %15 = sbr.rel (0) target = $region5
  $region4: #{dccrn_forward.25} parent=0 // pred_region
    _
  $region5: #{dccrn_forward.25} parent=0 // pred_fallthru
    _
  // Predicated region
  $region6: #{dccrn_forward.25} parent=0 // pred_check
    _
  $region7: #{dccrn_forward.25} parent=0 // pred_check_branch
    %17 = sbr.rel (0) target = $region9
  $region8: #{dccrn_forward.25} parent=0 // pred_region
    _
  $region9: #{dccrn_forward.25} parent=0 // pred_fallthru
    _
  // Predicated region
  $region10: #{dccrn_forward.25} parent=0 // pred_check
    _
  $region11: #{dccrn_forward.25} parent=0 // pred_check_branch
    %19 = sbr.rel (0) target = $region13
  $region12: #{dccrn_forward.25} parent=0 // pred_region
    _
  $region13: #{dccrn_forward.25} parent=0 // pred_fallthru
    _
  // Predicated region
  $region14: #{dccrn_forward.25} parent=0 // pred_check
    _
  $region15: #{dccrn_forward.25} parent=0 // pred_check_branch
    %21 = sbr.rel (0) target = $region17
  $region16: #{dccrn_forward.25} parent=0 // pred_region
    _
  $region17: #{dccrn_forward.25} parent=0 // pred_fallthru
    _
  // Predicated region
  $region18: #{dccrn_forward.25} parent=0 // pred_check
    _
  $region19: #{dccrn_forward.25} parent=0 // pred_check_branch
    %23 = sbr.rel (0) target = $region21
  $region20: #{dccrn_forward.25} parent=0 // pred_region
    _
  $region21: #{dccrn_forward.25} parent=0 // pred_fallthru
    _
  // Predicated region
  $region22: #{dccrn_forward.25} parent=0 // pred_check
    _
  $region23: #{dccrn_forward.25} parent=0 // pred_check_branch
    %25 = sbr.rel (0) target = $region25
  $region24: #{dccrn_forward.25} parent=0 // pred_region
    _
  $region25: #{dccrn_forward.25} parent=0 // pred_fallthru
    _
  %v26 = vld [vmem:[%s0] sm:$0xff]
  %v27 = vld [vmem:[%s0 + $0x8] sm:$0xff]
  %v28 = vld [vmem:[%s0 + $0x10] sm:$0x3]
  %v29 = vld [vmem:[%s1] sm:$0xff]
  %v30 = vld [vmem:[%s1 + $0x8] sm:$0xff]
  %v31 = vld [vmem:[%s1 + $0x10] sm:$0x3]
  %v32 = vld [vmem:[%s2] sm:$0xff]
  %v33 = vld [vmem:[%s2 + $0x8] sm:$0xff]
  %v34 = vld [vmem:[%s2 + $0x10] sm:$0x3]
  %v35 = vld [vmem:[%s3] sm:$0xff]
  %v36 = vld [vmem:[%s3 + $0x8] sm:$0xff]
  %v37 = vld [vmem:[%s3 + $0x10] sm:$0x3]
  %v38 = vmul.f32 %v32, %v32
  %v39 = vmul.f32 %v33, %v33
  %v40 = vmul.f32 %v34, %v34
  %v41 = vmul.f32 %v35, %v35
  %v42 = vmul.f32 %v36, %v36
  %v43 = vmul.f32 %v37, %v37
  %v44 = vadd.f32 %v38, %v41
  %v45 = vadd.f32 %v39, %v42
  %v46 = vadd.f32 %v40, %v43
  %v47 = vadd.f32 %v44, 1e-08
  %v48 = vadd.f32 %v45, 1e-08
  %v49 = vadd.f32 %v46, 1e-08
  %v50 = vrsqrt.pop %v47
  %v51 = vrsqrt.pop %v48
  %v52 = vrsqrt.pop %v49
  %v53 = vmul.f32 %v47, %v50
  %v54 = vmul.f32 %v48, %v51
  %v55 = vmul.f32 %v49, %v52
  %v56 = vmul.f32 %v32, %v50
  %v57 = vmul.f32 %v33, %v51
  %v58 = vmul.f32 %v34, %v52
  %v59 = vmul.f32 %v35, %v50
  %v60 = vmul.f32 %v36, %v51
  %v61 = vmul.f32 %v37, %v52
  %v62 = vmul.f32 %v26, %v26
  %v63 = vmul.f32 %v27, %v27
  %v64 = vmul.f32 %v28, %v28
  %v65 = vmul.f32 %v29, %v29
  %v66 = vmul.f32 %v30, %v30
  %v67 = vmul.f32 %v31, %v31
  %v68 = vadd.f32 %v62, %v65
  %v69 = vadd.f32 %v63, %v66
  %v70 = vadd.f32 %v64, %v67
  %v71 = vrsqrt.pop %v68
  %v72 = vmul.f32 %v68, %v71
  %vm73 = vcmp.eq.f32.partialorder %v68, inf
  %v74 = vsel %vm73, %v68, %v72
  %vm75 = vcmp.eq.f32.partialorder %v68, 0.0
  %v76 = vand.u32 %v68, 2147483648
  %v77 = vsel %vm75, %v76, %v74
  %v78 = vrsqrt.pop %v69
  %v79 = vmul.f32 %v69, %v78
  %vm80 = vcmp.eq.f32.partialorder %v69, inf
  %v81 = vsel %vm80, %v69, %v79
  %vm82 = vcmp.eq.f32.partialorder %v69, 0.0
  %v83 = vand.u32 %v69, 2147483648
  %v84 = vsel %vm82, %v83, %v81
  %v85 = vrsqrt.pop %v70
  %v86 = vmul.f32 %v70, %v85
  %vm87 = vcmp.eq.f32.partialorder %v70, inf
  %v88 = vsel %vm87, %v70, %v86
  %vm89 = vcmp.eq.f32.partialorder %v70, 0.0
  %v90 = vand.u32 %v70, 2147483648
  %v91 = vsel %vm89, %v90, %v88
  %v92 = vadd.f32 %v77, 1e-08
  %v93 = vadd.f32 %v84, 1e-08
  %v94 = vadd.f32 %v91, 1e-08
  %v95 = vrcp.pop %v92
  %v96 = vrcp.pop %v93
  %v97 = vrcp.pop %v94
  %v98 = vmul.f32 %v26, %v95
  %v99 = vmul.f32 %v27, %v96
  %v100 = vmul.f32 %v28, %v97
  %v101 = vmul.f32 %v29, %v95
  %v102 = vmul.f32 %v30, %v96
  %v103 = vmul.f32 %v31, %v97
  %v104 = vmul.f32 %v98, %v98
  %v105 = vmul.f32 %v99, %v99
  %v106 = vmul.f32 %v100, %v100
  %v107 = vmul.f32 %v101, %v101
  %v108 = vmul.f32 %v102, %v102
  %v109 = vmul.f32 %v103, %v103
  %v110 = vadd.f32 %v104, %v107
  %v111 = vadd.f32 %v105, %v108
  %v112 = vadd.f32 %v106, %v109
  %v113 = vadd.f32 %v110, 1e-24
  %v114 = vadd.f32 %v111, 1e-24
  %v115 = vadd.f32 %v112, 1e-24
  %v116 = vrsqrt.pop %v113
  %v117 = vrsqrt.pop %v114
  %v118 = vrsqrt.pop %v115
  %v119 = vmul.f32 %v98, %v116
  %v120 = vmul.f32 %v99, %v117
  %v121 = vmul.f32 %v100, %v118
  %v122 = vmul.f32 %v101, %v116
  %v123 = vmul.f32 %v102, %v117
  %v124 = vmul.f32 %v103, %v118
  %v125 = vtanh.pop %v77
  %v126 = vtanh.pop %v84
  %v127 = vtanh.pop %v91
  %v128 = vmul.f32 %v125, %v53
  %v129 = vmul.f32 %v126, %v54
  %v130 = vmul.f32 %v127, %v55
  %v131 = vmul.f32 %v56, %v119
  %v132 = vmul.f32 %v57, %v120
  %v133 = vmul.f32 %v58, %v121
  %v134 = vmul.f32 %v59, %v122
  %v135 = vmul.f32 %v60, %v123
  %v136 = vmul.f32 %v61, %v124
  %v137 = vsub.f32 %v131, %v134
  %v138 = vsub.f32 %v132, %v135
  %v139 = vsub.f32 %v133, %v136
  %v140 = vmul.f32 %v128, %v137
  %v141 = vmul.f32 %v129, %v138
  %v142 = vmul.f32 %v130, %v139
  %v143 = vmul.f32 %v59, %v119
  %v144 = vmul.f32 %v60, %v120
  %v145 = vmul.f32 %v61, %v121
  %v146 = vmul.f32 %v56, %v122
  %v147 = vmul.f32 %v57, %v123
  %v148 = vmul.f32 %v58, %v124
  %v149 = vadd.f32 %v143, %v146
  %v150 = vadd.f32 %v144, %v147
  %v151 = vadd.f32 %v145, %v148
  %v152 = vmul.f32 %v128, %v149
  %v153 = vmul.f32 %v129, %v150
  %v154 = vmul.f32 %v130, %v151
  %vm155 = vcmask 72704
  %156 = vst.msk [vmem:[%s6] sm:$0xff] %vm155, %v140
  %157 = vst.msk [vmem:[%s6 + $0x8] sm:$0xff] %vm155, %v141
  %vm158 = vcmask 66560
  %159 = vst.msk [vmem:[%s6 + $0x10] sm:$0x3] %vm158, %v142
  %160 = vst.msk [vmem:[%s7] sm:$0xff] %vm155, %v152
  %161 = vst.msk [vmem:[%s7 + $0x8] sm:$0xff] %vm155, %v153
  %162 = vst.msk [vmem:[%s7 + $0x10] sm:$0x3] %vm158, %v154
  %v163 = vld [vmem:[%s4] sm:$0xff]
  %v164 = vld [vmem:[%s4 + $0x8] sm:$0x1]
  %v165 = vld [vmem:[%s5] sm:$0xff]
  %v166 = vld [vmem:[%s5 + $0x8] sm:$0x1]
  %v168 = vsel %vm155, %v152, 0
  %v171 = vsel %vm155, %v153, 0
  %v174 = vsel %vm155, %v154, 0
  %vm176 = vcmask 1040384
  %v178 = vsel %vm176, %v166, 0
  %180 = vmatprep.subr.mxu0 0.0
  %181 = vmatpush1.msra.mxu0 %v165
  %182 = vmatprep.subr.mxu0 0.0
  %183 = vmatpush1.msra.mxu0 %v178
  %184 = vmatprep.subr.mxu0 0.0
  %185 = vmatpush1.msra.mxu0 0.0
  %186 = vmatprep.subr.mxu0 0.0
  %187 = vmatpush1.msra.mxu0 0.0
  %188 = vmatprep.subr.mxu0 0.0
  %189 = vmatpush1.msra.mxu0 0.0
  %190 = vmatprep.subr.mxu0 0.0
  %191 = vmatpush1.msra.mxu0 0.0
  %192 = vmatprep.subr.mxu0 0.0
  %193 = vmatpush1.msra.mxu0 0.0
  %194 = vmatprep.subr.mxu0 0.0
  %195 = vmatpush1.msra.mxu0 0.0
  %196 = vmatprep.subr.mxu0 0.0
  %197 = vmatpush1.msra.mxu0 0.0
  %198 = vmatprep.subr.mxu0 0.0
  %199 = vmatpush1.msra.mxu0 0.0
  %200 = vmatprep.subr.mxu0 0.0
  %201 = vmatpush1.msra.mxu0 0.0
  %202 = vmatprep.subr.mxu0 0.0
  %203 = vmatpush1.msra.mxu0 0.0
  %204 = vmatprep.subr.mxu0 0.0
  %205 = vmatpush1.msra.mxu0 0.0
  %206 = vmatprep.subr.mxu0 0.0
  %207 = vmatpush1.msra.mxu0 0.0
  %208 = vmatprep.subr.mxu0 0.0
  %209 = vmatpush1.msra.mxu0 0.0
  %210 = vmatprep.subr.mxu0 0.0
  %211 = vmatpush1.msra.mxu0 0.0
  %212 = vmatprep.subr.mxu0 0.0
  %213 = vmatpush1.msra.mxu0 0.0
  %214 = vmatprep.subr.mxu0 0.0
  %215 = vmatpush1.msra.mxu0 0.0
  %216 = vmatprep.subr.mxu0 0.0
  %217 = vmatpush1.msra.mxu0 0.0
  %218 = vmatprep.subr.mxu0 0.0
  %219 = vmatpush1.msra.mxu0 0.0
  %220 = vmatprep.subr.mxu0 0.0
  %221 = vmatpush1.msra.mxu0 0.0
  %222 = vmatprep.subr.mxu0 0.0
  %223 = vmatpush1.msra.mxu0 0.0
  %224 = vmatprep.subr.mxu0 0.0
  %225 = vmatpush1.msra.mxu0 0.0
  %226 = vmatprep.subr.mxu0 0.0
  %227 = vmatpush1.msra.mxu0 0.0
  %228 = vmatprep.subr.mxu0 0.0
  %229 = vmatpush1.msra.mxu0 0.0
  %230 = vmatprep.subr.mxu0 0.0
  %231 = vmatpush1.msra.mxu0 0.0
  %232 = vmatprep.subr.mxu0 0.0
  %233 = vmatpush1.msra.mxu0 0.0
  %234 = vmatprep.subr.mxu0 0.0
  %235 = vmatpush1.msra.mxu0 0.0
  %236 = vmatprep.subr.mxu0 0.0
  %237 = vmatpush1.msra.mxu0 0.0
  %238 = vmatprep.subr.mxu0 0.0
  %239 = vmatpush1.msra.mxu0 0.0
  %240 = vmatprep.subr.mxu0 0.0
  %241 = vmatpush1.msra.mxu0 0.0
  %242 = vmatprep.subr.mxu0 0.0
  %243 = vmatpush1.msra.mxu0 0.0
  %244 = vmatprep.mubr.f32.mxu0 0.0
  %245 = vmatmul.mubr.f32.gmra.mrb[0].mxu0 %v168
  %v246 = vpop.f32.mrb[0].mxu0
  %v247 = vadd.f32 0.0, %v246
  %v248 = vpop.f32.mrb[0].mxu0
  %249 = vmatprep.mubr.f32.mxu0 0.0
  %250 = vmatmul.mubr.f32.gmra.mrb[0].mxu0 %v171
  %v251 = vpop.f32.mrb[0].mxu0
  %v252 = vadd.f32 0.0, %v251
  %v253 = vpop.f32.mrb[0].mxu0
  %254 = vmatprep.mubr.f32.mxu0 0.0
  %255 = vmatmul.mubr.f32.gmra.mrb[0].mxu0 %v174
  %v256 = vpop.f32.mrb[0].mxu0
  %v257 = vadd.f32 0.0, %v256
  %v258 = vpop.f32.mrb[0].mxu0
  %259 = vdwg.mxu0
  %v261 = vsel %vm155, %v140, 0
  %v264 = vsel %vm155, %v141, 0
  %v267 = vsel %vm155, %v142, 0
  %v270 = vsel %vm176, %v164, 0
  %272 = vmatprep.subr.mxu0 0.0
  %273 = vmatpush1.msra.mxu0 %v163
  %274 = vmatprep.subr.mxu0 0.0
  %275 = vmatpush1.msra.mxu0 %v270
  %276 = vmatprep.subr.mxu0 0.0
  %277 = vmatpush1.msra.mxu0 0.0
  %278 = vmatprep.subr.mxu0 0.0
  %279 = vmatpush1.msra.mxu0 0.0
  %280 = vmatprep.subr.mxu0 0.0
  %281 = vmatpush1.msra.mxu0 0.0
  %282 = vmatprep.subr.mxu0 0.0
  %283 = vmatpush1.msra.mxu0 0.0
  %284 = vmatprep.subr.mxu0 0.0
  %285 = vmatpush1.msra.mxu0 0.0
  %286 = vmatprep.subr.mxu0 0.0
  %287 = vmatpush1.msra.mxu0 0.0
  %288 = vmatprep.subr.mxu0 0.0
  %289 = vmatpush1.msra.mxu0 0.0
  %290 = vmatprep.subr.mxu0 0.0
  %291 = vmatpush1.msra.mxu0 0.0
  %292 = vmatprep.subr.mxu0 0.0
  %293 = vmatpush1.msra.mxu0 0.0
  %294 = vmatprep.subr.mxu0 0.0
  %295 = vmatpush1.msra.mxu0 0.0
  %296 = vmatprep.subr.mxu0 0.0
  %297 = vmatpush1.msra.mxu0 0.0
  %298 = vmatprep.subr.mxu0 0.0
  %299 = vmatpush1.msra.mxu0 0.0
  %300 = vmatprep.subr.mxu0 0.0
  %301 = vmatpush1.msra.mxu0 0.0
  %302 = vmatprep.subr.mxu0 0.0
  %303 = vmatpush1.msra.mxu0 0.0
  %304 = vmatprep.subr.mxu0 0.0
  %305 = vmatpush1.msra.mxu0 0.0
  %306 = vmatprep.subr.mxu0 0.0
  %307 = vmatpush1.msra.mxu0 0.0
  %308 = vmatprep.subr.mxu0 0.0
  %309 = vmatpush1.msra.mxu0 0.0
  %310 = vmatprep.subr.mxu0 0.0
  %311 = vmatpush1.msra.mxu0 0.0
  %312 = vmatprep.subr.mxu0 0.0
  %313 = vmatpush1.msra.mxu0 0.0
  %314 = vmatprep.subr.mxu0 0.0
  %315 = vmatpush1.msra.mxu0 0.0
  %316 = vmatprep.subr.mxu0 0.0
  %317 = vmatpush1.msra.mxu0 0.0
  %318 = vmatprep.subr.mxu0 0.0
  %319 = vmatpush1.msra.mxu0 0.0
  %320 = vmatprep.subr.mxu0 0.0
  %321 = vmatpush1.msra.mxu0 0.0
  %322 = vmatprep.subr.mxu0 0.0
  %323 = vmatpush1.msra.mxu0 0.0
  %324 = vmatprep.subr.mxu0 0.0
  %325 = vmatpush1.msra.mxu0 0.0
  %326 = vmatprep.subr.mxu0 0.0
  %327 = vmatpush1.msra.mxu0 0.0
  %328 = vmatprep.subr.mxu0 0.0
  %329 = vmatpush1.msra.mxu0 0.0
  %330 = vmatprep.subr.mxu0 0.0
  %331 = vmatpush1.msra.mxu0 0.0
  %332 = vmatprep.subr.mxu0 0.0
  %333 = vmatpush1.msra.mxu0 0.0
  %334 = vmatprep.subr.mxu0 0.0
  %335 = vmatpush1.msra.mxu0 0.0
  %336 = vmatprep.mubr.f32.mxu0 0.0
  %337 = vmatmul.mubr.f32.gmra.mrb[0].mxu0 %v261
  %v338 = vpop.f32.mrb[0].mxu0
  %v339 = vadd.f32 %v247, %v338
  %v340 = vpop.f32.mrb[0].mxu0
  %341 = vmatprep.mubr.f32.mxu0 0.0
  %342 = vmatmul.mubr.f32.gmra.mrb[0].mxu0 %v264
  %v343 = vpop.f32.mrb[0].mxu0
  %v344 = vadd.f32 %v252, %v343
  %v345 = vpop.f32.mrb[0].mxu0
  %346 = vmatprep.mubr.f32.mxu0 0.0
  %347 = vmatmul.mubr.f32.gmra.mrb[0].mxu0 %v267
  %v348 = vpop.f32.mrb[0].mxu0
  %v349 = vadd.f32 %v257, %v348
  %v350 = vpop.f32.mrb[0].mxu0
  %351 = vdwg.mxu0
  %352 = vst [vmem:[%s8] sm:$0xff] %v339
  %353 = vst [vmem:[%s8 + $0x8] sm:$0xff] %v344
  %354 = vst [vmem:[%s8 + $0x10] sm:$0x3] %v349
  // Predicated region
  $region26: #{dccrn_forward.25} parent=0 // pred_check
    _
  $region27: #{dccrn_forward.25} parent=0 // pred_check_branch
    %356 = sbr.rel (0) target = $region29
  $region28: #{dccrn_forward.25} parent=0 // pred_region
    _
  $region29: #{dccrn_forward.25} parent=0 // pred_fallthru
    _
  // Predicated region
  $region30: #{dccrn_forward.25} parent=0 // pred_check
    _
  $region31: #{dccrn_forward.25} parent=0 // pred_check_branch
    %358 = sbr.rel (0) target = $region33
  $region32: #{dccrn_forward.25} parent=0 // pred_region
    _
  $region33: #{dccrn_forward.25} parent=0 // pred_fallthru
    _
  // Predicated region
  $region34: #{dccrn_forward.25} parent=0 // pred_check
    _
  $region35: #{dccrn_forward.25} parent=0 // pred_check_branch
    %360 = sbr.rel (0) target = $region37
  $region36: #{dccrn_forward.25} parent=0 // pred_region
    _
  $region37: #{dccrn_forward.25} parent=0 // pred_fallthru
    _
  // Predicated region
  $region38: #{dccrn_forward.25} parent=0 // pred_check
    _
  $region39: #{dccrn_forward.25} parent=0 // pred_check_branch
    %362 = sbr.rel (0) target = $region41
  $region40: #{dccrn_forward.25} parent=0 // pred_region
    _
  $region41: #{dccrn_forward.25} parent=0 // pred_fallthru
    _
  // Predicated region
  $region42: #{dccrn_forward.25} parent=0 // pred_check
    _
  $region43: #{dccrn_forward.25} parent=0 // pred_check_branch
    %364 = sbr.rel (0) target = $region45
  $region44: #{dccrn_forward.25} parent=0 // pred_region
    _
  $region45: #{dccrn_forward.25} parent=0 // pred_fallthru
    _
  // Predicated region
  $region46: #{dccrn_forward.25} parent=0 // pred_check
    _
  $region47: #{dccrn_forward.25} parent=0 // pred_check_branch
    %366 = sbr.rel (0) target = $region49
  $region48: #{dccrn_forward.25} parent=0 // pred_region
    _
  $region49: #{dccrn_forward.25} parent=0 // pred_fallthru
    _

// kernel: split.8
$region0: #{split.8}
  #allocation0 [shape = 'u32[2048]{0}', space=vmem, size = 0x2000, scoped, tag = 'scoped memory for split.8']
  #allocation1 [shape = 'u32[2048]{0}', space=vmem, size = 0x2000, scoped, tag = 'scoped memory for split.8']
  #allocation2 [shape = 'u32[2048]{0}', space=vmem, size = 0x2000, scoped, tag = 'scoped memory for split.8']
  #allocation3 [shape = 'u32[2048]{0}', space=vmem, size = 0x2000, scoped, tag = 'scoped memory for split.8']
  #allocation4 [shape = 'u32[2048]{0}', space=vmem, size = 0x2000, scoped, tag = 'scoped memory for split.8']
  #allocation5 [shape = 's32[1]{0}', space=sflag, size = 0x4, scoped, tag = 'scoped memory for split.8']
  %s0 = inlined_call_operand.vmem [shape: f32[8,18,9], index: 0, kind: input, shape index: {}]
  %s1 = inlined_call_operand.vmem [shape: f32[2,18,9], index: 1, kind: output, shape index: {}]
  %v2 = vld [vmem:[%s0] sm:$0xff]
  %vm3 = vcmask 1043456
  %v4 = vsel %vm3, 0, %v2
  %v5 = vrot.slane %v4, 4
  %6 = vst [vmem:[%s1] sm:$0x3] %v5
  %s7 = scalar_lea.vmem %s0, 8
  %v8 = vld [vmem:[%s7] sm:$0xff]
  %vm9 = vcmask 1043456
  %v10 = vsel %vm9, 0, %v8
  %v11 = vrot.slane %v10, 4
  %s12 = scalar_lea.vmem %s1, 2
  %13 = vst [vmem:[%s12] sm:$0x3] %v11
  %s14 = scalar_lea.vmem %s0, 16
  %v15 = vld [vmem:[%s14] sm:$0xff]
  %vm16 = vcmask 1043456
  %v17 = vsel %vm16, 0, %v15
  %v18 = vrot.slane %v17, 4
  %s19 = scalar_lea.vmem %s1, 4
  %20 = vst [vmem:[%s19] sm:$0x3] %v18
  %s21 = scalar_lea.vmem %s0, 24
  %v22 = vld [vmem:[%s21] sm:$0xff]
  %vm23 = vcmask 1043456
  %v24 = vsel %vm23, 0, %v22
  %v25 = vrot.slane %v24, 4
  %s26 = scalar_lea.vmem %s1, 6
  %27 = vst [vmem:[%s26] sm:$0x3] %v25
  %s28 = scalar_lea.vmem %s0, 32
  %v29 = vld [vmem:[%s28] sm:$0xff]
  %vm30 = vcmask 1043456
  %v31 = vsel %vm30, 0, %v29
  %v32 = vrot.slane %v31, 4
  %s33 = scalar_lea.vmem %s1, 8
  %34 = vst [vmem:[%s33] sm:$0x3] %v32
  %s35 = scalar_lea.vmem %s0, 40
  %v36 = vld [vmem:[%s35] sm:$0xff]
  %vm37 = vcmask 1043456
  %v38 = vsel %vm37, 0, %v36
  %v39 = vrot.slane %v38, 4
  %s40 = scalar_lea.vmem %s1, 10
  %41 = vst [vmem:[%s40] sm:$0x3] %v39
  %s42 = scalar_lea.vmem %s0, 48
  %v43 = vld [vmem:[%s42] sm:$0xff]
  %vm44 = vcmask 1043456
  %v45 = vsel %vm44, 0, %v43
  %v46 = vrot.slane %v45, 4
  %s47 = scalar_lea.vmem %s1, 12
  %48 = vst [vmem:[%s47] sm:$0x3] %v46
  %s49 = scalar_lea.vmem %s0, 56
  %v50 = vld [vmem:[%s49] sm:$0xff]
  %vm51 = vcmask 1043456
  %v52 = vsel %vm51, 0, %v50
  %v53 = vrot.slane %v52, 4
  %s54 = scalar_lea.vmem %s1, 14
  %55 = vst [vmem:[%s54] sm:$0x3] %v53
  %s56 = scalar_lea.vmem %s0, 64
  %v57 = vld [vmem:[%s56] sm:$0xff]
  %vm58 = vcmask 1043456
  %v59 = vsel %vm58, 0, %v57
  %v60 = vrot.slane %v59, 4
  %s61 = scalar_lea.vmem %s1, 16
  %62 = vst [vmem:[%s61] sm:$0x3] %v60
  %s63 = scalar_lea.vmem %s0, 72
  %v64 = vld [vmem:[%s63] sm:$0xff]
  %vm65 = vcmask 1043456
  %v66 = vsel %vm65, 0, %v64
  %v67 = vrot.slane %v66, 4
  %s68 = scalar_lea.vmem %s1, 18
  %69 = vst [vmem:[%s68] sm:$0x3] %v67
  %s70 = scalar_lea.vmem %s0, 80
  %v71 = vld [vmem:[%s70] sm:$0xff]
  %vm72 = vcmask 1043456
  %v73 = vsel %vm72, 0, %v71
  %v74 = vrot.slane %v73, 4
  %s75 = scalar_lea.vmem %s1, 20
  %76 = vst [vmem:[%s75] sm:$0x3] %v74
  %s77 = scalar_lea.vmem %s0, 88
  %v78 = vld [vmem:[%s77] sm:$0xff]
  %vm79 = vcmask 1043456
  %v80 = vsel %vm79, 0, %v78
  %v81 = vrot.slane %v80, 4
  %s82 = scalar_lea.vmem %s1, 22
  %83 = vst [vmem:[%s82] sm:$0x3] %v81
  %s84 = scalar_lea.vmem %s0, 96
  %v85 = vld [vmem:[%s84] sm:$0xff]
  %vm86 = vcmask 1043456
  %v87 = vsel %vm86, 0, %v85
  %v88 = vrot.slane %v87, 4
  %s89 = scalar_lea.vmem %s1, 24
  %90 = vst [vmem:[%s89] sm:$0x3] %v88
  %s91 = scalar_lea.vmem %s0, 104
  %v92 = vld [vmem:[%s91] sm:$0xff]
  %vm93 = vcmask 1043456
  %v94 = vsel %vm93, 0, %v92
  %v95 = vrot.slane %v94, 4
  %s96 = scalar_lea.vmem %s1, 26
  %97 = vst [vmem:[%s96] sm:$0x3] %v95
  %s98 = scalar_lea.vmem %s0, 112
  %v99 = vld [vmem:[%s98] sm:$0xff]
  %vm100 = vcmask 1043456
  %v101 = vsel %vm100, 0, %v99
  %v102 = vrot.slane %v101, 4
  %s103 = scalar_lea.vmem %s1, 28
  %104 = vst [vmem:[%s103] sm:$0x3] %v102
  %s105 = scalar_lea.vmem %s0, 120
  %v106 = vld [vmem:[%s105] sm:$0xff]
  %vm107 = vcmask 1043456
  %v108 = vsel %vm107, 0, %v106
  %v109 = vrot.slane %v108, 4
  %s110 = scalar_lea.vmem %s1, 30
  %111 = vst [vmem:[%s110] sm:$0x3] %v109
  %s112 = scalar_lea.vmem %s0, 128
  %v113 = vld [vmem:[%s112] sm:$0xff]
  %vm114 = vcmask 1043456
  %v115 = vsel %vm114, 0, %v113
  %v116 = vrot.slane %v115, 4
  %s117 = scalar_lea.vmem %s1, 32
  %118 = vst [vmem:[%s117] sm:$0x3] %v116
  %s119 = scalar_lea.vmem %s0, 136
  %v120 = vld [vmem:[%s119] sm:$0xff]
  %vm121 = vcmask 1043456
  %v122 = vsel %vm121, 0, %v120
  %v123 = vrot.slane %v122, 4
  %s124 = scalar_lea.vmem %s1, 34
  %125 = vst [vmem:[%s124] sm:$0x3] %v123

</llo_original>
